<compile_context>
chip_gen: v7x
topology: tpu7x:2x2x1
jax: 0.10.0
libtpu: 0.0.40
codegen_flags: <defaults>
</compile_context>

<pallas_src>
import functools
import math

import jax
import jax.numpy as jnp
from jax.experimental import pallas as pl
from jax.experimental.pallas import tpu as pltpu

_MASK_VALUE = -1e30              # stand-in for -inf in masked attention logits
_MXU_DTYPE = jnp.bfloat16        # MXU operand dtype (accumulation stays f32)
_NORM_FUSE_MAX_N = 2048          # fuse residual+RMSNorm only if N fits one lane tile


def _vmem_limit_bytes():
    """Scoped-VMEM request derived from the actual chip (64 MiB v7x, 128 MiB
    v5e/v6e), leaving headroom for double buffering."""
    cap = 64 * 1024 * 1024
    try:
        cap = int(pltpu.get_tpu_info().vmem_capacity_bytes)
    except Exception:
        pass
    return int(min((cap * 3) // 4, 96 * 1024 * 1024))


_VMEM_LIMIT = _vmem_limit_bytes()


# ----------------------------------------------------------------------------
# small helpers
# ----------------------------------------------------------------------------
def _round_up(x, m):
    return (x + m - 1) // m * m


def _pick_block_rows(rows, dim, dtype, n_tiled):
    """Largest sublane-aligned row tile that keeps n_tiled double-buffered
    (rows, dim) tiles comfortably under the VMEM budget; prefers >=2 grid
    steps so both v7x TensorCores get work."""
    itemsize = jnp.dtype(dtype).itemsize
    sublane = max(8, 32 // itemsize)
    budget = max(_VMEM_LIMIT // 4, 2 * 1024 * 1024) // max(n_tiled, 1)
    br = budget // max(dim * itemsize, 1)
    rows_a = _round_up(rows, sublane)
    br = min(br, rows_a)
    if br >= rows_a and rows_a >= 2 * sublane:
        br = _round_up((rows_a + 1) // 2, sublane)   # split -> >=2 parallel steps
    br = max(sublane, (br // sublane) * sublane)
    return int(br)


def _run_rowwise(kernel_fn, tiled, bcast, out_dtype):
    """Run a row-tiled kernel. `tiled`: list of (rows, dim) arrays tiled over
    rows; `bcast`: list of (1, d) arrays resident across the grid."""
    rows, dim = tiled[0].shape
    block_rows = _pick_block_rows(rows, dim, tiled[0].dtype, len(tiled) + 1)
    rows_p = _round_up(rows, block_rows)
    if rows_p != rows:
        tiled = [jnp.pad(a, ((0, rows_p - rows), (0, 0))) for a in tiled]

    in_specs = ([pl.BlockSpec((block_rows, dim), lambda i: (i, 0)) for _ in tiled]
                + [pl.BlockSpec((1, a.shape[1]), lambda i: (0, 0)) for a in bcast])

    out = pl.pallas_call(
        kernel_fn,
        out_shape=jax.ShapeDtypeStruct((rows_p, dim), out_dtype),
        grid_spec=pltpu.PrefetchScalarGridSpec(
            num_scalar_prefetch=0,
            grid=(rows_p // block_rows,),
            in_specs=in_specs,
            out_specs=pl.BlockSpec((block_rows, dim), lambda i: (i, 0)),
        ),
        compiler_params=pltpu.CompilerParams(
            dimension_semantics=("parallel",),
            vmem_limit_bytes=_VMEM_LIMIT),
    )(*tiled, *bcast)
    return out[:rows]


def _pick_head_group(head_num, dim_head):
    """Number of heads per attention block so the lane dim is 128 (or full)."""
    g = max(1, min(head_num, 128 // max(dim_head, 1)))
    while g > 1 and (head_num % g != 0 or (g * dim_head) % 128 != 0):
        g -= 1
    if (g * dim_head) % 128 != 0:
        g = head_num            # fall back: one group covering the full feature dim
    return g


# ----------------------------------------------------------------------------
# kernels
# ----------------------------------------------------------------------------
def _matmul_bias_kernel(x_ref, w_ref, b_ref, o_ref, acc_ref, *, mxu_dtype):
    @pl.when(pl.program_id(2) == 0)
    def _():
        acc_ref[...] = jnp.zeros_like(acc_ref)

    acc_ref[...] += jnp.dot(x_ref[...].astype(mxu_dtype),
                            w_ref[...].astype(mxu_dtype),
                            preferred_element_type=jnp.float32)

    @pl.when(pl.program_id(2) == pl.num_programs(2) - 1)
    def _():
        o_ref[...] = (acc_ref[...] + b_ref[...].astype(jnp.float32)).astype(o_ref.dtype)


def _swiglu_matmul_kernel(x_ref, w1_ref, w3_ref, o_ref, acc1_ref, acc3_ref, *, mxu_dtype):
    @pl.when(pl.program_id(2) == 0)
    def _():
        acc1_ref[...] = jnp.zeros_like(acc1_ref)
        acc3_ref[...] = jnp.zeros_like(acc3_ref)

    xm = x_ref[...].astype(mxu_dtype)
    acc1_ref[...] += jnp.dot(xm, w1_ref[...].astype(mxu_dtype),
                             preferred_element_type=jnp.float32)
    acc3_ref[...] += jnp.dot(xm, w3_ref[...].astype(mxu_dtype),
                             preferred_element_type=jnp.float32)

    @pl.when(pl.program_id(2) == pl.num_programs(2) - 1)
    def _():
        a = acc1_ref[...]
        b = acc3_ref[...]
        silu = a * pl.reciprocal(1.0 + jnp.exp(-a), approx=True)
        o_ref[...] = (silu * b).astype(o_ref.dtype)


def _matmul_res_rmsnorm_kernel(x_ref, w_ref, b_ref, res_ref, g_ref, o_ref, acc_ref,
                               *, eps, inv_n, mxu_dtype):
    @pl.when(pl.program_id(1) == 0)
    def _():
        acc_ref[...] = jnp.zeros_like(acc_ref)

    acc_ref[...] += jnp.dot(x_ref[...].astype(mxu_dtype),
                            w_ref[...].astype(mxu_dtype),
                            preferred_element_type=jnp.float32)

    @pl.when(pl.program_id(1) == pl.num_programs(1) - 1)
    def _():
        s = (acc_ref[...] + b_ref[...].astype(jnp.float32)
             + res_ref[...].astype(jnp.float32))
        ms = jnp.sum(s * s, axis=-1, keepdims=True) * inv_n
        inv = jax.lax.rsqrt(ms + eps)
        o_ref[...] = (s * inv * g_ref[...].astype(jnp.float32)).astype(o_ref.dtype)


def _add_rmsnorm_kernel(x_ref, d_ref, w_ref, o_ref, *, eps):
    # fallback (only used when dim_emb is too large to fuse into the matmul)
    s = x_ref[...].astype(jnp.float32) + d_ref[...].astype(jnp.float32)
    ms = jnp.mean(s * s, axis=-1, keepdims=True)
    o_ref[...] = (s * jax.lax.rsqrt(ms + eps)
                  * w_ref[...].astype(jnp.float32)).astype(o_ref.dtype)


def _softmax_kernel(x_ref, o_ref):
    x = x_ref[...].astype(jnp.float32)
    m = jnp.max(x, axis=-1, keepdims=True)
    e = jnp.exp(x - m)
    inv = pl.reciprocal(jnp.sum(e, axis=-1, keepdims=True), approx=True)
    o_ref[...] = (e * inv).astype(o_ref.dtype)


def _attention_kernel(q_ref, k_ref, v_ref, o_ref, m_sc, l_sc, acc_sc, *,
                      dim_head, heads, causal, q_blk, kv_blk, kv_len, kv_padded,
                      mxu_dtype):
    ki = pl.program_id(3)

    @pl.when(ki == 0)
    def _():
        m_sc[...] = jnp.full_like(m_sc, -jnp.inf)
        l_sc[...] = jnp.zeros_like(l_sc)
        acc_sc[...] = jnp.zeros_like(acc_sc)

    q = q_ref[0]          # (q_blk, heads*dim_head)
    k = k_ref[0]          # (kv_blk, heads*dim_head)
    v = v_ref[0]

    need_mask = causal or (kv_padded != kv_len)
    if need_mask:
        row = (pl.program_id(2) * q_blk
               + jax.lax.broadcasted_iota(jnp.int32, (q_blk, kv_blk), 0))
        col = ki * kv_blk + jax.lax.broadcasted_iota(jnp.int32, (q_blk, kv_blk), 1)
        masked = None
        if causal:
            masked = col > row
        if kv_padded != kv_len:
            kvm = col >= kv_len
            masked = kvm if masked is None else (masked | kvm)
        bias = jnp.where(masked, _MASK_VALUE, 0.0).astype(jnp.float32)

    for h in range(heads):                      # static unrolled head loop
        sl = slice(h * dim_head, (h + 1) * dim_head)
        q_h = q[:, sl].astype(mxu_dtype)
        k_h = k[:, sl].astype(mxu_dtype)
        v_h = v[:, sl].astype(mxu_dtype)
        s = jax.lax.dot_general(q_h, k_h, (((1,), (1,)), ((), ())),
                                preferred_element_type=jnp.float32)
        if need_mask:
            s = s + bias
        m_prev = m_sc[h]
        l_prev = l_sc[h]
        m_cur = jnp.max(s, axis=-1, keepdims=True)
        m_new = jnp.maximum(m_prev, m_cur)
        alpha = jnp.exp(m_prev - m_new)
        p = jnp.exp(s - m_new)
        l_sc[h] = alpha * l_prev + jnp.sum(p, axis=-1, keepdims=True)
        acc_sc[h] = alpha * acc_sc[h] + jnp.dot(p.astype(mxu_dtype), v_h,
                                                preferred_element_type=jnp.float32)
        m_sc[h] = m_new

    @pl.when(ki == pl.num_programs(3) - 1)
    def _():
        outs = [acc_sc[h] * pl.reciprocal(l_sc[h], approx=True)
                for h in range(heads)]
        o_ref[0] = jnp.concatenate(outs, axis=-1).astype(o_ref.dtype)


# ----------------------------------------------------------------------------
# kernel wrappers
# ----------------------------------------------------------------------------
def linear(x, w, b):
    """x @ w + b. w stored as (in, out); equivalent to nn.Linear(in, out)."""
    orig = x.shape
    K = orig[-1]
    N = w.shape[1]
    M = math.prod(orig[:-1])
    x2 = x.reshape(M, K)

    tm = min(256, _round_up(M, 8))
    tn = min(512, _round_up(N, 128))
    tk = min(512, _round_up(K, 128))
    Mp, Np, Kp = _round_up(M, tm), _round_up(N, tn), _round_up(K, tk)

    xp = jnp.pad(x2, ((0, Mp - M), (0, Kp - K))) if (Mp != M or Kp != K) else x2
    wp = jnp.pad(w, ((0, Kp - K), (0, Np - N))) if (Kp != K or Np != N) else w
    bp = (jnp.pad(b, (0, Np - N)) if Np != N else b).reshape(1, Np)

    out = pl.pallas_call(
        functools.partial(_matmul_bias_kernel, mxu_dtype=_MXU_DTYPE),
        out_shape=jax.ShapeDtypeStruct((Mp, Np), x.dtype),
        grid_spec=pltpu.PrefetchScalarGridSpec(
            num_scalar_prefetch=0,
            grid=(Mp // tm, Np // tn, Kp // tk),
            in_specs=[pl.BlockSpec((tm, tk), lambda i, j, k: (i, k)),
                      pl.BlockSpec((tk, tn), lambda i, j, k: (k, j)),
                      pl.BlockSpec((1, tn), lambda i, j, k: (0, j))],
            out_specs=pl.BlockSpec((tm, tn), lambda i, j, k: (i, j)),
            scratch_shapes=[pltpu.VMEM((tm, tn), jnp.float32)]),
        compiler_params=pltpu.CompilerParams(
            dimension_semantics=("parallel", "parallel", "arbitrary"),
            vmem_limit_bytes=_VMEM_LIMIT),
    )(xp, wp, bp)
    return out[:M, :N].reshape(orig[:-1] + (N,))


def swiglu_matmul(x, w1, w3):
    """silu(x @ w1) * (x @ w3) with the gate fused into the matmul epilogue."""
    orig = x.shape
    K = orig[-1]
    H = w1.shape[1]
    M = math.prod(orig[:-1])
    x2 = x.reshape(M, K)

    tm = min(256, _round_up(M, 8))
    tn = min(512, _round_up(H, 128))
    tk = min(512, _round_up(K, 128))
    Mp, Hp, Kp = _round_up(M, tm), _round_up(H, tn), _round_up(K, tk)

    xp = jnp.pad(x2, ((0, Mp - M), (0, Kp - K))) if (Mp != M or Kp != K) else x2
    w1p = jnp.pad(w1, ((0, Kp - K), (0, Hp - H))) if (Kp != K or Hp != H) else w1
    w3p = jnp.pad(w3, ((0, Kp - K), (0, Hp - H))) if (Kp != K or Hp != H) else w3

    out = pl.pallas_call(
        functools.partial(_swiglu_matmul_kernel, mxu_dtype=_MXU_DTYPE),
        out_shape=jax.ShapeDtypeStruct((Mp, Hp), x.dtype),
        grid_spec=pltpu.PrefetchScalarGridSpec(
            num_scalar_prefetch=0,
            grid=(Mp // tm, Hp // tn, Kp // tk),
            in_specs=[pl.BlockSpec((tm, tk), lambda i, j, k: (i, k)),
                      pl.BlockSpec((tk, tn), lambda i, j, k: (k, j)),
                      pl.BlockSpec((tk, tn), lambda i, j, k: (k, j))],
            out_specs=pl.BlockSpec((tm, tn), lambda i, j, k: (i, j)),
            scratch_shapes=[pltpu.VMEM((tm, tn), jnp.float32),
                            pltpu.VMEM((tm, tn), jnp.float32)]),
        compiler_params=pltpu.CompilerParams(
            dimension_semantics=("parallel", "parallel", "arbitrary"),
            vmem_limit_bytes=_VMEM_LIMIT),
    )(xp, w1p, w3p)
    return out[:M, :H].reshape(orig[:-1] + (H,))


def add_rmsnorm(x, d, weight, eps=1e-5):
    """weight * rmsnorm(x + d) — fallback path only."""
    orig = x.shape
    dim = orig[-1]
    rows = math.prod(orig[:-1])
    out = _run_rowwise(functools.partial(_add_rmsnorm_kernel, eps=eps),
                       [x.reshape(rows, dim), d.reshape(rows, dim)],
                       [weight.reshape(1, dim)], x.dtype)
    return out.reshape(orig)


def linear_residual_rmsnorm(x, w, b, residual, gamma, eps=1e-5):
    """gamma * rmsnorm(residual + x @ w + b), fused in the matmul epilogue."""
    orig = residual.shape
    K = x.shape[-1]
    N = w.shape[1]
    M = math.prod(orig[:-1])

    if N > _NORM_FUSE_MAX_N:     # row does not fit a single lane tile: unfused path
        y = linear(x, w, b if b is not None else jnp.zeros((N,), x.dtype))
        return add_rmsnorm(residual, y, gamma, eps)

    x2 = x.reshape(M, K)
    r2 = residual.reshape(M, N)
    tm = min(256, _round_up(M, 8))
    tk = min(512, _round_up(K, 128))
    Np = _round_up(N, 128)
    Mp, Kp = _round_up(M, tm), _round_up(K, tk)

    xp = jnp.pad(x2, ((0, Mp - M), (0, Kp - K))) if (Mp != M or Kp != K) else x2
    wp = jnp.pad(w, ((0, Kp - K), (0, Np - N))) if (Kp != K or Np != N) else w
    rp = jnp.pad(r2, ((0, Mp - M), (0, Np - N))) if (Mp != M or Np != N) else r2
    bvec = b if b is not None else jnp.zeros((N,), jnp.float32)
    bp = (jnp.pad(bvec, (0, Np - N)) if Np != N else bvec).reshape(1, Np)
    gp = (jnp.pad(gamma, (0, Np - N)) if Np != N else gamma).reshape(1, Np)

    out = pl.pallas_call(
        functools.partial(_matmul_res_rmsnorm_kernel, eps=eps,
                          inv_n=1.0 / float(N), mxu_dtype=_MXU_DTYPE),
        out_shape=jax.ShapeDtypeStruct((Mp, Np), residual.dtype),
        grid_spec=pltpu.PrefetchScalarGridSpec(
            num_scalar_prefetch=0,
            grid=(Mp // tm, Kp // tk),
            in_specs=[pl.BlockSpec((tm, tk), lambda i, k: (i, k)),
                      pl.BlockSpec((tk, Np), lambda i, k: (k, 0)),
                      pl.BlockSpec((1, Np), lambda i, k: (0, 0)),
                      pl.BlockSpec((tm, Np), lambda i, k: (i, 0)),
                      pl.BlockSpec((1, Np), lambda i, k: (0, 0))],
            out_specs=pl.BlockSpec((tm, Np), lambda i, k: (i, 0)),
            scratch_shapes=[pltpu.VMEM((tm, Np), jnp.float32)]),
        compiler_params=pltpu.CompilerParams(
            dimension_semantics=("parallel", "arbitrary"),
            vmem_limit_bytes=_VMEM_LIMIT),
    )(xp, wp, bp, rp, gp)
    return out[:M, :N].reshape(orig)


def softmax_lastdim(x):
    orig = x.shape
    dim = orig[-1]
    rows = math.prod(orig[:-1])
    out = _run_rowwise(_softmax_kernel, [x.reshape(rows, dim)], [], x.dtype)
    return out.reshape(orig)


def _attention(q, k, v, *, head_num, dim_head, causal):
    """q,k,v: (B, S, head_num*dim_head) untransposed; flash-style attention
    gridded over (batch, head_group, q_tiles, kv_tiles)."""
    B, Sq, D = q.shape
    Skv = k.shape[1]
    G = _pick_head_group(head_num, dim_head)
    HG = head_num // G
    lane_blk = G * dim_head

    q_blk = min(256, _round_up(Sq, 8))
    kv_blk = min(512, _round_up(Skv, 8))
    Sq_p = _round_up(Sq, q_blk)
    Skv_p = _round_up(Skv, kv_blk)

    qp = jnp.pad(q, ((0, 0), (0, Sq_p - Sq), (0, 0))) if Sq_p != Sq else q
    kp = jnp.pad(k, ((0, 0), (0, Skv_p - Skv), (0, 0))) if Skv_p != Skv else k
    vp = jnp.pad(v, ((0, 0), (0, Skv_p - Skv), (0, 0))) if Skv_p != Skv else v

    kernel = functools.partial(
        _attention_kernel, dim_head=dim_head, heads=G, causal=causal,
        q_blk=q_blk, kv_blk=kv_blk, kv_len=Skv, kv_padded=Skv_p,
        mxu_dtype=_MXU_DTYPE)

    out = pl.pallas_call(
        kernel,
        out_shape=jax.ShapeDtypeStruct((B, Sq_p, D), q.dtype),
        grid_spec=pltpu.PrefetchScalarGridSpec(
            num_scalar_prefetch=0,
            grid=(B, HG, Sq_p // q_blk, Skv_p // kv_blk),
            in_specs=[pl.BlockSpec((1, q_blk, lane_blk), lambda b, g, qi, ki: (b, qi, g)),
                      pl.BlockSpec((1, kv_blk, lane_blk), lambda b, g, qi, ki: (b, ki, g)),
                      pl.BlockSpec((1, kv_blk, lane_blk), lambda b, g, qi, ki: (b, ki, g))],
            out_specs=pl.BlockSpec((1, q_blk, lane_blk), lambda b, g, qi, ki: (b, qi, g)),
            scratch_shapes=[pltpu.VMEM((G, q_blk, 1), jnp.float32),
                            pltpu.VMEM((G, q_blk, 1), jnp.float32),
                            pltpu.VMEM((G, q_blk, dim_head), jnp.float32)]),
        compiler_params=pltpu.CompilerParams(
            dimension_semantics=("parallel", "parallel", "parallel", "arbitrary"),
            vmem_limit_bytes=_VMEM_LIMIT),
    )(qp, kp, vp)
    return out[:, :Sq, :]


# ----------------------------------------------------------------------------
# model blocks (composed from the kernels above)
# ----------------------------------------------------------------------------
def multi_head_attention(p, x_q, x_k, x_v, head_num, dim_head, *,
                         causal, residual, gamma, eps=1e-5):
    """Returns gamma * rmsnorm(residual + W_o(attention(...)) + b_o)."""
    scale = 1.0 / math.sqrt(dim_head)
    # fold the attention scale into the Q projection (tiny parameter-side op)
    q = linear(x_q, p["wq"] * scale, p["bq"] * scale)
    k = linear(x_k, p["wk"], p["bk"])
    v = linear(x_v, p["wv"], p["bv"])
    attn = _attention(q, k, v, head_num=head_num, dim_head=dim_head, causal=causal)
    return linear_residual_rmsnorm(attn, p["wo"], p["bo"], residual, gamma, eps)


def feed_forward_fused(p, x, residual, gamma, eps=1e-5):
    """gamma * rmsnorm(residual + w2(silu(w1 x) * w3 x))."""
    h = swiglu_matmul(x, p["w1"], p["w3"])
    return linear_residual_rmsnorm(h, p["w2"], None, residual, gamma, eps)


def encoder_forward(p, x, head_num, dim_head):
    d1 = multi_head_attention(p["attn"], x, x, x, head_num, dim_head,
                              causal=False, residual=x, gamma=p["norm1"])
    return feed_forward_fused(p["ffn"], d1, d1, p["norm2"])


def decoder_forward(p, x, enc_out, head_num, dim_head, causal):
    d1 = multi_head_attention(p["self_attn"], x, x, x, head_num, dim_head,
                              causal=causal, residual=x, gamma=p["norm1"])
    d3 = multi_head_attention(p["cross_attn"], d1, enc_out, enc_out, head_num,
                              dim_head, causal=False, residual=d1, gamma=p["norm2"])
    return feed_forward_fused(p["ffn"], d3, d3, p["norm3"])


def transformer_forward(params, input_seq, output_seq, *, head_num, dim_head):
    pe = params["pe"]
    # embedding lookup = dynamic gather; done with jnp.take outside the kernels
    x = jnp.take(params["input_embedding"], input_seq, axis=0)
    x = x + pe[: input_seq.shape[1]][None]
    for p in params["encoders"]:
        x = encoder_forward(p, x, head_num, dim_head)
    enc_output = x

    y = jnp.take(params["output_embedding"], output_seq, axis=0)
    y = y + pe[: output_seq.shape[1]][None]

    causal = output_seq.shape[1] > 1
    for p in params["decoders"]:
        y = decoder_forward(p, y, enc_output, head_num, dim_head, causal)

    logits = linear(y, params["out_w"], params["out_b"])
    probs = softmax_lastdim(logits)     # inference path: F.softmax(logits, -1)
    return probs, enc_output


# ----------------------------------------------------------------------------
# parameter construction
# ----------------------------------------------------------------------------
def make_positional_embedding(dim_emb, max_len):
    position = jnp.arange(max_len, dtype=jnp.float32)[:, None]
    div_term = jnp.exp(jnp.arange(0, dim_emb, 2, dtype=jnp.float32)
                       * (-math.log(10000.0) / dim_emb))
    pe = jnp.zeros((max_len, dim_emb), jnp.float32)
    pe = pe.at[:, 0::2].set(jnp.sin(position * div_term))
    pe = pe.at[:, 1::2].set(jnp.cos(position * div_term))
    return pe


def init_params(key, *, vocab_size, dim_emb, dim_head, head_num,
                encoder_num, decoder_num, max_seq_len):
    dim_mid = dim_head * head_num
    dim_hidden = 4 * dim_emb
    keys = iter(jax.random.split(key, 256))

    def nk():
        return next(keys)

    def lin(din, dout, bias=True):
        s = 1.0 / math.sqrt(din)
        w = jax.random.uniform(nk(), (din, dout), jnp.float32, -s, s)
        b = jax.random.uniform(nk(), (dout,), jnp.float32, -s, s) if bias else None
        return w, b

    def mha_params():
        wq, bq = lin(dim_emb, dim_mid)
        wk, bk = lin(dim_emb, dim_mid)
        wv, bv = lin(dim_emb, dim_mid)
        wo, bo = lin(dim_mid, dim_emb)
        return dict(wq=wq, bq=bq, wk=wk, bk=bk, wv=wv, bv=bv, wo=wo, bo=bo)

    def ffn_params():
        w1, _ = lin(dim_emb, dim_hidden, bias=False)
        w2, _ = lin(dim_hidden, dim_emb, bias=False)
        w3, _ = lin(dim_emb, dim_hidden, bias=False)
        return dict(w1=w1, w2=w2, w3=w3)

    encoders = [dict(attn=mha_params(),
                     norm1=jnp.ones((dim_emb,), jnp.float32),
                     ffn=ffn_params(),
                     norm2=jnp.ones((dim_emb,), jnp.float32))
                for _ in range(encoder_num)]
    decoders = [dict(self_attn=mha_params(),
                     norm1=jnp.ones((dim_emb,), jnp.float32),
                     cross_attn=mha_params(),
                     norm2=jnp.ones((dim_emb,), jnp.float32),
                     ffn=ffn_params(),
                     norm3=jnp.ones((dim_emb,), jnp.float32))
                for _ in range(decoder_num)]
    out_w, out_b = lin(dim_emb, vocab_size)

    return dict(
        input_embedding=jax.random.normal(nk(), (vocab_size, dim_emb), jnp.float32),
        output_embedding=jax.random.normal(nk(), (vocab_size, dim_emb), jnp.float32),
        pe=make_positional_embedding(dim_emb, max_seq_len),
        encoders=encoders,
        decoders=decoders,
        out_w=out_w,
        out_b=out_b)


# ----------------------------------------------------------------------------
# pure-JAX reference (for correctness check; full f32, HIGHEST precision)
# ----------------------------------------------------------------------------
_HI = jax.lax.Precision.HIGHEST


def _ref_linear(x, w, b=None):
    y = jnp.dot(x, w, precision=_HI)
    return y + b if b is not None else y


def _ref_rmsnorm(x, w, eps=1e-5):
    xf = x.astype(jnp.float32)
    inv = jax.lax.rsqrt(jnp.mean(xf * xf, axis=-1, keepdims=True) + eps)
    return w * (xf * inv).astype(x.dtype)


def _ref_mha(p, xq, xk, xv, head_num, dim_head, mask_bias=None):
    b, sq, _ = xq.shape
    skv = xk.shape[1]

    def heads(t, s):
        return jnp.transpose(t.reshape(b, s, head_num, dim_head), (0, 2, 1, 3))

    q = heads(_ref_linear(xq, p["wq"], p["bq"]), sq)
    k = heads(_ref_linear(xk, p["wk"], p["bk"]), skv)
    v = heads(_ref_linear(xv, p["wv"], p["bv"]), skv)
    s = jnp.einsum("bhqd,bhkd->bhqk", q, k, precision=_HI) / math.sqrt(dim_head)
    if mask_bias is not None:
        s = s + mask_bias
    attn = jax.nn.softmax(s, axis=-1)
    o = jnp.einsum("bhqk,bhkd->bhqd", attn, v, precision=_HI)
    o = jnp.transpose(o, (0, 2, 1, 3)).reshape(b, sq, head_num * dim_head)
    return _ref_linear(o, p["wo"], p["bo"])


def _ref_ffn(p, x):
    return _ref_linear(jax.nn.silu(_ref_linear(x, p["w1"])) * _ref_linear(x, p["w3"]),
                       p["w2"])


def transformer_forward_ref(params, input_seq, output_seq, *, head_num, dim_head):
    pe = params["pe"]
    x = jnp.take(params["input_embedding"], input_seq, axis=0) + pe[: input_seq.shape[1]][None]
    for p in params["encoders"]:
        d0 = _ref_mha(p["attn"], x, x, x, head_num, dim_head)
        d1 = _ref_rmsnorm(x + d0, p["norm1"])
        d2 = _ref_ffn(p["ffn"], d1)
        x = _ref_rmsnorm(d1 + d2, p["norm2"])
    enc_out = x

    y = jnp.take(params["output_embedding"], output_seq, axis=0) + pe[: output_seq.shape[1]][None]
    sq = output_seq.shape[1]
    bias = None
    if sq > 1:
        causal = jnp.triu(jnp.ones((sq, sq), dtype=bool), k=1)
        bias = jnp.where(causal, _MASK_VALUE, 0.0).astype(jnp.float32)[None]
    for p in params["decoders"]:
        d0 = _ref_mha(p["self_attn"], y, y, y, head_num, dim_head, bias)
        d1 = _ref_rmsnorm(y + d0, p["norm1"])
        d2 = _ref_mha(p["cross_attn"], d1, enc_out, enc_out, head_num, dim_head)
        d3 = _ref_rmsnorm(d1 + d2, p["norm2"])
        d4 = _ref_ffn(p["ffn"], d3)
        y = _ref_rmsnorm(d3 + d4, p["norm3"])
    logits = _ref_linear(y, params["out_w"], params["out_b"])
    return jax.nn.softmax(logits, axis=-1), enc_out


# ----------------------------------------------------------------------------
# demo
# ----------------------------------------------------------------------------
if __name__ == "__main__":
    cfg = dict(vocab_size=256, dim_emb=128, dim_head=32, head_num=4,
               encoder_num=1, decoder_num=1, max_seq_len=64)
    batch, in_len, out_len = 2, 8, 8

    root = jax.random.PRNGKey(0)
    kp, ki, ko = jax.random.split(root, 3)
    params = init_params(kp, **cfg)
    input_seq = jax.random.randint(ki, (batch, in_len), 0, cfg["vocab_size"],
                                   dtype=jnp.int32)
    output_seq = jax.random.randint(ko, (batch, out_len), 0, cfg["vocab_size"],
                                    dtype=jnp.int32)

    fwd = jax.jit(functools.partial(transformer_forward,
                                    head_num=cfg["head_num"],
                                    dim_head=cfg["dim_head"]))
    probs, enc_out = fwd(params, input_seq, output_seq)
    probs = jax.block_until_ready(probs)
    enc_out = jax.block_until_ready(enc_out)

    ref_probs, ref_enc = transformer_forward_ref(params, input_seq, output_seq,
                                                 head_num=cfg["head_num"],
                                                 dim_head=cfg["dim_head"])

    assert probs.shape == (batch, out_len, cfg["vocab_size"])
    assert enc_out.shape == (batch, in_len, cfg["dim_emb"])
    assert bool(jnp.all(jnp.isfinite(probs)))
    # approx-reciprocal softmax + bf16 MXU: slightly looser tolerances than full f32
    assert jnp.allclose(jnp.sum(probs, axis=-1), 1.0, atol=5e-3)
    assert jnp.allclose(enc_out, ref_enc, atol=3e-2, rtol=3e-2), "encoder mismatch"
    assert jnp.allclose(probs, ref_probs, atol=3e-2, rtol=3e-2), "output mismatch"
    print("KERNEL_OK")
</pallas_src>

<mosaic_0001>
module attributes {stable_mosaic.version = 11 : i64} {
  func.func @_attention_kernel(%arg0: i32, %arg1: i32, %arg2: i32, %arg3: i32, %arg4: memref<1x8x128xf32, #tpu.memory_space<vmem>>, %arg5: memref<1x8x128xf32, #tpu.memory_space<vmem>>, %arg6: memref<1x8x128xf32, #tpu.memory_space<vmem>>, %arg7: memref<1x8x128xf32, #tpu.memory_space<vmem>>, %arg8: memref<4x8x1xf32, #tpu.memory_space<vmem>>, %arg9: memref<4x8x1xf32, #tpu.memory_space<vmem>>, %arg10: memref<4x8x32xf32, #tpu.memory_space<vmem>>) attributes {dimension_semantics = [#tpu.dimension_semantics<parallel>, #tpu.dimension_semantics<parallel>, #tpu.dimension_semantics<parallel>, #tpu.dimension_semantics<arbitrary>], iteration_bounds = array<i64: 2, 1, 1, 1>, scalar_prefetch = 0 : i64, scratch_operands = 3 : i64, tpu.core_type = #tpu.core_type<tc>, window_params = [{transform_indices = @transform_0, window_bounds = array<i64: 1, 8, 128>}, {transform_indices = @transform_1, window_bounds = array<i64: 1, 8, 128>}, {transform_indices = @transform_2, window_bounds = array<i64: 1, 8, 128>}, {transform_indices = @transform_3, window_bounds = array<i64: 1, 8, 128>}]} {
    %c0_i32 = arith.constant 0 : i32
    %0 = arith.cmpi eq, %arg3, %c0_i32 : i32
    %1 = arith.extui %0 : i1 to i32
    %c0_i32_0 = arith.constant 0 : i32
    %2 = arith.cmpi ne, %1, %c0_i32_0 : i32
    scf.if %2 {
      %cst_98 = arith.constant 0xFF800000 : f32
      %184 = vector.broadcast %cst_98 : f32 to vector<4x8x1xf32>
      %c0_99 = arith.constant 0 : index
      %c0_100 = arith.constant 0 : index
      %c0_101 = arith.constant 0 : index
      %185 = vector.load %arg8[%c0_99, %c0_100, %c0_101] : memref<4x8x1xf32, #tpu.memory_space<vmem>>, vector<4x8x1xf32>
      tpu.vector_store %arg8[%c0_99, %c0_100, %c0_101], %184 {strides = array<i32>} : memref<4x8x1xf32, #tpu.memory_space<vmem>>, vector<4x8x1xf32>,
      %cst_102 = arith.constant 0.000000e+00 : f32
      %186 = vector.broadcast %cst_102 : f32 to vector<4x8x1xf32>
      %c0_103 = arith.constant 0 : index
      %c0_104 = arith.constant 0 : index
      %c0_105 = arith.constant 0 : index
      %187 = vector.load %arg9[%c0_103, %c0_104, %c0_105] : memref<4x8x1xf32, #tpu.memory_space<vmem>>, vector<4x8x1xf32>
      tpu.vector_store %arg9[%c0_103, %c0_104, %c0_105], %186 {strides = array<i32>} : memref<4x8x1xf32, #tpu.memory_space<vmem>>, vector<4x8x1xf32>,
      %cst_106 = arith.constant 0.000000e+00 : f32
      %188 = vector.broadcast %cst_106 : f32 to vector<4x8x32xf32>
      %c0_107 = arith.constant 0 : index
      %c0_108 = arith.constant 0 : index
      %c0_109 = arith.constant 0 : index
      %189 = vector.load %arg10[%c0_107, %c0_108, %c0_109] : memref<4x8x32xf32, #tpu.memory_space<vmem>>, vector<4x8x32xf32>
      tpu.vector_store %arg10[%c0_107, %c0_108, %c0_109], %188 {strides = array<i32>} : memref<4x8x32xf32, #tpu.memory_space<vmem>>, vector<4x8x32xf32>,
    } else {
    }
    %c0 = arith.constant 0 : index
    %c0_1 = arith.constant 0 : index
    %c0_2 = arith.constant 0 : index
    %3 = vector.load %arg4[%c0, %c0_1, %c0_2] : memref<1x8x128xf32, #tpu.memory_space<vmem>>, vector<1x8x128xf32>
    %4 = vector.shape_cast %3 : vector<1x8x128xf32> to vector<8x128xf32>
    %c0_3 = arith.constant 0 : index
    %c0_4 = arith.constant 0 : index
    %c0_5 = arith.constant 0 : index
    %5 = vector.load %arg5[%c0_3, %c0_4, %c0_5] : memref<1x8x128xf32, #tpu.memory_space<vmem>>, vector<1x8x128xf32>
    %6 = vector.shape_cast %5 : vector<1x8x128xf32> to vector<8x128xf32>
    %c0_6 = arith.constant 0 : index
    %c0_7 = arith.constant 0 : index
    %c0_8 = arith.constant 0 : index
    %7 = vector.load %arg6[%c0_6, %c0_7, %c0_8] : memref<1x8x128xf32, #tpu.memory_space<vmem>>, vector<1x8x128xf32>
    %8 = vector.shape_cast %7 : vector<1x8x128xf32> to vector<8x128xf32>
    %c8_i32 = arith.constant 8 : i32
    %9 = arith.muli %arg2, %c8_i32 : i32
    %10 = tpu.iota {dimensions = array<i32: 0>} : vector<8x8xi32>
    %11 = vector.broadcast %9 : i32 to vector<8x8xi32>
    %12 = arith.addi %11, %10 : vector<8x8xi32>
    %c8_i32_9 = arith.constant 8 : i32
    %13 = arith.muli %arg3, %c8_i32_9 : i32
    %14 = tpu.iota {dimensions = array<i32: 1>} : vector<8x8xi32>
    %15 = vector.broadcast %13 : i32 to vector<8x8xi32>
    %16 = arith.addi %15, %14 : vector<8x8xi32>
    %17 = arith.cmpi sgt, %16, %12 : vector<8x8xi32>
    %cst = arith.constant -1.000000e+30 : f32
    %cst_10 = arith.constant 0.000000e+00 : f32
    %18 = vector.broadcast %cst : f32 to vector<8x8xf32>
    %19 = vector.broadcast %cst_10 : f32 to vector<8x8xf32>
    %20 = arith.select %17, %18, %19 : vector<8x8xi1>, vector<8x8xf32>
    %21 = vector.extract_strided_slice %4 {offsets = [0, 0], sizes = [8, 32], strides = [1, 1]} : vector<8x128xf32> to vector<8x32xf32>
    %22 = arith.truncf %21 : vector<8x32xf32> to vector<8x32xbf16>
    %23 = vector.extract_strided_slice %6 {offsets = [0, 0], sizes = [8, 32], strides = [1, 1]} : vector<8x128xf32> to vector<8x32xf32>
    %24 = arith.truncf %23 : vector<8x32xf32> to vector<8x32xbf16>
    %25 = vector.extract_strided_slice %8 {offsets = [0, 0], sizes = [8, 32], strides = [1, 1]} : vector<8x128xf32> to vector<8x32xf32>
    %26 = arith.truncf %25 : vector<8x32xf32> to vector<8x32xbf16>
    %cst_11 = arith.constant dense<0.000000e+00> : vector<8x8xf32>
    %27 = tpu.matmul %22, %24, %cst_11 {dimension_numbers = #tpu.dot_dimension_numbers<[1], [1], [0], [0], [0, 0, 1, 0], [], []>} : vector<8x32xbf16>, vector<8x32xbf16>, vector<8x8xf32> -> vector<8x8xf32>
    %28 = arith.addf %27, %20 : vector<8x8xf32>
    %c0_12 = arith.constant 0 : index
    %c0_13 = arith.constant 0 : index
    %c0_14 = arith.constant 0 : index
    %29 = vector.load %arg8[%c0_12, %c0_13, %c0_14] : memref<4x8x1xf32, #tpu.memory_space<vmem>>, vector<1x8x1xf32>
    %30 = vector.shape_cast %29 : vector<1x8x1xf32> to vector<8x1xf32>
    %c0_15 = arith.constant 0 : index
    %c0_16 = arith.constant 0 : index
    %c0_17 = arith.constant 0 : index
    %31 = vector.load %arg9[%c0_15, %c0_16, %c0_17] : memref<4x8x1xf32, #tpu.memory_space<vmem>>, vector<1x8x1xf32>
    %32 = vector.shape_cast %31 : vector<1x8x1xf32> to vector<8x1xf32>
    %cst_18 = arith.constant dense<0xFF800000> : vector<8xf32>
    %33 = vector.multi_reduction <maximumf>, %28, %cst_18 [1] : vector<8x8xf32> to vector<8xf32>
    %34 = vector.shape_cast %33 : vector<8xf32> to vector<8x1xf32>
    %35 = arith.maximumf %30, %34 : vector<8x1xf32>
    %36 = arith.subf %30, %35 : vector<8x1xf32>
    %37 = math.exp %36 : vector<8x1xf32>
    %38 = vector.broadcast %35 : vector<8x1xf32> to vector<8x8xf32>
    %39 = arith.subf %28, %38 : vector<8x8xf32>
    %40 = math.exp %39 : vector<8x8xf32>
    %41 = arith.mulf %37, %32 : vector<8x1xf32>
    %cst_19 = arith.constant dense<0.000000e+00> : vector<8xf32>
    %42 = vector.multi_reduction <add>, %40, %cst_19 [1] : vector<8x8xf32> to vector<8xf32>
    %43 = vector.shape_cast %42 : vector<8xf32> to vector<8x1xf32>
    %44 = arith.addf %41, %43 : vector<8x1xf32>
    %c0_20 = arith.constant 0 : index
    %c0_21 = arith.constant 0 : index
    %c0_22 = arith.constant 0 : index
    %45 = vector.load %arg9[%c0_20, %c0_21, %c0_22] : memref<4x8x1xf32, #tpu.memory_space<vmem>>, vector<1x8x1xf32>
    %46 = vector.shape_cast %45 : vector<1x8x1xf32> to vector<8x1xf32>
    %47 = vector.shape_cast %44 : vector<8x1xf32> to vector<1x8x1xf32>
    tpu.vector_store %arg9[%c0_20, %c0_21, %c0_22], %47 {strides = array<i32>} : memref<4x8x1xf32, #tpu.memory_space<vmem>>, vector<1x8x1xf32>,
    %c0_23 = arith.constant 0 : index
    %c0_24 = arith.constant 0 : index
    %c0_25 = arith.constant 0 : index
    %48 = vector.load %arg10[%c0_23, %c0_24, %c0_25] : memref<4x8x32xf32, #tpu.memory_space<vmem>>, vector<1x8x32xf32>
    %49 = vector.shape_cast %48 : vector<1x8x32xf32> to vector<8x32xf32>
    %50 = vector.broadcast %37 : vector<8x1xf32> to vector<8x32xf32>
    %51 = arith.mulf %50, %49 : vector<8x32xf32>
    %52 = arith.truncf %40 : vector<8x8xf32> to vector<8x8xbf16>
    %cst_26 = arith.constant dense<0.000000e+00> : vector<8x32xf32>
    %53 = tpu.matmul %52, %26, %cst_26 {dimension_numbers = #tpu.dot_dimension_numbers<[1], [0], [0], [1], [0, 0, 1, 1], [], []>} : vector<8x8xbf16>, vector<8x32xbf16>, vector<8x32xf32> -> vector<8x32xf32>
    %54 = arith.addf %51, %53 : vector<8x32xf32>
    %c0_27 = arith.constant 0 : index
    %c0_28 = arith.constant 0 : index
    %c0_29 = arith.constant 0 : index
    %55 = vector.load %arg10[%c0_27, %c0_28, %c0_29] : memref<4x8x32xf32, #tpu.memory_space<vmem>>, vector<1x8x32xf32>
    %56 = vector.shape_cast %55 : vector<1x8x32xf32> to vector<8x32xf32>
    %57 = vector.shape_cast %54 : vector<8x32xf32> to vector<1x8x32xf32>
    tpu.vector_store %arg10[%c0_27, %c0_28, %c0_29], %57 {strides = array<i32>} : memref<4x8x32xf32, #tpu.memory_space<vmem>>, vector<1x8x32xf32>,
    %c0_30 = arith.constant 0 : index
    %c0_31 = arith.constant 0 : index
    %c0_32 = arith.constant 0 : index
    %58 = vector.load %arg8[%c0_30, %c0_31, %c0_32] : memref<4x8x1xf32, #tpu.memory_space<vmem>>, vector<1x8x1xf32>
    %59 = vector.shape_cast %58 : vector<1x8x1xf32> to vector<8x1xf32>
    %60 = vector.shape_cast %35 : vector<8x1xf32> to vector<1x8x1xf32>
    tpu.vector_store %arg8[%c0_30, %c0_31, %c0_32], %60 {strides = array<i32>} : memref<4x8x1xf32, #tpu.memory_space<vmem>>, vector<1x8x1xf32>,
    %61 = vector.extract_strided_slice %4 {offsets = [0, 32], sizes = [8, 32], strides = [1, 1]} : vector<8x128xf32> to vector<8x32xf32>
    %62 = arith.truncf %61 : vector<8x32xf32> to vector<8x32xbf16>
    %63 = vector.extract_strided_slice %6 {offsets = [0, 32], sizes = [8, 32], strides = [1, 1]} : vector<8x128xf32> to vector<8x32xf32>
    %64 = arith.truncf %63 : vector<8x32xf32> to vector<8x32xbf16>
    %65 = vector.extract_strided_slice %8 {offsets = [0, 32], sizes = [8, 32], strides = [1, 1]} : vector<8x128xf32> to vector<8x32xf32>
    %66 = arith.truncf %65 : vector<8x32xf32> to vector<8x32xbf16>
    %cst_33 = arith.constant dense<0.000000e+00> : vector<8x8xf32>
    %67 = tpu.matmul %62, %64, %cst_33 {dimension_numbers = #tpu.dot_dimension_numbers<[1], [1], [0], [0], [0, 0, 1, 0], [], []>} : vector<8x32xbf16>, vector<8x32xbf16>, vector<8x8xf32> -> vector<8x8xf32>
    %68 = arith.addf %67, %20 : vector<8x8xf32>
    %c1 = arith.constant 1 : index
    %c0_34 = arith.constant 0 : index
    %c0_35 = arith.constant 0 : index
    %69 = vector.load %arg8[%c1, %c0_34, %c0_35] : memref<4x8x1xf32, #tpu.memory_space<vmem>>, vector<1x8x1xf32>
    %70 = vector.shape_cast %69 : vector<1x8x1xf32> to vector<8x1xf32>
    %c1_36 = arith.constant 1 : index
    %c0_37 = arith.constant 0 : index
    %c0_38 = arith.constant 0 : index
    %71 = vector.load %arg9[%c1_36, %c0_37, %c0_38] : memref<4x8x1xf32, #tpu.memory_space<vmem>>, vector<1x8x1xf32>
    %72 = vector.shape_cast %71 : vector<1x8x1xf32> to vector<8x1xf32>
    %cst_39 = arith.constant dense<0xFF800000> : vector<8xf32>
    %73 = vector.multi_reduction <maximumf>, %68, %cst_39 [1] : vector<8x8xf32> to vector<8xf32>
    %74 = vector.shape_cast %73 : vector<8xf32> to vector<8x1xf32>
    %75 = arith.maximumf %70, %74 : vector<8x1xf32>
    %76 = arith.subf %70, %75 : vector<8x1xf32>
    %77 = math.exp %76 : vector<8x1xf32>
    %78 = vector.broadcast %75 : vector<8x1xf32> to vector<8x8xf32>
    %79 = arith.subf %68, %78 : vector<8x8xf32>
    %80 = math.exp %79 : vector<8x8xf32>
    %81 = arith.mulf %77, %72 : vector<8x1xf32>
    %cst_40 = arith.constant dense<0.000000e+00> : vector<8xf32>
    %82 = vector.multi_reduction <add>, %80, %cst_40 [1] : vector<8x8xf32> to vector<8xf32>
    %83 = vector.shape_cast %82 : vector<8xf32> to vector<8x1xf32>
    %84 = arith.addf %81, %83 : vector<8x1xf32>
    %c1_41 = arith.constant 1 : index
    %c0_42 = arith.constant 0 : index
    %c0_43 = arith.constant 0 : index
    %85 = vector.load %arg9[%c1_41, %c0_42, %c0_43] : memref<4x8x1xf32, #tpu.memory_space<vmem>>, vector<1x8x1xf32>
    %86 = vector.shape_cast %85 : vector<1x8x1xf32> to vector<8x1xf32>
    %87 = vector.shape_cast %84 : vector<8x1xf32> to vector<1x8x1xf32>
    tpu.vector_store %arg9[%c1_41, %c0_42, %c0_43], %87 {strides = array<i32>} : memref<4x8x1xf32, #tpu.memory_space<vmem>>, vector<1x8x1xf32>,
    %c1_44 = arith.constant 1 : index
    %c0_45 = arith.constant 0 : index
    %c0_46 = arith.constant 0 : index
    %88 = vector.load %arg10[%c1_44, %c0_45, %c0_46] : memref<4x8x32xf32, #tpu.memory_space<vmem>>, vector<1x8x32xf32>
    %89 = vector.shape_cast %88 : vector<1x8x32xf32> to vector<8x32xf32>
    %90 = vector.broadcast %77 : vector<8x1xf32> to vector<8x32xf32>
    %91 = arith.mulf %90, %89 : vector<8x32xf32>
    %92 = arith.truncf %80 : vector<8x8xf32> to vector<8x8xbf16>
    %cst_47 = arith.constant dense<0.000000e+00> : vector<8x32xf32>
    %93 = tpu.matmul %92, %66, %cst_47 {dimension_numbers = #tpu.dot_dimension_numbers<[1], [0], [0], [1], [0, 0, 1, 1], [], []>} : vector<8x8xbf16>, vector<8x32xbf16>, vector<8x32xf32> -> vector<8x32xf32>
    %94 = arith.addf %91, %93 : vector<8x32xf32>
    %c1_48 = arith.constant 1 : index
    %c0_49 = arith.constant 0 : index
    %c0_50 = arith.constant 0 : index
    %95 = vector.load %arg10[%c1_48, %c0_49, %c0_50] : memref<4x8x32xf32, #tpu.memory_space<vmem>>, vector<1x8x32xf32>
    %96 = vector.shape_cast %95 : vector<1x8x32xf32> to vector<8x32xf32>
    %97 = vector.shape_cast %94 : vector<8x32xf32> to vector<1x8x32xf32>
    tpu.vector_store %arg10[%c1_48, %c0_49, %c0_50], %97 {strides = array<i32>} : memref<4x8x32xf32, #tpu.memory_space<vmem>>, vector<1x8x32xf32>,
    %c1_51 = arith.constant 1 : index
    %c0_52 = arith.constant 0 : index
    %c0_53 = arith.constant 0 : index
    %98 = vector.load %arg8[%c1_51, %c0_52, %c0_53] : memref<4x8x1xf32, #tpu.memory_space<vmem>>, vector<1x8x1xf32>
    %99 = vector.shape_cast %98 : vector<1x8x1xf32> to vector<8x1xf32>
    %100 = vector.shape_cast %75 : vector<8x1xf32> to vector<1x8x1xf32>
    tpu.vector_store %arg8[%c1_51, %c0_52, %c0_53], %100 {strides = array<i32>} : memref<4x8x1xf32, #tpu.memory_space<vmem>>, vector<1x8x1xf32>,
    %101 = vector.extract_strided_slice %4 {offsets = [0, 64], sizes = [8, 32], strides = [1, 1]} : vector<8x128xf32> to vector<8x32xf32>
    %102 = arith.truncf %101 : vector<8x32xf32> to vector<8x32xbf16>
    %103 = vector.extract_strided_slice %6 {offsets = [0, 64], sizes = [8, 32], strides = [1, 1]} : vector<8x128xf32> to vector<8x32xf32>
    %104 = arith.truncf %103 : vector<8x32xf32> to vector<8x32xbf16>
    %105 = vector.extract_strided_slice %8 {offsets = [0, 64], sizes = [8, 32], strides = [1, 1]} : vector<8x128xf32> to vector<8x32xf32>
    %106 = arith.truncf %105 : vector<8x32xf32> to vector<8x32xbf16>
    %cst_54 = arith.constant dense<0.000000e+00> : vector<8x8xf32>
    %107 = tpu.matmul %102, %104, %cst_54 {dimension_numbers = #tpu.dot_dimension_numbers<[1], [1], [0], [0], [0, 0, 1, 0], [], []>} : vector<8x32xbf16>, vector<8x32xbf16>, vector<8x8xf32> -> vector<8x8xf32>
    %108 = arith.addf %107, %20 : vector<8x8xf32>
    %c2 = arith.constant 2 : index
    %c0_55 = arith.constant 0 : index
    %c0_56 = arith.constant 0 : index
    %109 = vector.load %arg8[%c2, %c0_55, %c0_56] : memref<4x8x1xf32, #tpu.memory_space<vmem>>, vector<1x8x1xf32>
    %110 = vector.shape_cast %109 : vector<1x8x1xf32> to vector<8x1xf32>
    %c2_57 = arith.constant 2 : index
    %c0_58 = arith.constant 0 : index
    %c0_59 = arith.constant 0 : index
    %111 = vector.load %arg9[%c2_57, %c0_58, %c0_59] : memref<4x8x1xf32, #tpu.memory_space<vmem>>, vector<1x8x1xf32>
    %112 = vector.shape_cast %111 : vector<1x8x1xf32> to vector<8x1xf32>
    %cst_60 = arith.constant dense<0xFF800000> : vector<8xf32>
    %113 = vector.multi_reduction <maximumf>, %108, %cst_60 [1] : vector<8x8xf32> to vector<8xf32>
    %114 = vector.shape_cast %113 : vector<8xf32> to vector<8x1xf32>
    %115 = arith.maximumf %110, %114 : vector<8x1xf32>
    %116 = arith.subf %110, %115 : vector<8x1xf32>
    %117 = math.exp %116 : vector<8x1xf32>
    %118 = vector.broadcast %115 : vector<8x1xf32> to vector<8x8xf32>
    %119 = arith.subf %108, %118 : vector<8x8xf32>
    %120 = math.exp %119 : vector<8x8xf32>
    %121 = arith.mulf %117, %112 : vector<8x1xf32>
    %cst_61 = arith.constant dense<0.000000e+00> : vector<8xf32>
    %122 = vector.multi_reduction <add>, %120, %cst_61 [1] : vector<8x8xf32> to vector<8xf32>
    %123 = vector.shape_cast %122 : vector<8xf32> to vector<8x1xf32>
    %124 = arith.addf %121, %123 : vector<8x1xf32>
    %c2_62 = arith.constant 2 : index
    %c0_63 = arith.constant 0 : index
    %c0_64 = arith.constant 0 : index
    %125 = vector.load %arg9[%c2_62, %c0_63, %c0_64] : memref<4x8x1xf32, #tpu.memory_space<vmem>>, vector<1x8x1xf32>
    %126 = vector.shape_cast %125 : vector<1x8x1xf32> to vector<8x1xf32>
    %127 = vector.shape_cast %124 : vector<8x1xf32> to vector<1x8x1xf32>
    tpu.vector_store %arg9[%c2_62, %c0_63, %c0_64], %127 {strides = array<i32>} : memref<4x8x1xf32, #tpu.memory_space<vmem>>, vector<1x8x1xf32>,
    %c2_65 = arith.constant 2 : index
    %c0_66 = arith.constant 0 : index
    %c0_67 = arith.constant 0 : index
    %128 = vector.load %arg10[%c2_65, %c0_66, %c0_67] : memref<4x8x32xf32, #tpu.memory_space<vmem>>, vector<1x8x32xf32>
    %129 = vector.shape_cast %128 : vector<1x8x32xf32> to vector<8x32xf32>
    %130 = vector.broadcast %117 : vector<8x1xf32> to vector<8x32xf32>
    %131 = arith.mulf %130, %129 : vector<8x32xf32>
    %132 = arith.truncf %120 : vector<8x8xf32> to vector<8x8xbf16>
    %cst_68 = arith.constant dense<0.000000e+00> : vector<8x32xf32>
    %133 = tpu.matmul %132, %106, %cst_68 {dimension_numbers = #tpu.dot_dimension_numbers<[1], [0], [0], [1], [0, 0, 1, 1], [], []>} : vector<8x8xbf16>, vector<8x32xbf16>, vector<8x32xf32> -> vector<8x32xf32>
    %134 = arith.addf %131, %133 : vector<8x32xf32>
    %c2_69 = arith.constant 2 : index
    %c0_70 = arith.constant 0 : index
    %c0_71 = arith.constant 0 : index
    %135 = vector.load %arg10[%c2_69, %c0_70, %c0_71] : memref<4x8x32xf32, #tpu.memory_space<vmem>>, vector<1x8x32xf32>
    %136 = vector.shape_cast %135 : vector<1x8x32xf32> to vector<8x32xf32>
    %137 = vector.shape_cast %134 : vector<8x32xf32> to vector<1x8x32xf32>
    tpu.vector_store %arg10[%c2_69, %c0_70, %c0_71], %137 {strides = array<i32>} : memref<4x8x32xf32, #tpu.memory_space<vmem>>, vector<1x8x32xf32>,
    %c2_72 = arith.constant 2 : index
    %c0_73 = arith.constant 0 : index
    %c0_74 = arith.constant 0 : index
    %138 = vector.load %arg8[%c2_72, %c0_73, %c0_74] : memref<4x8x1xf32, #tpu.memory_space<vmem>>, vector<1x8x1xf32>
    %139 = vector.shape_cast %138 : vector<1x8x1xf32> to vector<8x1xf32>
    %140 = vector.shape_cast %115 : vector<8x1xf32> to vector<1x8x1xf32>
    tpu.vector_store %arg8[%c2_72, %c0_73, %c0_74], %140 {strides = array<i32>} : memref<4x8x1xf32, #tpu.memory_space<vmem>>, vector<1x8x1xf32>,
    %141 = vector.extract_strided_slice %4 {offsets = [0, 96], sizes = [8, 32], strides = [1, 1]} : vector<8x128xf32> to vector<8x32xf32>
    %142 = arith.truncf %141 : vector<8x32xf32> to vector<8x32xbf16>
    %143 = vector.extract_strided_slice %6 {offsets = [0, 96], sizes = [8, 32], strides = [1, 1]} : vector<8x128xf32> to vector<8x32xf32>
    %144 = arith.truncf %143 : vector<8x32xf32> to vector<8x32xbf16>
    %145 = vector.extract_strided_slice %8 {offsets = [0, 96], sizes = [8, 32], strides = [1, 1]} : vector<8x128xf32> to vector<8x32xf32>
    %146 = arith.truncf %145 : vector<8x32xf32> to vector<8x32xbf16>
    %cst_75 = arith.constant dense<0.000000e+00> : vector<8x8xf32>
    %147 = tpu.matmul %142, %144, %cst_75 {dimension_numbers = #tpu.dot_dimension_numbers<[1], [1], [0], [0], [0, 0, 1, 0], [], []>} : vector<8x32xbf16>, vector<8x32xbf16>, vector<8x8xf32> -> vector<8x8xf32>
    %148 = arith.addf %147, %20 : vector<8x8xf32>
    %c3 = arith.constant 3 : index
    %c0_76 = arith.constant 0 : index
    %c0_77 = arith.constant 0 : index
    %149 = vector.load %arg8[%c3, %c0_76, %c0_77] : memref<4x8x1xf32, #tpu.memory_space<vmem>>, vector<1x8x1xf32>
    %150 = vector.shape_cast %149 : vector<1x8x1xf32> to vector<8x1xf32>
    %c3_78 = arith.constant 3 : index
    %c0_79 = arith.constant 0 : index
    %c0_80 = arith.constant 0 : index
    %151 = vector.load %arg9[%c3_78, %c0_79, %c0_80] : memref<4x8x1xf32, #tpu.memory_space<vmem>>, vector<1x8x1xf32>
    %152 = vector.shape_cast %151 : vector<1x8x1xf32> to vector<8x1xf32>
    %cst_81 = arith.constant dense<0xFF800000> : vector<8xf32>
    %153 = vector.multi_reduction <maximumf>, %148, %cst_81 [1] : vector<8x8xf32> to vector<8xf32>
    %154 = vector.shape_cast %153 : vector<8xf32> to vector<8x1xf32>
    %155 = arith.maximumf %150, %154 : vector<8x1xf32>
    %156 = arith.subf %150, %155 : vector<8x1xf32>
    %157 = math.exp %156 : vector<8x1xf32>
    %158 = vector.broadcast %155 : vector<8x1xf32> to vector<8x8xf32>
    %159 = arith.subf %148, %158 : vector<8x8xf32>
    %160 = math.exp %159 : vector<8x8xf32>
    %161 = arith.mulf %157, %152 : vector<8x1xf32>
    %cst_82 = arith.constant dense<0.000000e+00> : vector<8xf32>
    %162 = vector.multi_reduction <add>, %160, %cst_82 [1] : vector<8x8xf32> to vector<8xf32>
    %163 = vector.shape_cast %162 : vector<8xf32> to vector<8x1xf32>
    %164 = arith.addf %161, %163 : vector<8x1xf32>
    %c3_83 = arith.constant 3 : index
    %c0_84 = arith.constant 0 : index
    %c0_85 = arith.constant 0 : index
    %165 = vector.load %arg9[%c3_83, %c0_84, %c0_85] : memref<4x8x1xf32, #tpu.memory_space<vmem>>, vector<1x8x1xf32>
    %166 = vector.shape_cast %165 : vector<1x8x1xf32> to vector<8x1xf32>
    %167 = vector.shape_cast %164 : vector<8x1xf32> to vector<1x8x1xf32>
    tpu.vector_store %arg9[%c3_83, %c0_84, %c0_85], %167 {strides = array<i32>} : memref<4x8x1xf32, #tpu.memory_space<vmem>>, vector<1x8x1xf32>,
    %c3_86 = arith.constant 3 : index
    %c0_87 = arith.constant 0 : index
    %c0_88 = arith.constant 0 : index
    %168 = vector.load %arg10[%c3_86, %c0_87, %c0_88] : memref<4x8x32xf32, #tpu.memory_space<vmem>>, vector<1x8x32xf32>
    %169 = vector.shape_cast %168 : vector<1x8x32xf32> to vector<8x32xf32>
    %170 = vector.broadcast %157 : vector<8x1xf32> to vector<8x32xf32>
    %171 = arith.mulf %170, %169 : vector<8x32xf32>
    %172 = arith.truncf %160 : vector<8x8xf32> to vector<8x8xbf16>
    %cst_89 = arith.constant dense<0.000000e+00> : vector<8x32xf32>
    %173 = tpu.matmul %172, %146, %cst_89 {dimension_numbers = #tpu.dot_dimension_numbers<[1], [0], [0], [1], [0, 0, 1, 1], [], []>} : vector<8x8xbf16>, vector<8x32xbf16>, vector<8x32xf32> -> vector<8x32xf32>
    %174 = arith.addf %171, %173 : vector<8x32xf32>
    %c3_90 = arith.constant 3 : index
    %c0_91 = arith.constant 0 : index
    %c0_92 = arith.constant 0 : index
    %175 = vector.load %arg10[%c3_90, %c0_91, %c0_92] : memref<4x8x32xf32, #tpu.memory_space<vmem>>, vector<1x8x32xf32>
    %176 = vector.shape_cast %175 : vector<1x8x32xf32> to vector<8x32xf32>
    %177 = vector.shape_cast %174 : vector<8x32xf32> to vector<1x8x32xf32>
    tpu.vector_store %arg10[%c3_90, %c0_91, %c0_92], %177 {strides = array<i32>} : memref<4x8x32xf32, #tpu.memory_space<vmem>>, vector<1x8x32xf32>,
    %c3_93 = arith.constant 3 : index
    %c0_94 = arith.constant 0 : index
    %c0_95 = arith.constant 0 : index
    %178 = vector.load %arg8[%c3_93, %c0_94, %c0_95] : memref<4x8x1xf32, #tpu.memory_space<vmem>>, vector<1x8x1xf32>
    %179 = vector.shape_cast %178 : vector<1x8x1xf32> to vector<8x1xf32>
    %180 = vector.shape_cast %155 : vector<8x1xf32> to vector<1x8x1xf32>
    tpu.vector_store %arg8[%c3_93, %c0_94, %c0_95], %180 {strides = array<i32>} : memref<4x8x1xf32, #tpu.memory_space<vmem>>, vector<1x8x1xf32>,
    %c0_i32_96 = arith.constant 0 : i32
    %181 = arith.cmpi eq, %arg3, %c0_i32_96 : i32
    %182 = arith.extui %181 : i1 to i32
    %c0_i32_97 = arith.constant 0 : i32
    %183 = arith.cmpi ne, %182, %c0_i32_97 : i32
    scf.if %183 {
      %c0_98 = arith.constant 0 : index
      %c0_99 = arith.constant 0 : index
      %c0_100 = arith.constant 0 : index
      %184 = vector.load %arg10[%c0_98, %c0_99, %c0_100] : memref<4x8x32xf32, #tpu.memory_space<vmem>>, vector<1x8x32xf32>
      %185 = vector.shape_cast %184 : vector<1x8x32xf32> to vector<8x32xf32>
      %c0_101 = arith.constant 0 : index
      %c0_102 = arith.constant 0 : index
      %c0_103 = arith.constant 0 : index
      %186 = vector.load %arg9[%c0_101, %c0_102, %c0_103] : memref<4x8x1xf32, #tpu.memory_space<vmem>>, vector<1x8x1xf32>
      %187 = vector.shape_cast %186 : vector<1x8x1xf32> to vector<8x1xf32>
      %188 = tpu.reciprocal %187 {approx = true} : vector<8x1xf32> -> vector<8x1xf32>
      %189 = vector.broadcast %188 : vector<8x1xf32> to vector<8x32xf32>
      %190 = arith.mulf %185, %189 : vector<8x32xf32>
      %c1_104 = arith.constant 1 : index
      %c0_105 = arith.constant 0 : index
      %c0_106 = arith.constant 0 : index
      %191 = vector.load %arg10[%c1_104, %c0_105, %c0_106] : memref<4x8x32xf32, #tpu.memory_space<vmem>>, vector<1x8x32xf32>
      %192 = vector.shape_cast %191 : vector<1x8x32xf32> to vector<8x32xf32>
      %c1_107 = arith.constant 1 : index
      %c0_108 = arith.constant 0 : index
      %c0_109 = arith.constant 0 : index
      %193 = vector.load %arg9[%c1_107, %c0_108, %c0_109] : memref<4x8x1xf32, #tpu.memory_space<vmem>>, vector<1x8x1xf32>
      %194 = vector.shape_cast %193 : vector<1x8x1xf32> to vector<8x1xf32>
      %195 = tpu.reciprocal %194 {approx = true} : vector<8x1xf32> -> vector<8x1xf32>
      %196 = vector.broadcast %195 : vector<8x1xf32> to vector<8x32xf32>
      %197 = arith.mulf %192, %196 : vector<8x32xf32>
      %c2_110 = arith.constant 2 : index
      %c0_111 = arith.constant 0 : index
      %c0_112 = arith.constant 0 : index
      %198 = vector.load %arg10[%c2_110, %c0_111, %c0_112] : memref<4x8x32xf32, #tpu.memory_space<vmem>>, vector<1x8x32xf32>
      %199 = vector.shape_cast %198 : vector<1x8x32xf32> to vector<8x32xf32>
      %c2_113 = arith.constant 2 : index
      %c0_114 = arith.constant 0 : index
      %c0_115 = arith.constant 0 : index
      %200 = vector.load %arg9[%c2_113, %c0_114, %c0_115] : memref<4x8x1xf32, #tpu.memory_space<vmem>>, vector<1x8x1xf32>
      %201 = vector.shape_cast %200 : vector<1x8x1xf32> to vector<8x1xf32>
      %202 = tpu.reciprocal %201 {approx = true} : vector<8x1xf32> -> vector<8x1xf32>
      %203 = vector.broadcast %202 : vector<8x1xf32> to vector<8x32xf32>
      %204 = arith.mulf %199, %203 : vector<8x32xf32>
      %c3_116 = arith.constant 3 : index
      %c0_117 = arith.constant 0 : index
      %c0_118 = arith.constant 0 : index
      %205 = vector.load %arg10[%c3_116, %c0_117, %c0_118] : memref<4x8x32xf32, #tpu.memory_space<vmem>>, vector<1x8x32xf32>
      %206 = vector.shape_cast %205 : vector<1x8x32xf32> to vector<8x32xf32>
      %c3_119 = arith.constant 3 : index
      %c0_120 = arith.constant 0 : index
      %c0_121 = arith.constant 0 : index
      %207 = vector.load %arg9[%c3_119, %c0_120, %c0_121] : memref<4x8x1xf32, #tpu.memory_space<vmem>>, vector<1x8x1xf32>
      %208 = vector.shape_cast %207 : vector<1x8x1xf32> to vector<8x1xf32>
      %209 = tpu.reciprocal %208 {approx = true} : vector<8x1xf32> -> vector<8x1xf32>
      %210 = vector.broadcast %209 : vector<8x1xf32> to vector<8x32xf32>
      %211 = arith.mulf %206, %210 : vector<8x32xf32>
      %212 = tpu.concatenate %190, %197, %204, %211 in 1 : vector<8x32xf32>, vector<8x32xf32>, vector<8x32xf32>, vector<8x32xf32> -> vector<8x128xf32>
      %c0_122 = arith.constant 0 : index
      %c0_123 = arith.constant 0 : index
      %c0_124 = arith.constant 0 : index
      %213 = vector.load %arg7[%c0_122, %c0_123, %c0_124] : memref<1x8x128xf32, #tpu.memory_space<vmem>>, vector<1x8x128xf32>
      %214 = vector.shape_cast %213 : vector<1x8x128xf32> to vector<8x128xf32>
      %215 = vector.shape_cast %212 : vector<8x128xf32> to vector<1x8x128xf32>
      tpu.vector_store %arg7[%c0_122, %c0_123, %c0_124], %215 {strides = array<i32>} : memref<1x8x128xf32, #tpu.memory_space<vmem>>, vector<1x8x128xf32>,
    } else {
    }
    return
  }
  func.func @transform_0(%arg0: i32, %arg1: i32, %arg2: i32, %arg3: i32) -> (i32, i32, i32) {
    %c0_i32 = arith.constant 0 : i32
    return %arg0, %arg2, %arg1 : i32, i32, i32
  }
  func.func @transform_1(%arg0: i32, %arg1: i32, %arg2: i32, %arg3: i32) -> (i32, i32, i32) {
    %c0_i32 = arith.constant 0 : i32
    return %arg0, %arg3, %arg1 : i32, i32, i32
  }
  func.func @transform_2(%arg0: i32, %arg1: i32, %arg2: i32, %arg3: i32) -> (i32, i32, i32) {
    %c0_i32 = arith.constant 0 : i32
    return %arg0, %arg3, %arg1 : i32, i32, i32
  }
  func.func @transform_3(%arg0: i32, %arg1: i32, %arg2: i32, %arg3: i32) -> (i32, i32, i32) {
    %c0_i32 = arith.constant 0 : i32
    return %arg0, %arg2, %arg1 : i32, i32, i32
  }
}

module attributes {stable_mosaic.version = 11 : i64} {
  func.func @_matmul_res_rmsnorm_kernel(%arg0: i32, %arg1: i32, %arg2: memref<16x128xf32, #tpu.memory_space<vmem>>, %arg3: memref<128x128xf32, #tpu.memory_space<vmem>>, %arg4: memref<1x128xf32, #tpu.memory_space<vmem>>, %arg5: memref<16x128xf32, #tpu.memory_space<vmem>>, %arg6: memref<1x128xf32, #tpu.memory_space<vmem>>, %arg7: memref<16x128xf32, #tpu.memory_space<vmem>>, %arg8: memref<16x128xf32, #tpu.memory_space<vmem>>) attributes {dimension_semantics = [#tpu.dimension_semantics<parallel>, #tpu.dimension_semantics<arbitrary>], iteration_bounds = array<i64: 1, 1>, scalar_prefetch = 0 : i64, scratch_operands = 1 : i64, tpu.core_type = #tpu.core_type<tc>, window_params = [{transform_indices = @transform_0, window_bounds = array<i64: 16, 128>}, {transform_indices = @transform_1, window_bounds = array<i64: 128, 128>}, {pipeline_mode = #tpu.pipeline_mode<synchronous>, transform_indices = @transform_2, window_bounds = array<i64: 1, 128>}, {transform_indices = @transform_3, window_bounds = array<i64: 16, 128>}, {pipeline_mode = #tpu.pipeline_mode<synchronous>, transform_indices = @transform_4, window_bounds = array<i64: 1, 128>}, {transform_indices = @transform_5, window_bounds = array<i64: 16, 128>}]} {
    %c0_i32 = arith.constant 0 : i32
    %0 = arith.cmpi eq, %arg1, %c0_i32 : i32
    %1 = arith.extui %0 : i1 to i32
    %c0_i32_0 = arith.constant 0 : i32
    %2 = arith.cmpi ne, %1, %c0_i32_0 : i32
    scf.if %2 {
      %cst_10 = arith.constant 0.000000e+00 : f32
      %14 = vector.broadcast %cst_10 : f32 to vector<16x128xf32>
      %c0_11 = arith.constant 0 : index
      %c0_12 = arith.constant 0 : index
      %15 = vector.load %arg8[%c0_11, %c0_12] : memref<16x128xf32, #tpu.memory_space<vmem>>, vector<16x128xf32>
      tpu.vector_store %arg8[%c0_11, %c0_12], %14 {strides = array<i32>} : memref<16x128xf32, #tpu.memory_space<vmem>>, vector<16x128xf32>,
    } else {
    }
    %c0 = arith.constant 0 : index
    %c0_1 = arith.constant 0 : index
    %3 = vector.load %arg8[%c0, %c0_1] : memref<16x128xf32, #tpu.memory_space<vmem>>, vector<16x128xf32>
    %c0_2 = arith.constant 0 : index
    %c0_3 = arith.constant 0 : index
    %4 = vector.load %arg2[%c0_2, %c0_3] : memref<16x128xf32, #tpu.memory_space<vmem>>, vector<16x128xf32>
    %5 = arith.truncf %4 : vector<16x128xf32> to vector<16x128xbf16>
    %c0_4 = arith.constant 0 : index
    %c0_5 = arith.constant 0 : index
    %6 = vector.load %arg3[%c0_4, %c0_5] : memref<128x128xf32, #tpu.memory_space<vmem>>, vector<128x128xf32>
    %7 = arith.truncf %6 : vector<128x128xf32> to vector<128x128xbf16>
    %cst = arith.constant dense<0.000000e+00> : vector<16x128xf32>
    %8 = tpu.matmul %5, %7, %cst {dimension_numbers = #tpu.dot_dimension_numbers<[1], [0], [0], [1], [0, 0, 1, 1], [], []>} : vector<16x128xbf16>, vector<128x128xbf16>, vector<16x128xf32> -> vector<16x128xf32>
    %9 = arith.addf %3, %8 : vector<16x128xf32>
    %c0_6 = arith.constant 0 : index
    %c0_7 = arith.constant 0 : index
    %10 = vector.load %arg8[%c0_6, %c0_7] : memref<16x128xf32, #tpu.memory_space<vmem>>, vector<16x128xf32>
    tpu.vector_store %arg8[%c0_6, %c0_7], %9 {strides = array<i32>} : memref<16x128xf32, #tpu.memory_space<vmem>>, vector<16x128xf32>,
    %c0_i32_8 = arith.constant 0 : i32
    %11 = arith.cmpi eq, %arg1, %c0_i32_8 : i32
    %12 = arith.extui %11 : i1 to i32
    %c0_i32_9 = arith.constant 0 : i32
    %13 = arith.cmpi ne, %12, %c0_i32_9 : i32
    scf.if %13 {
      %c0_10 = arith.constant 0 : index
      %c0_11 = arith.constant 0 : index
      %14 = vector.load %arg8[%c0_10, %c0_11] : memref<16x128xf32, #tpu.memory_space<vmem>>, vector<16x128xf32>
      %c0_12 = arith.constant 0 : index
      %c0_13 = arith.constant 0 : index
      %15 = vector.load %arg4[%c0_12, %c0_13] : memref<1x128xf32, #tpu.memory_space<vmem>>, vector<1x128xf32>
      %16 = vector.broadcast %15 : vector<1x128xf32> to vector<16x128xf32>
      %17 = arith.addf %14, %16 : vector<16x128xf32>
      %c0_14 = arith.constant 0 : index
      %c0_15 = arith.constant 0 : index
      %18 = vector.load %arg5[%c0_14, %c0_15] : memref<16x128xf32, #tpu.memory_space<vmem>>, vector<16x128xf32>
      %19 = arith.addf %17, %18 : vector<16x128xf32>
      %20 = arith.mulf %19, %19 : vector<16x128xf32>
      %cst_16 = arith.constant dense<0.000000e+00> : vector<16xf32>
      %21 = vector.multi_reduction <add>, %20, %cst_16 [1] : vector<16x128xf32> to vector<16xf32>
      %22 = vector.shape_cast %21 : vector<16xf32> to vector<16x1xf32>
      %cst_17 = arith.constant 7.812500e-03 : f32
      %23 = vector.broadcast %cst_17 : f32 to vector<16x1xf32>
      %24 = arith.mulf %22, %23 : vector<16x1xf32>
      %cst_18 = arith.constant 9.99999974E-6 : f32
      %25 = vector.broadcast %cst_18 : f32 to vector<16x1xf32>
      %26 = arith.addf %24, %25 : vector<16x1xf32>
      %27 = math.rsqrt %26 : vector<16x1xf32>
      %28 = vector.broadcast %27 : vector<16x1xf32> to vector<16x128xf32>
      %29 = arith.mulf %19, %28 : vector<16x128xf32>
      %c0_19 = arith.constant 0 : index
      %c0_20 = arith.constant 0 : index
      %30 = vector.load %arg6[%c0_19, %c0_20] : memref<1x128xf32, #tpu.memory_space<vmem>>, vector<1x128xf32>
      %31 = vector.broadcast %30 : vector<1x128xf32> to vector<16x128xf32>
      %32 = arith.mulf %29, %31 : vector<16x128xf32>
      %c0_21 = arith.constant 0 : index
      %c0_22 = arith.constant 0 : index
      %33 = vector.load %arg7[%c0_21, %c0_22] : memref<16x128xf32, #tpu.memory_space<vmem>>, vector<16x128xf32>
      tpu.vector_store %arg7[%c0_21, %c0_22], %32 {strides = array<i32>} : memref<16x128xf32, #tpu.memory_space<vmem>>, vector<16x128xf32>,
    } else {
    }
    return
  }
  func.func @transform_0(%arg0: i32, %arg1: i32) -> (i32, i32) {
    %c0_i32 = arith.constant 0 : i32
    return %arg0, %arg1 : i32, i32
  }
  func.func @transform_1(%arg0: i32, %arg1: i32) -> (i32, i32) {
    %c0_i32 = arith.constant 0 : i32
    %c0_i32_0 = arith.constant 0 : i32
    return %arg1, %c0_i32 : i32, i32
  }
  func.func @transform_2(%arg0: i32, %arg1: i32) -> (i32, i32) {
    %c0_i32 = arith.constant 0 : i32
    %c0_i32_0 = arith.constant 0 : i32
    %c0_i32_1 = arith.constant 0 : i32
    return %c0_i32, %c0_i32_0 : i32, i32
  }
  func.func @transform_3(%arg0: i32, %arg1: i32) -> (i32, i32) {
    %c0_i32 = arith.constant 0 : i32
    %c0_i32_0 = arith.constant 0 : i32
    return %arg0, %c0_i32 : i32, i32
  }
  func.func @transform_4(%arg0: i32, %arg1: i32) -> (i32, i32) {
    %c0_i32 = arith.constant 0 : i32
    %c0_i32_0 = arith.constant 0 : i32
    %c0_i32_1 = arith.constant 0 : i32
    return %c0_i32, %c0_i32_0 : i32, i32
  }
  func.func @transform_5(%arg0: i32, %arg1: i32) -> (i32, i32) {
    %c0_i32 = arith.constant 0 : i32
    %c0_i32_0 = arith.constant 0 : i32
    return %arg0, %c0_i32 : i32, i32
  }
}

module attributes {stable_mosaic.version = 11 : i64} {
  func.func @_attention_kernel(%arg0: i32, %arg1: i32, %arg2: i32, %arg3: i32, %arg4: memref<1x8x128xf32, #tpu.memory_space<vmem>>, %arg5: memref<1x8x128xf32, #tpu.memory_space<vmem>>, %arg6: memref<1x8x128xf32, #tpu.memory_space<vmem>>, %arg7: memref<1x8x128xf32, #tpu.memory_space<vmem>>, %arg8: memref<4x8x1xf32, #tpu.memory_space<vmem>>, %arg9: memref<4x8x1xf32, #tpu.memory_space<vmem>>, %arg10: memref<4x8x32xf32, #tpu.memory_space<vmem>>) attributes {dimension_semantics = [#tpu.dimension_semantics<parallel>, #tpu.dimension_semantics<parallel>, #tpu.dimension_semantics<parallel>, #tpu.dimension_semantics<arbitrary>], iteration_bounds = array<i64: 2, 1, 1, 1>, scalar_prefetch = 0 : i64, scratch_operands = 3 : i64, tpu.core_type = #tpu.core_type<tc>, window_params = [{transform_indices = @transform_0, window_bounds = array<i64: 1, 8, 128>}, {transform_indices = @transform_1, window_bounds = array<i64: 1, 8, 128>}, {transform_indices = @transform_2, window_bounds = array<i64: 1, 8, 128>}, {transform_indices = @transform_3, window_bounds = array<i64: 1, 8, 128>}]} {
    %c0_i32 = arith.constant 0 : i32
    %0 = arith.cmpi eq, %arg3, %c0_i32 : i32
    %1 = arith.extui %0 : i1 to i32
    %c0_i32_0 = arith.constant 0 : i32
    %2 = arith.cmpi ne, %1, %c0_i32_0 : i32
    scf.if %2 {
      %cst_95 = arith.constant 0xFF800000 : f32
      %168 = vector.broadcast %cst_95 : f32 to vector<4x8x1xf32>
      %c0_96 = arith.constant 0 : index
      %c0_97 = arith.constant 0 : index
      %c0_98 = arith.constant 0 : index
      %169 = vector.load %arg8[%c0_96, %c0_97, %c0_98] : memref<4x8x1xf32, #tpu.memory_space<vmem>>, vector<4x8x1xf32>
      tpu.vector_store %arg8[%c0_96, %c0_97, %c0_98], %168 {strides = array<i32>} : memref<4x8x1xf32, #tpu.memory_space<vmem>>, vector<4x8x1xf32>,
      %cst_99 = arith.constant 0.000000e+00 : f32
      %170 = vector.broadcast %cst_99 : f32 to vector<4x8x1xf32>
      %c0_100 = arith.constant 0 : index
      %c0_101 = arith.constant 0 : index
      %c0_102 = arith.constant 0 : index
      %171 = vector.load %arg9[%c0_100, %c0_101, %c0_102] : memref<4x8x1xf32, #tpu.memory_space<vmem>>, vector<4x8x1xf32>
      tpu.vector_store %arg9[%c0_100, %c0_101, %c0_102], %170 {strides = array<i32>} : memref<4x8x1xf32, #tpu.memory_space<vmem>>, vector<4x8x1xf32>,
      %cst_103 = arith.constant 0.000000e+00 : f32
      %172 = vector.broadcast %cst_103 : f32 to vector<4x8x32xf32>
      %c0_104 = arith.constant 0 : index
      %c0_105 = arith.constant 0 : index
      %c0_106 = arith.constant 0 : index
      %173 = vector.load %arg10[%c0_104, %c0_105, %c0_106] : memref<4x8x32xf32, #tpu.memory_space<vmem>>, vector<4x8x32xf32>
      tpu.vector_store %arg10[%c0_104, %c0_105, %c0_106], %172 {strides = array<i32>} : memref<4x8x32xf32, #tpu.memory_space<vmem>>, vector<4x8x32xf32>,
    } else {
    }
    %c0 = arith.constant 0 : index
    %c0_1 = arith.constant 0 : index
    %c0_2 = arith.constant 0 : index
    %3 = vector.load %arg4[%c0, %c0_1, %c0_2] : memref<1x8x128xf32, #tpu.memory_space<vmem>>, vector<1x8x128xf32>
    %4 = vector.shape_cast %3 : vector<1x8x128xf32> to vector<8x128xf32>
    %c0_3 = arith.constant 0 : index
    %c0_4 = arith.constant 0 : index
    %c0_5 = arith.constant 0 : index
    %5 = vector.load %arg5[%c0_3, %c0_4, %c0_5] : memref<1x8x128xf32, #tpu.memory_space<vmem>>, vector<1x8x128xf32>
    %6 = vector.shape_cast %5 : vector<1x8x128xf32> to vector<8x128xf32>
    %c0_6 = arith.constant 0 : index
    %c0_7 = arith.constant 0 : index
    %c0_8 = arith.constant 0 : index
    %7 = vector.load %arg6[%c0_6, %c0_7, %c0_8] : memref<1x8x128xf32, #tpu.memory_space<vmem>>, vector<1x8x128xf32>
    %8 = vector.shape_cast %7 : vector<1x8x128xf32> to vector<8x128xf32>
    %9 = vector.extract_strided_slice %4 {offsets = [0, 0], sizes = [8, 32], strides = [1, 1]} : vector<8x128xf32> to vector<8x32xf32>
    %10 = arith.truncf %9 : vector<8x32xf32> to vector<8x32xbf16>
    %11 = vector.extract_strided_slice %6 {offsets = [0, 0], sizes = [8, 32], strides = [1, 1]} : vector<8x128xf32> to vector<8x32xf32>
    %12 = arith.truncf %11 : vector<8x32xf32> to vector<8x32xbf16>
    %13 = vector.extract_strided_slice %8 {offsets = [0, 0], sizes = [8, 32], strides = [1, 1]} : vector<8x128xf32> to vector<8x32xf32>
    %14 = arith.truncf %13 : vector<8x32xf32> to vector<8x32xbf16>
    %cst = arith.constant dense<0.000000e+00> : vector<8x8xf32>
    %15 = tpu.matmul %10, %12, %cst {dimension_numbers = #tpu.dot_dimension_numbers<[1], [1], [0], [0], [0, 0, 1, 0], [], []>} : vector<8x32xbf16>, vector<8x32xbf16>, vector<8x8xf32> -> vector<8x8xf32>
    %c0_9 = arith.constant 0 : index
    %c0_10 = arith.constant 0 : index
    %c0_11 = arith.constant 0 : index
    %16 = vector.load %arg8[%c0_9, %c0_10, %c0_11] : memref<4x8x1xf32, #tpu.memory_space<vmem>>, vector<1x8x1xf32>
    %17 = vector.shape_cast %16 : vector<1x8x1xf32> to vector<8x1xf32>
    %c0_12 = arith.constant 0 : index
    %c0_13 = arith.constant 0 : index
    %c0_14 = arith.constant 0 : index
    %18 = vector.load %arg9[%c0_12, %c0_13, %c0_14] : memref<4x8x1xf32, #tpu.memory_space<vmem>>, vector<1x8x1xf32>
    %19 = vector.shape_cast %18 : vector<1x8x1xf32> to vector<8x1xf32>
    %cst_15 = arith.constant dense<0xFF800000> : vector<8xf32>
    %20 = vector.multi_reduction <maximumf>, %15, %cst_15 [1] : vector<8x8xf32> to vector<8xf32>
    %21 = vector.shape_cast %20 : vector<8xf32> to vector<8x1xf32>
    %22 = arith.maximumf %17, %21 : vector<8x1xf32>
    %23 = arith.subf %17, %22 : vector<8x1xf32>
    %24 = math.exp %23 : vector<8x1xf32>
    %25 = vector.broadcast %22 : vector<8x1xf32> to vector<8x8xf32>
    %26 = arith.subf %15, %25 : vector<8x8xf32>
    %27 = math.exp %26 : vector<8x8xf32>
    %28 = arith.mulf %24, %19 : vector<8x1xf32>
    %cst_16 = arith.constant dense<0.000000e+00> : vector<8xf32>
    %29 = vector.multi_reduction <add>, %27, %cst_16 [1] : vector<8x8xf32> to vector<8xf32>
    %30 = vector.shape_cast %29 : vector<8xf32> to vector<8x1xf32>
    %31 = arith.addf %28, %30 : vector<8x1xf32>
    %c0_17 = arith.constant 0 : index
    %c0_18 = arith.constant 0 : index
    %c0_19 = arith.constant 0 : index
    %32 = vector.load %arg9[%c0_17, %c0_18, %c0_19] : memref<4x8x1xf32, #tpu.memory_space<vmem>>, vector<1x8x1xf32>
    %33 = vector.shape_cast %32 : vector<1x8x1xf32> to vector<8x1xf32>
    %34 = vector.shape_cast %31 : vector<8x1xf32> to vector<1x8x1xf32>
    tpu.vector_store %arg9[%c0_17, %c0_18, %c0_19], %34 {strides = array<i32>} : memref<4x8x1xf32, #tpu.memory_space<vmem>>, vector<1x8x1xf32>,
    %c0_20 = arith.constant 0 : index
    %c0_21 = arith.constant 0 : index
    %c0_22 = arith.constant 0 : index
    %35 = vector.load %arg10[%c0_20, %c0_21, %c0_22] : memref<4x8x32xf32, #tpu.memory_space<vmem>>, vector<1x8x32xf32>
    %36 = vector.shape_cast %35 : vector<1x8x32xf32> to vector<8x32xf32>
    %37 = vector.broadcast %24 : vector<8x1xf32> to vector<8x32xf32>
    %38 = arith.mulf %37, %36 : vector<8x32xf32>
    %39 = arith.truncf %27 : vector<8x8xf32> to vector<8x8xbf16>
    %cst_23 = arith.constant dense<0.000000e+00> : vector<8x32xf32>
    %40 = tpu.matmul %39, %14, %cst_23 {dimension_numbers = #tpu.dot_dimension_numbers<[1], [0], [0], [1], [0, 0, 1, 1], [], []>} : vector<8x8xbf16>, vector<8x32xbf16>, vector<8x32xf32> -> vector<8x32xf32>
    %41 = arith.addf %38, %40 : vector<8x32xf32>
    %c0_24 = arith.constant 0 : index
    %c0_25 = arith.constant 0 : index
    %c0_26 = arith.constant 0 : index
    %42 = vector.load %arg10[%c0_24, %c0_25, %c0_26] : memref<4x8x32xf32, #tpu.memory_space<vmem>>, vector<1x8x32xf32>
    %43 = vector.shape_cast %42 : vector<1x8x32xf32> to vector<8x32xf32>
    %44 = vector.shape_cast %41 : vector<8x32xf32> to vector<1x8x32xf32>
    tpu.vector_store %arg10[%c0_24, %c0_25, %c0_26], %44 {strides = array<i32>} : memref<4x8x32xf32, #tpu.memory_space<vmem>>, vector<1x8x32xf32>,
    %c0_27 = arith.constant 0 : index
    %c0_28 = arith.constant 0 : index
    %c0_29 = arith.constant 0 : index
    %45 = vector.load %arg8[%c0_27, %c0_28, %c0_29] : memref<4x8x1xf32, #tpu.memory_space<vmem>>, vector<1x8x1xf32>
    %46 = vector.shape_cast %45 : vector<1x8x1xf32> to vector<8x1xf32>
    %47 = vector.shape_cast %22 : vector<8x1xf32> to vector<1x8x1xf32>
    tpu.vector_store %arg8[%c0_27, %c0_28, %c0_29], %47 {strides = array<i32>} : memref<4x8x1xf32, #tpu.memory_space<vmem>>, vector<1x8x1xf32>,
    %48 = vector.extract_strided_slice %4 {offsets = [0, 32], sizes = [8, 32], strides = [1, 1]} : vector<8x128xf32> to vector<8x32xf32>
    %49 = arith.truncf %48 : vector<8x32xf32> to vector<8x32xbf16>
    %50 = vector.extract_strided_slice %6 {offsets = [0, 32], sizes = [8, 32], strides = [1, 1]} : vector<8x128xf32> to vector<8x32xf32>
    %51 = arith.truncf %50 : vector<8x32xf32> to vector<8x32xbf16>
    %52 = vector.extract_strided_slice %8 {offsets = [0, 32], sizes = [8, 32], strides = [1, 1]} : vector<8x128xf32> to vector<8x32xf32>
    %53 = arith.truncf %52 : vector<8x32xf32> to vector<8x32xbf16>
    %cst_30 = arith.constant dense<0.000000e+00> : vector<8x8xf32>
    %54 = tpu.matmul %49, %51, %cst_30 {dimension_numbers = #tpu.dot_dimension_numbers<[1], [1], [0], [0], [0, 0, 1, 0], [], []>} : vector<8x32xbf16>, vector<8x32xbf16>, vector<8x8xf32> -> vector<8x8xf32>
    %c1 = arith.constant 1 : index
    %c0_31 = arith.constant 0 : index
    %c0_32 = arith.constant 0 : index
    %55 = vector.load %arg8[%c1, %c0_31, %c0_32] : memref<4x8x1xf32, #tpu.memory_space<vmem>>, vector<1x8x1xf32>
    %56 = vector.shape_cast %55 : vector<1x8x1xf32> to vector<8x1xf32>
    %c1_33 = arith.constant 1 : index
    %c0_34 = arith.constant 0 : index
    %c0_35 = arith.constant 0 : index
    %57 = vector.load %arg9[%c1_33, %c0_34, %c0_35] : memref<4x8x1xf32, #tpu.memory_space<vmem>>, vector<1x8x1xf32>
    %58 = vector.shape_cast %57 : vector<1x8x1xf32> to vector<8x1xf32>
    %cst_36 = arith.constant dense<0xFF800000> : vector<8xf32>
    %59 = vector.multi_reduction <maximumf>, %54, %cst_36 [1] : vector<8x8xf32> to vector<8xf32>
    %60 = vector.shape_cast %59 : vector<8xf32> to vector<8x1xf32>
    %61 = arith.maximumf %56, %60 : vector<8x1xf32>
    %62 = arith.subf %56, %61 : vector<8x1xf32>
    %63 = math.exp %62 : vector<8x1xf32>
    %64 = vector.broadcast %61 : vector<8x1xf32> to vector<8x8xf32>
    %65 = arith.subf %54, %64 : vector<8x8xf32>
    %66 = math.exp %65 : vector<8x8xf32>
    %67 = arith.mulf %63, %58 : vector<8x1xf32>
    %cst_37 = arith.constant dense<0.000000e+00> : vector<8xf32>
    %68 = vector.multi_reduction <add>, %66, %cst_37 [1] : vector<8x8xf32> to vector<8xf32>
    %69 = vector.shape_cast %68 : vector<8xf32> to vector<8x1xf32>
    %70 = arith.addf %67, %69 : vector<8x1xf32>
    %c1_38 = arith.constant 1 : index
    %c0_39 = arith.constant 0 : index
    %c0_40 = arith.constant 0 : index
    %71 = vector.load %arg9[%c1_38, %c0_39, %c0_40] : memref<4x8x1xf32, #tpu.memory_space<vmem>>, vector<1x8x1xf32>
    %72 = vector.shape_cast %71 : vector<1x8x1xf32> to vector<8x1xf32>
    %73 = vector.shape_cast %70 : vector<8x1xf32> to vector<1x8x1xf32>
    tpu.vector_store %arg9[%c1_38, %c0_39, %c0_40], %73 {strides = array<i32>} : memref<4x8x1xf32, #tpu.memory_space<vmem>>, vector<1x8x1xf32>,
    %c1_41 = arith.constant 1 : index
    %c0_42 = arith.constant 0 : index
    %c0_43 = arith.constant 0 : index
    %74 = vector.load %arg10[%c1_41, %c0_42, %c0_43] : memref<4x8x32xf32, #tpu.memory_space<vmem>>, vector<1x8x32xf32>
    %75 = vector.shape_cast %74 : vector<1x8x32xf32> to vector<8x32xf32>
    %76 = vector.broadcast %63 : vector<8x1xf32> to vector<8x32xf32>
    %77 = arith.mulf %76, %75 : vector<8x32xf32>
    %78 = arith.truncf %66 : vector<8x8xf32> to vector<8x8xbf16>
    %cst_44 = arith.constant dense<0.000000e+00> : vector<8x32xf32>
    %79 = tpu.matmul %78, %53, %cst_44 {dimension_numbers = #tpu.dot_dimension_numbers<[1], [0], [0], [1], [0, 0, 1, 1], [], []>} : vector<8x8xbf16>, vector<8x32xbf16>, vector<8x32xf32> -> vector<8x32xf32>
    %80 = arith.addf %77, %79 : vector<8x32xf32>
    %c1_45 = arith.constant 1 : index
    %c0_46 = arith.constant 0 : index
    %c0_47 = arith.constant 0 : index
    %81 = vector.load %arg10[%c1_45, %c0_46, %c0_47] : memref<4x8x32xf32, #tpu.memory_space<vmem>>, vector<1x8x32xf32>
    %82 = vector.shape_cast %81 : vector<1x8x32xf32> to vector<8x32xf32>
    %83 = vector.shape_cast %80 : vector<8x32xf32> to vector<1x8x32xf32>
    tpu.vector_store %arg10[%c1_45, %c0_46, %c0_47], %83 {strides = array<i32>} : memref<4x8x32xf32, #tpu.memory_space<vmem>>, vector<1x8x32xf32>,
    %c1_48 = arith.constant 1 : index
    %c0_49 = arith.constant 0 : index
    %c0_50 = arith.constant 0 : index
    %84 = vector.load %arg8[%c1_48, %c0_49, %c0_50] : memref<4x8x1xf32, #tpu.memory_space<vmem>>, vector<1x8x1xf32>
    %85 = vector.shape_cast %84 : vector<1x8x1xf32> to vector<8x1xf32>
    %86 = vector.shape_cast %61 : vector<8x1xf32> to vector<1x8x1xf32>
    tpu.vector_store %arg8[%c1_48, %c0_49, %c0_50], %86 {strides = array<i32>} : memref<4x8x1xf32, #tpu.memory_space<vmem>>, vector<1x8x1xf32>,
    %87 = vector.extract_strided_slice %4 {offsets = [0, 64], sizes = [8, 32], strides = [1, 1]} : vector<8x128xf32> to vector<8x32xf32>
    %88 = arith.truncf %87 : vector<8x32xf32> to vector<8x32xbf16>
    %89 = vector.extract_strided_slice %6 {offsets = [0, 64], sizes = [8, 32], strides = [1, 1]} : vector<8x128xf32> to vector<8x32xf32>
    %90 = arith.truncf %89 : vector<8x32xf32> to vector<8x32xbf16>
    %91 = vector.extract_strided_slice %8 {offsets = [0, 64], sizes = [8, 32], strides = [1, 1]} : vector<8x128xf32> to vector<8x32xf32>
    %92 = arith.truncf %91 : vector<8x32xf32> to vector<8x32xbf16>
    %cst_51 = arith.constant dense<0.000000e+00> : vector<8x8xf32>
    %93 = tpu.matmul %88, %90, %cst_51 {dimension_numbers = #tpu.dot_dimension_numbers<[1], [1], [0], [0], [0, 0, 1, 0], [], []>} : vector<8x32xbf16>, vector<8x32xbf16>, vector<8x8xf32> -> vector<8x8xf32>
    %c2 = arith.constant 2 : index
    %c0_52 = arith.constant 0 : index
    %c0_53 = arith.constant 0 : index
    %94 = vector.load %arg8[%c2, %c0_52, %c0_53] : memref<4x8x1xf32, #tpu.memory_space<vmem>>, vector<1x8x1xf32>
    %95 = vector.shape_cast %94 : vector<1x8x1xf32> to vector<8x1xf32>
    %c2_54 = arith.constant 2 : index
    %c0_55 = arith.constant 0 : index
    %c0_56 = arith.constant 0 : index
    %96 = vector.load %arg9[%c2_54, %c0_55, %c0_56] : memref<4x8x1xf32, #tpu.memory_space<vmem>>, vector<1x8x1xf32>
    %97 = vector.shape_cast %96 : vector<1x8x1xf32> to vector<8x1xf32>
    %cst_57 = arith.constant dense<0xFF800000> : vector<8xf32>
    %98 = vector.multi_reduction <maximumf>, %93, %cst_57 [1] : vector<8x8xf32> to vector<8xf32>
    %99 = vector.shape_cast %98 : vector<8xf32> to vector<8x1xf32>
    %100 = arith.maximumf %95, %99 : vector<8x1xf32>
    %101 = arith.subf %95, %100 : vector<8x1xf32>
    %102 = math.exp %101 : vector<8x1xf32>
    %103 = vector.broadcast %100 : vector<8x1xf32> to vector<8x8xf32>
    %104 = arith.subf %93, %103 : vector<8x8xf32>
    %105 = math.exp %104 : vector<8x8xf32>
    %106 = arith.mulf %102, %97 : vector<8x1xf32>
    %cst_58 = arith.constant dense<0.000000e+00> : vector<8xf32>
    %107 = vector.multi_reduction <add>, %105, %cst_58 [1] : vector<8x8xf32> to vector<8xf32>
    %108 = vector.shape_cast %107 : vector<8xf32> to vector<8x1xf32>
    %109 = arith.addf %106, %108 : vector<8x1xf32>
    %c2_59 = arith.constant 2 : index
    %c0_60 = arith.constant 0 : index
    %c0_61 = arith.constant 0 : index
    %110 = vector.load %arg9[%c2_59, %c0_60, %c0_61] : memref<4x8x1xf32, #tpu.memory_space<vmem>>, vector<1x8x1xf32>
    %111 = vector.shape_cast %110 : vector<1x8x1xf32> to vector<8x1xf32>
    %112 = vector.shape_cast %109 : vector<8x1xf32> to vector<1x8x1xf32>
    tpu.vector_store %arg9[%c2_59, %c0_60, %c0_61], %112 {strides = array<i32>} : memref<4x8x1xf32, #tpu.memory_space<vmem>>, vector<1x8x1xf32>,
    %c2_62 = arith.constant 2 : index
    %c0_63 = arith.constant 0 : index
    %c0_64 = arith.constant 0 : index
    %113 = vector.load %arg10[%c2_62, %c0_63, %c0_64] : memref<4x8x32xf32, #tpu.memory_space<vmem>>, vector<1x8x32xf32>
    %114 = vector.shape_cast %113 : vector<1x8x32xf32> to vector<8x32xf32>
    %115 = vector.broadcast %102 : vector<8x1xf32> to vector<8x32xf32>
    %116 = arith.mulf %115, %114 : vector<8x32xf32>
    %117 = arith.truncf %105 : vector<8x8xf32> to vector<8x8xbf16>
    %cst_65 = arith.constant dense<0.000000e+00> : vector<8x32xf32>
    %118 = tpu.matmul %117, %92, %cst_65 {dimension_numbers = #tpu.dot_dimension_numbers<[1], [0], [0], [1], [0, 0, 1, 1], [], []>} : vector<8x8xbf16>, vector<8x32xbf16>, vector<8x32xf32> -> vector<8x32xf32>
    %119 = arith.addf %116, %118 : vector<8x32xf32>
    %c2_66 = arith.constant 2 : index
    %c0_67 = arith.constant 0 : index
    %c0_68 = arith.constant 0 : index
    %120 = vector.load %arg10[%c2_66, %c0_67, %c0_68] : memref<4x8x32xf32, #tpu.memory_space<vmem>>, vector<1x8x32xf32>
    %121 = vector.shape_cast %120 : vector<1x8x32xf32> to vector<8x32xf32>
    %122 = vector.shape_cast %119 : vector<8x32xf32> to vector<1x8x32xf32>
    tpu.vector_store %arg10[%c2_66, %c0_67, %c0_68], %122 {strides = array<i32>} : memref<4x8x32xf32, #tpu.memory_space<vmem>>, vector<1x8x32xf32>,
    %c2_69 = arith.constant 2 : index
    %c0_70 = arith.constant 0 : index
    %c0_71 = arith.constant 0 : index
    %123 = vector.load %arg8[%c2_69, %c0_70, %c0_71] : memref<4x8x1xf32, #tpu.memory_space<vmem>>, vector<1x8x1xf32>
    %124 = vector.shape_cast %123 : vector<1x8x1xf32> to vector<8x1xf32>
    %125 = vector.shape_cast %100 : vector<8x1xf32> to vector<1x8x1xf32>
    tpu.vector_store %arg8[%c2_69, %c0_70, %c0_71], %125 {strides = array<i32>} : memref<4x8x1xf32, #tpu.memory_space<vmem>>, vector<1x8x1xf32>,
    %126 = vector.extract_strided_slice %4 {offsets = [0, 96], sizes = [8, 32], strides = [1, 1]} : vector<8x128xf32> to vector<8x32xf32>
    %127 = arith.truncf %126 : vector<8x32xf32> to vector<8x32xbf16>
    %128 = vector.extract_strided_slice %6 {offsets = [0, 96], sizes = [8, 32], strides = [1, 1]} : vector<8x128xf32> to vector<8x32xf32>
    %129 = arith.truncf %128 : vector<8x32xf32> to vector<8x32xbf16>
    %130 = vector.extract_strided_slice %8 {offsets = [0, 96], sizes = [8, 32], strides = [1, 1]} : vector<8x128xf32> to vector<8x32xf32>
    %131 = arith.truncf %130 : vector<8x32xf32> to vector<8x32xbf16>
    %cst_72 = arith.constant dense<0.000000e+00> : vector<8x8xf32>
    %132 = tpu.matmul %127, %129, %cst_72 {dimension_numbers = #tpu.dot_dimension_numbers<[1], [1], [0], [0], [0, 0, 1, 0], [], []>} : vector<8x32xbf16>, vector<8x32xbf16>, vector<8x8xf32> -> vector<8x8xf32>
    %c3 = arith.constant 3 : index
    %c0_73 = arith.constant 0 : index
    %c0_74 = arith.constant 0 : index
    %133 = vector.load %arg8[%c3, %c0_73, %c0_74] : memref<4x8x1xf32, #tpu.memory_space<vmem>>, vector<1x8x1xf32>
    %134 = vector.shape_cast %133 : vector<1x8x1xf32> to vector<8x1xf32>
    %c3_75 = arith.constant 3 : index
    %c0_76 = arith.constant 0 : index
    %c0_77 = arith.constant 0 : index
    %135 = vector.load %arg9[%c3_75, %c0_76, %c0_77] : memref<4x8x1xf32, #tpu.memory_space<vmem>>, vector<1x8x1xf32>
    %136 = vector.shape_cast %135 : vector<1x8x1xf32> to vector<8x1xf32>
    %cst_78 = arith.constant dense<0xFF800000> : vector<8xf32>
    %137 = vector.multi_reduction <maximumf>, %132, %cst_78 [1] : vector<8x8xf32> to vector<8xf32>
    %138 = vector.shape_cast %137 : vector<8xf32> to vector<8x1xf32>
    %139 = arith.maximumf %134, %138 : vector<8x1xf32>
    %140 = arith.subf %134, %139 : vector<8x1xf32>
    %141 = math.exp %140 : vector<8x1xf32>
    %142 = vector.broadcast %139 : vector<8x1xf32> to vector<8x8xf32>
    %143 = arith.subf %132, %142 : vector<8x8xf32>
    %144 = math.exp %143 : vector<8x8xf32>
    %145 = arith.mulf %141, %136 : vector<8x1xf32>
    %cst_79 = arith.constant dense<0.000000e+00> : vector<8xf32>
    %146 = vector.multi_reduction <add>, %144, %cst_79 [1] : vector<8x8xf32> to vector<8xf32>
    %147 = vector.shape_cast %146 : vector<8xf32> to vector<8x1xf32>
    %148 = arith.addf %145, %147 : vector<8x1xf32>
    %c3_80 = arith.constant 3 : index
    %c0_81 = arith.constant 0 : index
    %c0_82 = arith.constant 0 : index
    %149 = vector.load %arg9[%c3_80, %c0_81, %c0_82] : memref<4x8x1xf32, #tpu.memory_space<vmem>>, vector<1x8x1xf32>
    %150 = vector.shape_cast %149 : vector<1x8x1xf32> to vector<8x1xf32>
    %151 = vector.shape_cast %148 : vector<8x1xf32> to vector<1x8x1xf32>
    tpu.vector_store %arg9[%c3_80, %c0_81, %c0_82], %151 {strides = array<i32>} : memref<4x8x1xf32, #tpu.memory_space<vmem>>, vector<1x8x1xf32>,
    %c3_83 = arith.constant 3 : index
    %c0_84 = arith.constant 0 : index
    %c0_85 = arith.constant 0 : index
    %152 = vector.load %arg10[%c3_83, %c0_84, %c0_85] : memref<4x8x32xf32, #tpu.memory_space<vmem>>, vector<1x8x32xf32>
    %153 = vector.shape_cast %152 : vector<1x8x32xf32> to vector<8x32xf32>
    %154 = vector.broadcast %141 : vector<8x1xf32> to vector<8x32xf32>
    %155 = arith.mulf %154, %153 : vector<8x32xf32>
    %156 = arith.truncf %144 : vector<8x8xf32> to vector<8x8xbf16>
    %cst_86 = arith.constant dense<0.000000e+00> : vector<8x32xf32>
    %157 = tpu.matmul %156, %131, %cst_86 {dimension_numbers = #tpu.dot_dimension_numbers<[1], [0], [0], [1], [0, 0, 1, 1], [], []>} : vector<8x8xbf16>, vector<8x32xbf16>, vector<8x32xf32> -> vector<8x32xf32>
    %158 = arith.addf %155, %157 : vector<8x32xf32>
    %c3_87 = arith.constant 3 : index
    %c0_88 = arith.constant 0 : index
    %c0_89 = arith.constant 0 : index
    %159 = vector.load %arg10[%c3_87, %c0_88, %c0_89] : memref<4x8x32xf32, #tpu.memory_space<vmem>>, vector<1x8x32xf32>
    %160 = vector.shape_cast %159 : vector<1x8x32xf32> to vector<8x32xf32>
    %161 = vector.shape_cast %158 : vector<8x32xf32> to vector<1x8x32xf32>
    tpu.vector_store %arg10[%c3_87, %c0_88, %c0_89], %161 {strides = array<i32>} : memref<4x8x32xf32, #tpu.memory_space<vmem>>, vector<1x8x32xf32>,
    %c3_90 = arith.constant 3 : index
    %c0_91 = arith.constant 0 : index
    %c0_92 = arith.constant 0 : index
    %162 = vector.load %arg8[%c3_90, %c0_91, %c0_92] : memref<4x8x1xf32, #tpu.memory_space<vmem>>, vector<1x8x1xf32>
    %163 = vector.shape_cast %162 : vector<1x8x1xf32> to vector<8x1xf32>
    %164 = vector.shape_cast %139 : vector<8x1xf32> to vector<1x8x1xf32>
    tpu.vector_store %arg8[%c3_90, %c0_91, %c0_92], %164 {strides = array<i32>} : memref<4x8x1xf32, #tpu.memory_space<vmem>>, vector<1x8x1xf32>,
    %c0_i32_93 = arith.constant 0 : i32
    %165 = arith.cmpi eq, %arg3, %c0_i32_93 : i32
    %166 = arith.extui %165 : i1 to i32
    %c0_i32_94 = arith.constant 0 : i32
    %167 = arith.cmpi ne, %166, %c0_i32_94 : i32
    scf.if %167 {
      %c0_95 = arith.constant 0 : index
      %c0_96 = arith.constant 0 : index
      %c0_97 = arith.constant 0 : index
      %168 = vector.load %arg10[%c0_95, %c0_96, %c0_97] : memref<4x8x32xf32, #tpu.memory_space<vmem>>, vector<1x8x32xf32>
      %169 = vector.shape_cast %168 : vector<1x8x32xf32> to vector<8x32xf32>
      %c0_98 = arith.constant 0 : index
      %c0_99 = arith.constant 0 : index
      %c0_100 = arith.constant 0 : index
      %170 = vector.load %arg9[%c0_98, %c0_99, %c0_100] : memref<4x8x1xf32, #tpu.memory_space<vmem>>, vector<1x8x1xf32>
      %171 = vector.shape_cast %170 : vector<1x8x1xf32> to vector<8x1xf32>
      %172 = tpu.reciprocal %171 {approx = true} : vector<8x1xf32> -> vector<8x1xf32>
      %173 = vector.broadcast %172 : vector<8x1xf32> to vector<8x32xf32>
      %174 = arith.mulf %169, %173 : vector<8x32xf32>
      %c1_101 = arith.constant 1 : index
      %c0_102 = arith.constant 0 : index
      %c0_103 = arith.constant 0 : index
      %175 = vector.load %arg10[%c1_101, %c0_102, %c0_103] : memref<4x8x32xf32, #tpu.memory_space<vmem>>, vector<1x8x32xf32>
      %176 = vector.shape_cast %175 : vector<1x8x32xf32> to vector<8x32xf32>
      %c1_104 = arith.constant 1 : index
      %c0_105 = arith.constant 0 : index
      %c0_106 = arith.constant 0 : index
      %177 = vector.load %arg9[%c1_104, %c0_105, %c0_106] : memref<4x8x1xf32, #tpu.memory_space<vmem>>, vector<1x8x1xf32>
      %178 = vector.shape_cast %177 : vector<1x8x1xf32> to vector<8x1xf32>
      %179 = tpu.reciprocal %178 {approx = true} : vector<8x1xf32> -> vector<8x1xf32>
      %180 = vector.broadcast %179 : vector<8x1xf32> to vector<8x32xf32>
      %181 = arith.mulf %176, %180 : vector<8x32xf32>
      %c2_107 = arith.constant 2 : index
      %c0_108 = arith.constant 0 : index
      %c0_109 = arith.constant 0 : index
      %182 = vector.load %arg10[%c2_107, %c0_108, %c0_109] : memref<4x8x32xf32, #tpu.memory_space<vmem>>, vector<1x8x32xf32>
      %183 = vector.shape_cast %182 : vector<1x8x32xf32> to vector<8x32xf32>
      %c2_110 = arith.constant 2 : index
      %c0_111 = arith.constant 0 : index
      %c0_112 = arith.constant 0 : index
      %184 = vector.load %arg9[%c2_110, %c0_111, %c0_112] : memref<4x8x1xf32, #tpu.memory_space<vmem>>, vector<1x8x1xf32>
      %185 = vector.shape_cast %184 : vector<1x8x1xf32> to vector<8x1xf32>
      %186 = tpu.reciprocal %185 {approx = true} : vector<8x1xf32> -> vector<8x1xf32>
      %187 = vector.broadcast %186 : vector<8x1xf32> to vector<8x32xf32>
      %188 = arith.mulf %183, %187 : vector<8x32xf32>
      %c3_113 = arith.constant 3 : index
      %c0_114 = arith.constant 0 : index
      %c0_115 = arith.constant 0 : index
      %189 = vector.load %arg10[%c3_113, %c0_114, %c0_115] : memref<4x8x32xf32, #tpu.memory_space<vmem>>, vector<1x8x32xf32>
      %190 = vector.shape_cast %189 : vector<1x8x32xf32> to vector<8x32xf32>
      %c3_116 = arith.constant 3 : index
      %c0_117 = arith.constant 0 : index
      %c0_118 = arith.constant 0 : index
      %191 = vector.load %arg9[%c3_116, %c0_117, %c0_118] : memref<4x8x1xf32, #tpu.memory_space<vmem>>, vector<1x8x1xf32>
      %192 = vector.shape_cast %191 : vector<1x8x1xf32> to vector<8x1xf32>
      %193 = tpu.reciprocal %192 {approx = true} : vector<8x1xf32> -> vector<8x1xf32>
      %194 = vector.broadcast %193 : vector<8x1xf32> to vector<8x32xf32>
      %195 = arith.mulf %190, %194 : vector<8x32xf32>
      %196 = tpu.concatenate %174, %181, %188, %195 in 1 : vector<8x32xf32>, vector<8x32xf32>, vector<8x32xf32>, vector<8x32xf32> -> vector<8x128xf32>
      %c0_119 = arith.constant 0 : index
      %c0_120 = arith.constant 0 : index
      %c0_121 = arith.constant 0 : index
      %197 = vector.load %arg7[%c0_119, %c0_120, %c0_121] : memref<1x8x128xf32, #tpu.memory_space<vmem>>, vector<1x8x128xf32>
      %198 = vector.shape_cast %197 : vector<1x8x128xf32> to vector<8x128xf32>
      %199 = vector.shape_cast %196 : vector<8x128xf32> to vector<1x8x128xf32>
      tpu.vector_store %arg7[%c0_119, %c0_120, %c0_121], %199 {strides = array<i32>} : memref<1x8x128xf32, #tpu.memory_space<vmem>>, vector<1x8x128xf32>,
    } else {
    }
    return
  }
  func.func @transform_0(%arg0: i32, %arg1: i32, %arg2: i32, %arg3: i32) -> (i32, i32, i32) {
    %c0_i32 = arith.constant 0 : i32
    return %arg0, %arg2, %arg1 : i32, i32, i32
  }
  func.func @transform_1(%arg0: i32, %arg1: i32, %arg2: i32, %arg3: i32) -> (i32, i32, i32) {
    %c0_i32 = arith.constant 0 : i32
    return %arg0, %arg3, %arg1 : i32, i32, i32
  }
  func.func @transform_2(%arg0: i32, %arg1: i32, %arg2: i32, %arg3: i32) -> (i32, i32, i32) {
    %c0_i32 = arith.constant 0 : i32
    return %arg0, %arg3, %arg1 : i32, i32, i32
  }
  func.func @transform_3(%arg0: i32, %arg1: i32, %arg2: i32, %arg3: i32) -> (i32, i32, i32) {
    %c0_i32 = arith.constant 0 : i32
    return %arg0, %arg2, %arg1 : i32, i32, i32
  }
}

module attributes {stable_mosaic.version = 11 : i64} {
  func.func @_matmul_bias_kernel(%arg0: i32, %arg1: i32, %arg2: i32, %arg3: memref<16x128xf32, #tpu.memory_space<vmem>>, %arg4: memref<128x128xf32, #tpu.memory_space<vmem>>, %arg5: memref<1x128xf32, #tpu.memory_space<vmem>>, %arg6: memref<16x128xf32, #tpu.memory_space<vmem>>, %arg7: memref<16x128xf32, #tpu.memory_space<vmem>>) attributes {dimension_semantics = [#tpu.dimension_semantics<parallel>, #tpu.dimension_semantics<parallel>, #tpu.dimension_semantics<arbitrary>], iteration_bounds = array<i64: 1, 1, 1>, scalar_prefetch = 0 : i64, scratch_operands = 1 : i64, tpu.core_type = #tpu.core_type<tc>, window_params = [{transform_indices = @transform_0, window_bounds = array<i64: 16, 128>}, {transform_indices = @transform_1, window_bounds = array<i64: 128, 128>}, {transform_indices = @transform_2, window_bounds = array<i64: 1, 128>}, {transform_indices = @transform_3, window_bounds = array<i64: 16, 128>}]} {
    %c0_i32 = arith.constant 0 : i32
    %0 = arith.cmpi eq, %arg2, %c0_i32 : i32
    %1 = arith.extui %0 : i1 to i32
    %c0_i32_0 = arith.constant 0 : i32
    %2 = arith.cmpi ne, %1, %c0_i32_0 : i32
    scf.if %2 {
      %cst_10 = arith.constant 0.000000e+00 : f32
      %14 = vector.broadcast %cst_10 : f32 to vector<16x128xf32>
      %c0_11 = arith.constant 0 : index
      %c0_12 = arith.constant 0 : index
      %15 = vector.load %arg7[%c0_11, %c0_12] : memref<16x128xf32, #tpu.memory_space<vmem>>, vector<16x128xf32>
      tpu.vector_store %arg7[%c0_11, %c0_12], %14 {strides = array<i32>} : memref<16x128xf32, #tpu.memory_space<vmem>>, vector<16x128xf32>,
    } else {
    }
    %c0 = arith.constant 0 : index
    %c0_1 = arith.constant 0 : index
    %3 = vector.load %arg7[%c0, %c0_1] : memref<16x128xf32, #tpu.memory_space<vmem>>, vector<16x128xf32>
    %c0_2 = arith.constant 0 : index
    %c0_3 = arith.constant 0 : index
    %4 = vector.load %arg3[%c0_2, %c0_3] : memref<16x128xf32, #tpu.memory_space<vmem>>, vector<16x128xf32>
    %5 = arith.truncf %4 : vector<16x128xf32> to vector<16x128xbf16>
    %c0_4 = arith.constant 0 : index
    %c0_5 = arith.constant 0 : index
    %6 = vector.load %arg4[%c0_4, %c0_5] : memref<128x128xf32, #tpu.memory_space<vmem>>, vector<128x128xf32>
    %7 = arith.truncf %6 : vector<128x128xf32> to vector<128x128xbf16>
    %cst = arith.constant dense<0.000000e+00> : vector<16x128xf32>
    %8 = tpu.matmul %5, %7, %cst {dimension_numbers = #tpu.dot_dimension_numbers<[1], [0], [0], [1], [0, 0, 1, 1], [], []>} : vector<16x128xbf16>, vector<128x128xbf16>, vector<16x128xf32> -> vector<16x128xf32>
    %9 = arith.addf %3, %8 : vector<16x128xf32>
    %c0_6 = arith.constant 0 : index
    %c0_7 = arith.constant 0 : index
    %10 = vector.load %arg7[%c0_6, %c0_7] : memref<16x128xf32, #tpu.memory_space<vmem>>, vector<16x128xf32>
    tpu.vector_store %arg7[%c0_6, %c0_7], %9 {strides = array<i32>} : memref<16x128xf32, #tpu.memory_space<vmem>>, vector<16x128xf32>,
    %c0_i32_8 = arith.constant 0 : i32
    %11 = arith.cmpi eq, %arg2, %c0_i32_8 : i32
    %12 = arith.extui %11 : i1 to i32
    %c0_i32_9 = arith.constant 0 : i32
    %13 = arith.cmpi ne, %12, %c0_i32_9 : i32
    scf.if %13 {
      %c0_10 = arith.constant 0 : index
      %c0_11 = arith.constant 0 : index
      %14 = vector.load %arg7[%c0_10, %c0_11] : memref<16x128xf32, #tpu.memory_space<vmem>>, vector<16x128xf32>
      %c0_12 = arith.constant 0 : index
      %c0_13 = arith.constant 0 : index
      %15 = vector.load %arg5[%c0_12, %c0_13] : memref<1x128xf32, #tpu.memory_space<vmem>>, vector<1x128xf32>
      %16 = vector.broadcast %15 : vector<1x128xf32> to vector<16x128xf32>
      %17 = arith.addf %14, %16 : vector<16x128xf32>
      %c0_14 = arith.constant 0 : index
      %c0_15 = arith.constant 0 : index
      %18 = vector.load %arg6[%c0_14, %c0_15] : memref<16x128xf32, #tpu.memory_space<vmem>>, vector<16x128xf32>
      tpu.vector_store %arg6[%c0_14, %c0_15], %17 {strides = array<i32>} : memref<16x128xf32, #tpu.memory_space<vmem>>, vector<16x128xf32>,
    } else {
    }
    return
  }
  func.func @transform_0(%arg0: i32, %arg1: i32, %arg2: i32) -> (i32, i32) {
    %c0_i32 = arith.constant 0 : i32
    return %arg0, %arg2 : i32, i32
  }
  func.func @transform_1(%arg0: i32, %arg1: i32, %arg2: i32) -> (i32, i32) {
    %c0_i32 = arith.constant 0 : i32
    return %arg2, %arg1 : i32, i32
  }
  func.func @transform_2(%arg0: i32, %arg1: i32, %arg2: i32) -> (i32, i32) {
    %c0_i32 = arith.constant 0 : i32
    %c0_i32_0 = arith.constant 0 : i32
    return %c0_i32, %arg1 : i32, i32
  }
  func.func @transform_3(%arg0: i32, %arg1: i32, %arg2: i32) -> (i32, i32) {
    %c0_i32 = arith.constant 0 : i32
    return %arg0, %arg1 : i32, i32
  }
}

module attributes {stable_mosaic.version = 11 : i64} {
  func.func @_swiglu_matmul_kernel(%arg0: i32, %arg1: i32, %arg2: i32, %arg3: memref<16x128xf32, #tpu.memory_space<vmem>>, %arg4: memref<128x512xf32, #tpu.memory_space<vmem>>, %arg5: memref<128x512xf32, #tpu.memory_space<vmem>>, %arg6: memref<16x512xf32, #tpu.memory_space<vmem>>, %arg7: memref<16x512xf32, #tpu.memory_space<vmem>>, %arg8: memref<16x512xf32, #tpu.memory_space<vmem>>) attributes {dimension_semantics = [#tpu.dimension_semantics<parallel>, #tpu.dimension_semantics<parallel>, #tpu.dimension_semantics<arbitrary>], iteration_bounds = array<i64: 1, 1, 1>, scalar_prefetch = 0 : i64, scratch_operands = 2 : i64, tpu.core_type = #tpu.core_type<tc>, window_params = [{transform_indices = @transform_0, window_bounds = array<i64: 16, 128>}, {transform_indices = @transform_1, window_bounds = array<i64: 128, 512>}, {transform_indices = @transform_2, window_bounds = array<i64: 128, 512>}, {transform_indices = @transform_3, window_bounds = array<i64: 16, 512>}]} {
    %c0_i32 = arith.constant 0 : i32
    %0 = arith.cmpi eq, %arg2, %c0_i32 : i32
    %1 = arith.extui %0 : i1 to i32
    %c0_i32_0 = arith.constant 0 : i32
    %2 = arith.cmpi ne, %1, %c0_i32_0 : i32
    scf.if %2 {
      %cst_17 = arith.constant 0.000000e+00 : f32
      %20 = vector.broadcast %cst_17 : f32 to vector<16x512xf32>
      %c0_18 = arith.constant 0 : index
      %c0_19 = arith.constant 0 : index
      %21 = vector.load %arg7[%c0_18, %c0_19] : memref<16x512xf32, #tpu.memory_space<vmem>>, vector<16x512xf32>
      tpu.vector_store %arg7[%c0_18, %c0_19], %20 {strides = array<i32>} : memref<16x512xf32, #tpu.memory_space<vmem>>, vector<16x512xf32>,
      %cst_20 = arith.constant 0.000000e+00 : f32
      %22 = vector.broadcast %cst_20 : f32 to vector<16x512xf32>
      %c0_21 = arith.constant 0 : index
      %c0_22 = arith.constant 0 : index
      %23 = vector.load %arg8[%c0_21, %c0_22] : memref<16x512xf32, #tpu.memory_space<vmem>>, vector<16x512xf32>
      tpu.vector_store %arg8[%c0_21, %c0_22], %22 {strides = array<i32>} : memref<16x512xf32, #tpu.memory_space<vmem>>, vector<16x512xf32>,
    } else {
    }
    %c0 = arith.constant 0 : index
    %c0_1 = arith.constant 0 : index
    %3 = vector.load %arg3[%c0, %c0_1] : memref<16x128xf32, #tpu.memory_space<vmem>>, vector<16x128xf32>
    %4 = arith.truncf %3 : vector<16x128xf32> to vector<16x128xbf16>
    %c0_2 = arith.constant 0 : index
    %c0_3 = arith.constant 0 : index
    %5 = vector.load %arg7[%c0_2, %c0_3] : memref<16x512xf32, #tpu.memory_space<vmem>>, vector<16x512xf32>
    %c0_4 = arith.constant 0 : index
    %c0_5 = arith.constant 0 : index
    %6 = vector.load %arg4[%c0_4, %c0_5] : memref<128x512xf32, #tpu.memory_space<vmem>>, vector<128x512xf32>
    %7 = arith.truncf %6 : vector<128x512xf32> to vector<128x512xbf16>
    %cst = arith.constant dense<0.000000e+00> : vector<16x512xf32>
    %8 = tpu.matmul %4, %7, %cst {dimension_numbers = #tpu.dot_dimension_numbers<[1], [0], [0], [1], [0, 0, 1, 1], [], []>} : vector<16x128xbf16>, vector<128x512xbf16>, vector<16x512xf32> -> vector<16x512xf32>
    %9 = arith.addf %5, %8 : vector<16x512xf32>
    %c0_6 = arith.constant 0 : index
    %c0_7 = arith.constant 0 : index
    %10 = vector.load %arg7[%c0_6, %c0_7] : memref<16x512xf32, #tpu.memory_space<vmem>>, vector<16x512xf32>
    tpu.vector_store %arg7[%c0_6, %c0_7], %9 {strides = array<i32>} : memref<16x512xf32, #tpu.memory_space<vmem>>, vector<16x512xf32>,
    %c0_8 = arith.constant 0 : index
    %c0_9 = arith.constant 0 : index
    %11 = vector.load %arg8[%c0_8, %c0_9] : memref<16x512xf32, #tpu.memory_space<vmem>>, vector<16x512xf32>
    %c0_10 = arith.constant 0 : index
    %c0_11 = arith.constant 0 : index
    %12 = vector.load %arg5[%c0_10, %c0_11] : memref<128x512xf32, #tpu.memory_space<vmem>>, vector<128x512xf32>
    %13 = arith.truncf %12 : vector<128x512xf32> to vector<128x512xbf16>
    %cst_12 = arith.constant dense<0.000000e+00> : vector<16x512xf32>
    %14 = tpu.matmul %4, %13, %cst_12 {dimension_numbers = #tpu.dot_dimension_numbers<[1], [0], [0], [1], [0, 0, 1, 1], [], []>} : vector<16x128xbf16>, vector<128x512xbf16>, vector<16x512xf32> -> vector<16x512xf32>
    %15 = arith.addf %11, %14 : vector<16x512xf32>
    %c0_13 = arith.constant 0 : index
    %c0_14 = arith.constant 0 : index
    %16 = vector.load %arg8[%c0_13, %c0_14] : memref<16x512xf32, #tpu.memory_space<vmem>>, vector<16x512xf32>
    tpu.vector_store %arg8[%c0_13, %c0_14], %15 {strides = array<i32>} : memref<16x512xf32, #tpu.memory_space<vmem>>, vector<16x512xf32>,
    %c0_i32_15 = arith.constant 0 : i32
    %17 = arith.cmpi eq, %arg2, %c0_i32_15 : i32
    %18 = arith.extui %17 : i1 to i32
    %c0_i32_16 = arith.constant 0 : i32
    %19 = arith.cmpi ne, %18, %c0_i32_16 : i32
    scf.if %19 {
      %c0_17 = arith.constant 0 : index
      %c0_18 = arith.constant 0 : index
      %20 = vector.load %arg7[%c0_17, %c0_18] : memref<16x512xf32, #tpu.memory_space<vmem>>, vector<16x512xf32>
      %c0_19 = arith.constant 0 : index
      %c0_20 = arith.constant 0 : index
      %21 = vector.load %arg8[%c0_19, %c0_20] : memref<16x512xf32, #tpu.memory_space<vmem>>, vector<16x512xf32>
      %cst_21 = arith.constant 0.000000e+00 : f32
      %22 = vector.broadcast %cst_21 : f32 to vector<16x512xf32>
      %23 = arith.subf %22, %20 : vector<16x512xf32>
      %24 = math.exp %23 : vector<16x512xf32>
      %cst_22 = arith.constant 1.000000e+00 : f32
      %25 = vector.broadcast %cst_22 : f32 to vector<16x512xf32>
      %26 = arith.addf %25, %24 : vector<16x512xf32>
      %27 = tpu.reciprocal %26 {approx = true} : vector<16x512xf32> -> vector<16x512xf32>
      %28 = arith.mulf %20, %27 : vector<16x512xf32>
      %29 = arith.mulf %28, %21 : vector<16x512xf32>
      %c0_23 = arith.constant 0 : index
      %c0_24 = arith.constant 0 : index
      %30 = vector.load %arg6[%c0_23, %c0_24] : memref<16x512xf32, #tpu.memory_space<vmem>>, vector<16x512xf32>
      tpu.vector_store %arg6[%c0_23, %c0_24], %29 {strides = array<i32>} : memref<16x512xf32, #tpu.memory_space<vmem>>, vector<16x512xf32>,
    } else {
    }
    return
  }
  func.func @transform_0(%arg0: i32, %arg1: i32, %arg2: i32) -> (i32, i32) {
    %c0_i32 = arith.constant 0 : i32
    return %arg0, %arg2 : i32, i32
  }
  func.func @transform_1(%arg0: i32, %arg1: i32, %arg2: i32) -> (i32, i32) {
    %c0_i32 = arith.constant 0 : i32
    return %arg2, %arg1 : i32, i32
  }
  func.func @transform_2(%arg0: i32, %arg1: i32, %arg2: i32) -> (i32, i32) {
    %c0_i32 = arith.constant 0 : i32
    return %arg2, %arg1 : i32, i32
  }
  func.func @transform_3(%arg0: i32, %arg1: i32, %arg2: i32) -> (i32, i32) {
    %c0_i32 = arith.constant 0 : i32
    return %arg0, %arg1 : i32, i32
  }
}

module attributes {stable_mosaic.version = 11 : i64} {
  func.func @_matmul_res_rmsnorm_kernel(%arg0: i32, %arg1: i32, %arg2: memref<16x512xf32, #tpu.memory_space<vmem>>, %arg3: memref<512x128xf32, #tpu.memory_space<vmem>>, %arg4: memref<1x128xf32, #tpu.memory_space<vmem>>, %arg5: memref<16x128xf32, #tpu.memory_space<vmem>>, %arg6: memref<1x128xf32, #tpu.memory_space<vmem>>, %arg7: memref<16x128xf32, #tpu.memory_space<vmem>>, %arg8: memref<16x128xf32, #tpu.memory_space<vmem>>) attributes {dimension_semantics = [#tpu.dimension_semantics<parallel>, #tpu.dimension_semantics<arbitrary>], iteration_bounds = array<i64: 1, 1>, scalar_prefetch = 0 : i64, scratch_operands = 1 : i64, tpu.core_type = #tpu.core_type<tc>, window_params = [{transform_indices = @transform_0, window_bounds = array<i64: 16, 512>}, {transform_indices = @transform_1, window_bounds = array<i64: 512, 128>}, {pipeline_mode = #tpu.pipeline_mode<synchronous>, transform_indices = @transform_2, window_bounds = array<i64: 1, 128>}, {transform_indices = @transform_3, window_bounds = array<i64: 16, 128>}, {pipeline_mode = #tpu.pipeline_mode<synchronous>, transform_indices = @transform_4, window_bounds = array<i64: 1, 128>}, {transform_indices = @transform_5, window_bounds = array<i64: 16, 128>}]} {
    %c0_i32 = arith.constant 0 : i32
    %0 = arith.cmpi eq, %arg1, %c0_i32 : i32
    %1 = arith.extui %0 : i1 to i32
    %c0_i32_0 = arith.constant 0 : i32
    %2 = arith.cmpi ne, %1, %c0_i32_0 : i32
    scf.if %2 {
      %cst_10 = arith.constant 0.000000e+00 : f32
      %14 = vector.broadcast %cst_10 : f32 to vector<16x128xf32>
      %c0_11 = arith.constant 0 : index
      %c0_12 = arith.constant 0 : index
      %15 = vector.load %arg8[%c0_11, %c0_12] : memref<16x128xf32, #tpu.memory_space<vmem>>, vector<16x128xf32>
      tpu.vector_store %arg8[%c0_11, %c0_12], %14 {strides = array<i32>} : memref<16x128xf32, #tpu.memory_space<vmem>>, vector<16x128xf32>,
    } else {
    }
    %c0 = arith.constant 0 : index
    %c0_1 = arith.constant 0 : index
    %3 = vector.load %arg8[%c0, %c0_1] : memref<16x128xf32, #tpu.memory_space<vmem>>, vector<16x128xf32>
    %c0_2 = arith.constant 0 : index
    %c0_3 = arith.constant 0 : index
    %4 = vector.load %arg2[%c0_2, %c0_3] : memref<16x512xf32, #tpu.memory_space<vmem>>, vector<16x512xf32>
    %5 = arith.truncf %4 : vector<16x512xf32> to vector<16x512xbf16>
    %c0_4 = arith.constant 0 : index
    %c0_5 = arith.constant 0 : index
    %6 = vector.load %arg3[%c0_4, %c0_5] : memref<512x128xf32, #tpu.memory_space<vmem>>, vector<512x128xf32>
    %7 = arith.truncf %6 : vector<512x128xf32> to vector<512x128xbf16>
    %cst = arith.constant dense<0.000000e+00> : vector<16x128xf32>
    %8 = tpu.matmul %5, %7, %cst {dimension_numbers = #tpu.dot_dimension_numbers<[1], [0], [0], [1], [0, 0, 1, 1], [], []>} : vector<16x512xbf16>, vector<512x128xbf16>, vector<16x128xf32> -> vector<16x128xf32>
    %9 = arith.addf %3, %8 : vector<16x128xf32>
    %c0_6 = arith.constant 0 : index
    %c0_7 = arith.constant 0 : index
    %10 = vector.load %arg8[%c0_6, %c0_7] : memref<16x128xf32, #tpu.memory_space<vmem>>, vector<16x128xf32>
    tpu.vector_store %arg8[%c0_6, %c0_7], %9 {strides = array<i32>} : memref<16x128xf32, #tpu.memory_space<vmem>>, vector<16x128xf32>,
    %c0_i32_8 = arith.constant 0 : i32
    %11 = arith.cmpi eq, %arg1, %c0_i32_8 : i32
    %12 = arith.extui %11 : i1 to i32
    %c0_i32_9 = arith.constant 0 : i32
    %13 = arith.cmpi ne, %12, %c0_i32_9 : i32
    scf.if %13 {
      %c0_10 = arith.constant 0 : index
      %c0_11 = arith.constant 0 : index
      %14 = vector.load %arg8[%c0_10, %c0_11] : memref<16x128xf32, #tpu.memory_space<vmem>>, vector<16x128xf32>
      %c0_12 = arith.constant 0 : index
      %c0_13 = arith.constant 0 : index
      %15 = vector.load %arg4[%c0_12, %c0_13] : memref<1x128xf32, #tpu.memory_space<vmem>>, vector<1x128xf32>
      %16 = vector.broadcast %15 : vector<1x128xf32> to vector<16x128xf32>
      %17 = arith.addf %14, %16 : vector<16x128xf32>
      %c0_14 = arith.constant 0 : index
      %c0_15 = arith.constant 0 : index
      %18 = vector.load %arg5[%c0_14, %c0_15] : memref<16x128xf32, #tpu.memory_space<vmem>>, vector<16x128xf32>
      %19 = arith.addf %17, %18 : vector<16x128xf32>
      %20 = arith.mulf %19, %19 : vector<16x128xf32>
      %cst_16 = arith.constant dense<0.000000e+00> : vector<16xf32>
      %21 = vector.multi_reduction <add>, %20, %cst_16 [1] : vector<16x128xf32> to vector<16xf32>
      %22 = vector.shape_cast %21 : vector<16xf32> to vector<16x1xf32>
      %cst_17 = arith.constant 7.812500e-03 : f32
      %23 = vector.broadcast %cst_17 : f32 to vector<16x1xf32>
      %24 = arith.mulf %22, %23 : vector<16x1xf32>
      %cst_18 = arith.constant 9.99999974E-6 : f32
      %25 = vector.broadcast %cst_18 : f32 to vector<16x1xf32>
      %26 = arith.addf %24, %25 : vector<16x1xf32>
      %27 = math.rsqrt %26 : vector<16x1xf32>
      %28 = vector.broadcast %27 : vector<16x1xf32> to vector<16x128xf32>
      %29 = arith.mulf %19, %28 : vector<16x128xf32>
      %c0_19 = arith.constant 0 : index
      %c0_20 = arith.constant 0 : index
      %30 = vector.load %arg6[%c0_19, %c0_20] : memref<1x128xf32, #tpu.memory_space<vmem>>, vector<1x128xf32>
      %31 = vector.broadcast %30 : vector<1x128xf32> to vector<16x128xf32>
      %32 = arith.mulf %29, %31 : vector<16x128xf32>
      %c0_21 = arith.constant 0 : index
      %c0_22 = arith.constant 0 : index
      %33 = vector.load %arg7[%c0_21, %c0_22] : memref<16x128xf32, #tpu.memory_space<vmem>>, vector<16x128xf32>
      tpu.vector_store %arg7[%c0_21, %c0_22], %32 {strides = array<i32>} : memref<16x128xf32, #tpu.memory_space<vmem>>, vector<16x128xf32>,
    } else {
    }
    return
  }
  func.func @transform_0(%arg0: i32, %arg1: i32) -> (i32, i32) {
    %c0_i32 = arith.constant 0 : i32
    return %arg0, %arg1 : i32, i32
  }
  func.func @transform_1(%arg0: i32, %arg1: i32) -> (i32, i32) {
    %c0_i32 = arith.constant 0 : i32
    %c0_i32_0 = arith.constant 0 : i32
    return %arg1, %c0_i32 : i32, i32
  }
  func.func @transform_2(%arg0: i32, %arg1: i32) -> (i32, i32) {
    %c0_i32 = arith.constant 0 : i32
    %c0_i32_0 = arith.constant 0 : i32
    %c0_i32_1 = arith.constant 0 : i32
    return %c0_i32, %c0_i32_0 : i32, i32
  }
  func.func @transform_3(%arg0: i32, %arg1: i32) -> (i32, i32) {
    %c0_i32 = arith.constant 0 : i32
    %c0_i32_0 = arith.constant 0 : i32
    return %arg0, %c0_i32 : i32, i32
  }
  func.func @transform_4(%arg0: i32, %arg1: i32) -> (i32, i32) {
    %c0_i32 = arith.constant 0 : i32
    %c0_i32_0 = arith.constant 0 : i32
    %c0_i32_1 = arith.constant 0 : i32
    return %c0_i32, %c0_i32_0 : i32, i32
  }
  func.func @transform_5(%arg0: i32, %arg1: i32) -> (i32, i32) {
    %c0_i32 = arith.constant 0 : i32
    %c0_i32_0 = arith.constant 0 : i32
    return %arg0, %c0_i32 : i32, i32
  }
}

module attributes {stable_mosaic.version = 11 : i64} {
  func.func @_matmul_bias_kernel(%arg0: i32, %arg1: i32, %arg2: i32, %arg3: memref<16x128xf32, #tpu.memory_space<vmem>>, %arg4: memref<128x256xf32, #tpu.memory_space<vmem>>, %arg5: memref<1x256xf32, #tpu.memory_space<vmem>>, %arg6: memref<16x256xf32, #tpu.memory_space<vmem>>, %arg7: memref<16x256xf32, #tpu.memory_space<vmem>>) attributes {dimension_semantics = [#tpu.dimension_semantics<parallel>, #tpu.dimension_semantics<parallel>, #tpu.dimension_semantics<arbitrary>], iteration_bounds = array<i64: 1, 1, 1>, scalar_prefetch = 0 : i64, scratch_operands = 1 : i64, tpu.core_type = #tpu.core_type<tc>, window_params = [{transform_indices = @transform_0, window_bounds = array<i64: 16, 128>}, {transform_indices = @transform_1, window_bounds = array<i64: 128, 256>}, {transform_indices = @transform_2, window_bounds = array<i64: 1, 256>}, {transform_indices = @transform_3, window_bounds = array<i64: 16, 256>}]} {
    %c0_i32 = arith.constant 0 : i32
    %0 = arith.cmpi eq, %arg2, %c0_i32 : i32
    %1 = arith.extui %0 : i1 to i32
    %c0_i32_0 = arith.constant 0 : i32
    %2 = arith.cmpi ne, %1, %c0_i32_0 : i32
    scf.if %2 {
      %cst_10 = arith.constant 0.000000e+00 : f32
      %14 = vector.broadcast %cst_10 : f32 to vector<16x256xf32>
      %c0_11 = arith.constant 0 : index
      %c0_12 = arith.constant 0 : index
      %15 = vector.load %arg7[%c0_11, %c0_12] : memref<16x256xf32, #tpu.memory_space<vmem>>, vector<16x256xf32>
      tpu.vector_store %arg7[%c0_11, %c0_12], %14 {strides = array<i32>} : memref<16x256xf32, #tpu.memory_space<vmem>>, vector<16x256xf32>,
    } else {
    }
    %c0 = arith.constant 0 : index
    %c0_1 = arith.constant 0 : index
    %3 = vector.load %arg7[%c0, %c0_1] : memref<16x256xf32, #tpu.memory_space<vmem>>, vector<16x256xf32>
    %c0_2 = arith.constant 0 : index
    %c0_3 = arith.constant 0 : index
    %4 = vector.load %arg3[%c0_2, %c0_3] : memref<16x128xf32, #tpu.memory_space<vmem>>, vector<16x128xf32>
    %5 = arith.truncf %4 : vector<16x128xf32> to vector<16x128xbf16>
    %c0_4 = arith.constant 0 : index
    %c0_5 = arith.constant 0 : index
    %6 = vector.load %arg4[%c0_4, %c0_5] : memref<128x256xf32, #tpu.memory_space<vmem>>, vector<128x256xf32>
    %7 = arith.truncf %6 : vector<128x256xf32> to vector<128x256xbf16>
    %cst = arith.constant dense<0.000000e+00> : vector<16x256xf32>
    %8 = tpu.matmul %5, %7, %cst {dimension_numbers = #tpu.dot_dimension_numbers<[1], [0], [0], [1], [0, 0, 1, 1], [], []>} : vector<16x128xbf16>, vector<128x256xbf16>, vector<16x256xf32> -> vector<16x256xf32>
    %9 = arith.addf %3, %8 : vector<16x256xf32>
    %c0_6 = arith.constant 0 : index
    %c0_7 = arith.constant 0 : index
    %10 = vector.load %arg7[%c0_6, %c0_7] : memref<16x256xf32, #tpu.memory_space<vmem>>, vector<16x256xf32>
    tpu.vector_store %arg7[%c0_6, %c0_7], %9 {strides = array<i32>} : memref<16x256xf32, #tpu.memory_space<vmem>>, vector<16x256xf32>,
    %c0_i32_8 = arith.constant 0 : i32
    %11 = arith.cmpi eq, %arg2, %c0_i32_8 : i32
    %12 = arith.extui %11 : i1 to i32
    %c0_i32_9 = arith.constant 0 : i32
    %13 = arith.cmpi ne, %12, %c0_i32_9 : i32
    scf.if %13 {
      %c0_10 = arith.constant 0 : index
      %c0_11 = arith.constant 0 : index
      %14 = vector.load %arg7[%c0_10, %c0_11] : memref<16x256xf32, #tpu.memory_space<vmem>>, vector<16x256xf32>
      %c0_12 = arith.constant 0 : index
      %c0_13 = arith.constant 0 : index
      %15 = vector.load %arg5[%c0_12, %c0_13] : memref<1x256xf32, #tpu.memory_space<vmem>>, vector<1x256xf32>
      %16 = vector.broadcast %15 : vector<1x256xf32> to vector<16x256xf32>
      %17 = arith.addf %14, %16 : vector<16x256xf32>
      %c0_14 = arith.constant 0 : index
      %c0_15 = arith.constant 0 : index
      %18 = vector.load %arg6[%c0_14, %c0_15] : memref<16x256xf32, #tpu.memory_space<vmem>>, vector<16x256xf32>
      tpu.vector_store %arg6[%c0_14, %c0_15], %17 {strides = array<i32>} : memref<16x256xf32, #tpu.memory_space<vmem>>, vector<16x256xf32>,
    } else {
    }
    return
  }
  func.func @transform_0(%arg0: i32, %arg1: i32, %arg2: i32) -> (i32, i32) {
    %c0_i32 = arith.constant 0 : i32
    return %arg0, %arg2 : i32, i32
  }
  func.func @transform_1(%arg0: i32, %arg1: i32, %arg2: i32) -> (i32, i32) {
    %c0_i32 = arith.constant 0 : i32
    return %arg2, %arg1 : i32, i32
  }
  func.func @transform_2(%arg0: i32, %arg1: i32, %arg2: i32) -> (i32, i32) {
    %c0_i32 = arith.constant 0 : i32
    %c0_i32_0 = arith.constant 0 : i32
    return %c0_i32, %arg1 : i32, i32
  }
  func.func @transform_3(%arg0: i32, %arg1: i32, %arg2: i32) -> (i32, i32) {
    %c0_i32 = arith.constant 0 : i32
    return %arg0, %arg1 : i32, i32
  }
}

module attributes {stable_mosaic.version = 11 : i64} {
  func.func @_softmax_kernel(%arg0: i32, %arg1: memref<8x256xf32, #tpu.memory_space<vmem>>, %arg2: memref<8x256xf32, #tpu.memory_space<vmem>>) attributes {dimension_semantics = [#tpu.dimension_semantics<parallel>], iteration_bounds = array<i64: 2>, scalar_prefetch = 0 : i64, scratch_operands = 0 : i64, tpu.core_type = #tpu.core_type<tc>, window_params = [{transform_indices = @transform_0, window_bounds = array<i64: 8, 256>}, {transform_indices = @transform_1, window_bounds = array<i64: 8, 256>}]} {
    %c0 = arith.constant 0 : index
    %c0_0 = arith.constant 0 : index
    %0 = vector.load %arg1[%c0, %c0_0] : memref<8x256xf32, #tpu.memory_space<vmem>>, vector<8x256xf32>
    %cst = arith.constant dense<0xFF800000> : vector<8xf32>
    %1 = vector.multi_reduction <maximumf>, %0, %cst [1] : vector<8x256xf32> to vector<8xf32>
    %2 = vector.shape_cast %1 : vector<8xf32> to vector<8x1xf32>
    %3 = vector.broadcast %2 : vector<8x1xf32> to vector<8x256xf32>
    %4 = arith.subf %0, %3 : vector<8x256xf32>
    %5 = math.exp %4 : vector<8x256xf32>
    %cst_1 = arith.constant dense<0.000000e+00> : vector<8xf32>
    %6 = vector.multi_reduction <add>, %5, %cst_1 [1] : vector<8x256xf32> to vector<8xf32>
    %7 = vector.shape_cast %6 : vector<8xf32> to vector<8x1xf32>
    %8 = tpu.reciprocal %7 {approx = true} : vector<8x1xf32> -> vector<8x1xf32>
    %9 = vector.broadcast %8 : vector<8x1xf32> to vector<8x256xf32>
    %10 = arith.mulf %5, %9 : vector<8x256xf32>
    %c0_2 = arith.constant 0 : index
    %c0_3 = arith.constant 0 : index
    %11 = vector.load %arg2[%c0_2, %c0_3] : memref<8x256xf32, #tpu.memory_space<vmem>>, vector<8x256xf32>
    tpu.vector_store %arg2[%c0_2, %c0_3], %10 {strides = array<i32>} : memref<8x256xf32, #tpu.memory_space<vmem>>, vector<8x256xf32>,
    return
  }
  func.func @transform_0(%arg0: i32) -> (i32, i32) {
    %c0_i32 = arith.constant 0 : i32
    %c0_i32_0 = arith.constant 0 : i32
    return %arg0, %c0_i32 : i32, i32
  }
  func.func @transform_1(%arg0: i32) -> (i32, i32) {
    %c0_i32 = arith.constant 0 : i32
    %c0_i32_0 = arith.constant 0 : i32
    return %arg0, %c0_i32 : i32, i32
  }
}

</mosaic_0001>

<llo_original>
// kernel: transformer_forward.32
$region0: #{transformer_forward.32}
  #allocation0 [shape = 'u32[]', space=smem, size = 0x4, offset = 0x4, fixed_abs, tag = 'smem constant byte address 0x4 - core index']
  #allocation1 [shape = 'u32[144,128]{1,0:T(1,128)}', space=vmem, size = 0x12000, scoped, tag = 'internal scratch']
  #allocation2 [shape = 'f32[16,128]{1,0:T(8,128)}', space=vmem, size = 0x2000, scoped, tag = 'scratch operand']
  %s0 = inlined_call_operand.vmem [shape: f32[16,128], index: 0, kind: input, shape index: {}]
  %s1 = inlined_call_operand.vmem [shape: f32[128,128], index: 1, kind: input, shape index: {}]
  %s2 = inlined_call_operand.vmem [shape: f32[1,128], index: 2, kind: input, shape index: {}]
  %s3 = inlined_call_operand.vmem [shape: f32[16,128], index: 3, kind: input, shape index: {}]
  %s4 = inlined_call_operand.vmem [shape: f32[1,128], index: 4, kind: input, shape index: {}]
  %s5 = inlined_call_operand.vmem [shape: f32[16,128], index: 5, kind: output, shape index: {}]
  %s6 = sld [smem:[#allocation0]]
  $region38: #{transformer_forward.32} parent=0
    _
  %s8 = ssub.s32 1, %s6
  %s9 = scalar_select 0, %s8, %s6
  // Predicated region
  $region2: #{transformer_forward.32} parent=0 // pred_check
    _
  $region3: #{transformer_forward.32} parent=0 // pred_check_branch
    %11 = sbr.rel (0) target = $region5
  $region4: #{transformer_forward.32} parent=0 // pred_region
    _
  $region5: #{transformer_forward.32} parent=0 // pred_fallthru
    _
  // Predicated region
  $region6: #{transformer_forward.32} parent=0 // pred_check
    _
  $region7: #{transformer_forward.32} parent=0 // pred_check_branch
    %13 = sbr.rel (0) target = $region9
  $region8: #{transformer_forward.32} parent=0 // pred_region
    _
  $region9: #{transformer_forward.32} parent=0 // pred_fallthru
    _
  // Predicated region
  $region10: #{transformer_forward.32} parent=0 // pred_check
    _
  $region11: #{transformer_forward.32} parent=0 // pred_check_branch
    %15 = sbr.rel (0) target = $region13
  $region12: #{transformer_forward.32} parent=0 // pred_region
    _
  $region13: #{transformer_forward.32} parent=0 // pred_fallthru
    _
  // Predicated region
  $region14: #{transformer_forward.32} parent=0 // pred_check
    _
  $region15: #{transformer_forward.32} parent=0 // pred_check_branch
    %17 = sbr.rel (0) target = $region17
  $region16: #{transformer_forward.32} parent=0 // pred_region
    _
  $region17: #{transformer_forward.32} parent=0 // pred_fallthru
    _
  // Predicated region
  $region18: #{transformer_forward.32} parent=0 // pred_check
    _
  $region19: #{transformer_forward.32} parent=0 // pred_check_branch
    %19 = sbr.rel (0) target = $region21
  $region20: #{transformer_forward.32} parent=0 // pred_region
    _
  $region21: #{transformer_forward.32} parent=0 // pred_fallthru
    _
  %p21 = scmp.eq.s32.totalorder 0, 0
  // Predicated region
  $region22: #{transformer_forward.32} parent=0 // pred_check
    %p22 = pneg %p21
  $region23: #{transformer_forward.32} parent=0 // pred_check_branch
    %24 = sbr.rel (%p22) target = $region25
  $region24: #{transformer_forward.32} parent=0 // pred_region
    %25 = vst [vmem:[#allocation2] sm:$0xff] 0.0
    %26 = vst [vmem:[#allocation2 + $0x8] sm:$0xff] 0.0
  $region25: #{transformer_forward.32} parent=0 // pred_fallthru
    _
  %v27 = vld [vmem:[#allocation2] sm:$0xff]
  %v28 = vld [vmem:[#allocation2 + $0x8] sm:$0xff]
  %v29 = vld [vmem:[%s0] sm:$0xff]
  %v30 = vld [vmem:[%s0 + $0x8] sm:$0xff]
  %v31 = vpack.c.bf16 %v30, %v29
  %v32 = vld [vmem:[%s1] sm:$0xff]
  %v33 = vld [vmem:[%s1 + $0x8] sm:$0xff]
  %v34 = vld [vmem:[%s1 + $0x10] sm:$0xff]
  %v35 = vld [vmem:[%s1 + $0x18] sm:$0xff]
  %v36 = vld [vmem:[%s1 + $0x20] sm:$0xff]
  %v37 = vld [vmem:[%s1 + $0x28] sm:$0xff]
  %v38 = vld [vmem:[%s1 + $0x30] sm:$0xff]
  %v39 = vld [vmem:[%s1 + $0x38] sm:$0xff]
  %v40 = vld [vmem:[%s1 + $0x40] sm:$0xff]
  %v41 = vld [vmem:[%s1 + $0x48] sm:$0xff]
  %v42 = vld [vmem:[%s1 + $0x50] sm:$0xff]
  %v43 = vld [vmem:[%s1 + $0x58] sm:$0xff]
  %v44 = vld [vmem:[%s1 + $0x60] sm:$0xff]
  %v45 = vld [vmem:[%s1 + $0x68] sm:$0xff]
  %v46 = vld [vmem:[%s1 + $0x70] sm:$0xff]
  %v47 = vld [vmem:[%s1 + $0x78] sm:$0xff]
  %v48 = vpack.c.bf16 %v33, %v32
  %v49 = vpack.c.bf16 %v35, %v34
  %v50 = vpack.c.bf16 %v37, %v36
  %v51 = vpack.c.bf16 %v39, %v38
  %v52 = vpack.c.bf16 %v41, %v40
  %v53 = vpack.c.bf16 %v43, %v42
  %v54 = vpack.c.bf16 %v45, %v44
  %v55 = vpack.c.bf16 %v47, %v46
  %56 = vmatprep.subr.bf16.mxu0 0
  %57 = vmatpush1.bf16.msra.mxu0 %v48
  %58 = vmatprep.subr.bf16.mxu0 0
  %59 = vmatpush1.bf16.msra.mxu0 %v49
  %60 = vmatprep.subr.bf16.mxu0 0
  %61 = vmatpush1.bf16.msra.mxu0 %v50
  %62 = vmatprep.subr.bf16.mxu0 0
  %63 = vmatpush1.bf16.msra.mxu0 %v51
  %64 = vmatprep.subr.bf16.mxu0 0
  %65 = vmatpush1.bf16.msra.mxu0 %v52
  %66 = vmatprep.subr.bf16.mxu0 0
  %67 = vmatpush1.bf16.msra.mxu0 %v53
  %68 = vmatprep.subr.bf16.mxu0 0
  %69 = vmatpush1.bf16.msra.mxu0 %v54
  %70 = vmatprep.subr.bf16.mxu0 0
  %71 = vmatpush1.bf16.msra.mxu0 %v55
  %72 = vmatprep.subr.bf16.mxu0 0
  %73 = vmatpush1.bf16.msra.mxu0 0
  %74 = vmatprep.subr.bf16.mxu0 0
  %75 = vmatpush1.bf16.msra.mxu0 0
  %76 = vmatprep.subr.bf16.mxu0 0
  %77 = vmatpush1.bf16.msra.mxu0 0
  %78 = vmatprep.subr.bf16.mxu0 0
  %79 = vmatpush1.bf16.msra.mxu0 0
  %80 = vmatprep.subr.bf16.mxu0 0
  %81 = vmatpush1.bf16.msra.mxu0 0
  %82 = vmatprep.subr.bf16.mxu0 0
  %83 = vmatpush1.bf16.msra.mxu0 0
  %84 = vmatprep.subr.bf16.mxu0 0
  %85 = vmatpush1.bf16.msra.mxu0 0
  %86 = vmatprep.subr.bf16.mxu0 0
  %87 = vmatpush1.bf16.msra.mxu0 0
  %88 = vmatprep.mubr.bf16.mxu0 0
  %89 = vmatmul.mubr.bf16.gmra.mrb[0].mxu0 %v31
  %v90 = vpop.f32.mrb[0].mxu0
  %v91 = vadd.f32 0.0, %v90
  %v92 = vpop.f32.mrb[0].mxu0
  %v93 = vpop.f32.mrb[0].mxu0
  %v94 = vadd.f32 0.0, %v93
  %v95 = vpop.f32.mrb[0].mxu0
  %96 = vdwg.mxu0
  %v97 = vadd.f32 %v27, %v91
  %v98 = vadd.f32 %v28, %v94
  %99 = vst [vmem:[#allocation2] sm:$0xff] %v97
  %100 = vst [vmem:[#allocation2 + $0x8] sm:$0xff] %v98
  // Predicated region
  $region26: #{transformer_forward.32} parent=0 // pred_check
    %p101 = pneg %p21
  $region27: #{transformer_forward.32} parent=0 // pred_check_branch
    %103 = sbr.rel (%p101) target = $region29
  $region28: #{transformer_forward.32} parent=0 // pred_region
    %v104 = vld [vmem:[#allocation2] sm:$0xff]
    %v105 = vld [vmem:[#allocation2 + $0x8] sm:$0xff]
    %v106 = vld [vmem:[%s2] sm:$0x1]
    %v108 = vlaneseq
    %v109 = vshrl.u32 %v108, 7
    %v110 = vsub.s32 0, %v109
    %v111 = vrot.slane %v106, %v110
    %v113 = vadd.f32 %v104, %v111
    %v114 = vadd.f32 %v105, %v111
    %v115 = vld [vmem:[%s3] sm:$0xff]
    %v116 = vld [vmem:[%s3 + $0x8] sm:$0xff]
    %v117 = vadd.f32 %v113, %v115
    %v118 = vadd.f32 %v114, %v116
    %v119 = vmul.f32 %v117, %v117
    %v120 = vmul.f32 %v118, %v118
    %121 = vadd.xlane.f32.xlu0 %v119
    %v122 = vpop.xlane.xlu0 %121
    %123 = vadd.xlane.f32.xlu0 %v120
    %v124 = vpop.xlane.xlu0 %123
    %v125 = vmul.f32 %v122, 0.0078125
    %v126 = vmul.f32 %v124, 0.0078125
    %v127 = vadd.f32 %v125, 1e-05
    %v128 = vadd.f32 %v126, 1e-05
    %v129 = vrsqrt.pop %v127
    %v130 = vrsqrt.pop %v128
    %v131 = vmul.f32 %v117, %v129
    %v132 = vmul.f32 %v118, %v130
    %v133 = vld [vmem:[%s4] sm:$0x1]
    %v135 = vlaneseq
    %v136 = vshrl.u32 %v135, 7
    %v137 = vsub.s32 0, %v136
    %v138 = vrot.slane %v133, %v137
    %v140 = vmul.f32 %v131, %v138
    %v141 = vmul.f32 %v132, %v138
    %142 = vst [vmem:[%s5] sm:$0xff] %v140
    %143 = vst [vmem:[%s5 + $0x8] sm:$0xff] %v141
  $region29: #{transformer_forward.32} parent=0 // pred_fallthru
    _
  // Predicated region
  $region30: #{transformer_forward.32} parent=0 // pred_check
    _
  $region31: #{transformer_forward.32} parent=0 // pred_check_branch
    %145 = sbr.rel (0) target = $region33
  $region32: #{transformer_forward.32} parent=0 // pred_region
    _
  $region33: #{transformer_forward.32} parent=0 // pred_fallthru
    _
  // Predicated region
  $region34: #{transformer_forward.32} parent=0 // pred_check
    _
  $region35: #{transformer_forward.32} parent=0 // pred_check_branch
    %147 = sbr.rel (0) target = $region37
  $region36: #{transformer_forward.32} parent=0 // pred_region
    _
  $region37: #{transformer_forward.32} parent=0 // pred_fallthru
    _

// kernel: transformer_forward.28
$region0: #{transformer_forward.28}
  #allocation0 [shape = 'u32[]', space=smem, size = 0x4, offset = 0x4, fixed_abs, tag = 'smem constant byte address 0x4 - core index']
  #allocation1 [shape = 'u32[144,128]{1,0:T(1,128)}', space=vmem, size = 0x12000, scoped, tag = 'internal scratch']
  #allocation2 [shape = 'f32[16,128]{1,0:T(8,128)}', space=vmem, size = 0x2000, scoped, tag = 'scratch operand']
  %s0 = inlined_call_operand.vmem [shape: f32[16,128], index: 0, kind: input, shape index: {}]
  %s1 = inlined_call_operand.vmem [shape: f32[128,128], index: 1, kind: input, shape index: {}]
  %s2 = inlined_call_operand.vmem [shape: f32[1,128], index: 2, kind: input, shape index: {}]
  %s3 = inlined_call_operand.vmem [shape: f32[16,128], index: 3, kind: output, shape index: {}]
  %s4 = sld [smem:[#allocation0]]
  $region30: #{transformer_forward.28} parent=0
    _
  %s6 = ssub.s32 1, %s4
  %s7 = scalar_select 0, %s6, %s4
  // Predicated region
  $region2: #{transformer_forward.28} parent=0 // pred_check
    _
  $region3: #{transformer_forward.28} parent=0 // pred_check_branch
    %9 = sbr.rel (0) target = $region5
  $region4: #{transformer_forward.28} parent=0 // pred_region
    _
  $region5: #{transformer_forward.28} parent=0 // pred_fallthru
    _
  // Predicated region
  $region6: #{transformer_forward.28} parent=0 // pred_check
    _
  $region7: #{transformer_forward.28} parent=0 // pred_check_branch
    %11 = sbr.rel (0) target = $region9
  $region8: #{transformer_forward.28} parent=0 // pred_region
    _
  $region9: #{transformer_forward.28} parent=0 // pred_fallthru
    _
  // Predicated region
  $region10: #{transformer_forward.28} parent=0 // pred_check
    _
  $region11: #{transformer_forward.28} parent=0 // pred_check_branch
    %13 = sbr.rel (0) target = $region13
  $region12: #{transformer_forward.28} parent=0 // pred_region
    _
  $region13: #{transformer_forward.28} parent=0 // pred_fallthru
    _
  %p15 = scmp.eq.s32.totalorder 0, 0
  // Predicated region
  $region14: #{transformer_forward.28} parent=0 // pred_check
    %p16 = pneg %p15
  $region15: #{transformer_forward.28} parent=0 // pred_check_branch
    %18 = sbr.rel (%p16) target = $region17
  $region16: #{transformer_forward.28} parent=0 // pred_region
    %19 = vst [vmem:[#allocation2] sm:$0xff] 0.0
    %20 = vst [vmem:[#allocation2 + $0x8] sm:$0xff] 0.0
  $region17: #{transformer_forward.28} parent=0 // pred_fallthru
    _
  %v21 = vld [vmem:[#allocation2] sm:$0xff]
  %v22 = vld [vmem:[#allocation2 + $0x8] sm:$0xff]
  %v23 = vld [vmem:[%s0] sm:$0xff]
  %v24 = vld [vmem:[%s0 + $0x8] sm:$0xff]
  %v25 = vpack.c.bf16 %v24, %v23
  %v26 = vld [vmem:[%s1] sm:$0xff]
  %v27 = vld [vmem:[%s1 + $0x8] sm:$0xff]
  %v28 = vld [vmem:[%s1 + $0x10] sm:$0xff]
  %v29 = vld [vmem:[%s1 + $0x18] sm:$0xff]
  %v30 = vld [vmem:[%s1 + $0x20] sm:$0xff]
  %v31 = vld [vmem:[%s1 + $0x28] sm:$0xff]
  %v32 = vld [vmem:[%s1 + $0x30] sm:$0xff]
  %v33 = vld [vmem:[%s1 + $0x38] sm:$0xff]
  %v34 = vld [vmem:[%s1 + $0x40] sm:$0xff]
  %v35 = vld [vmem:[%s1 + $0x48] sm:$0xff]
  %v36 = vld [vmem:[%s1 + $0x50] sm:$0xff]
  %v37 = vld [vmem:[%s1 + $0x58] sm:$0xff]
  %v38 = vld [vmem:[%s1 + $0x60] sm:$0xff]
  %v39 = vld [vmem:[%s1 + $0x68] sm:$0xff]
  %v40 = vld [vmem:[%s1 + $0x70] sm:$0xff]
  %v41 = vld [vmem:[%s1 + $0x78] sm:$0xff]
  %v42 = vpack.c.bf16 %v27, %v26
  %v43 = vpack.c.bf16 %v29, %v28
  %v44 = vpack.c.bf16 %v31, %v30
  %v45 = vpack.c.bf16 %v33, %v32
  %v46 = vpack.c.bf16 %v35, %v34
  %v47 = vpack.c.bf16 %v37, %v36
  %v48 = vpack.c.bf16 %v39, %v38
  %v49 = vpack.c.bf16 %v41, %v40
  %50 = vmatprep.subr.bf16.mxu0 0
  %51 = vmatpush1.bf16.msra.mxu0 %v42
  %52 = vmatprep.subr.bf16.mxu0 0
  %53 = vmatpush1.bf16.msra.mxu0 %v43
  %54 = vmatprep.subr.bf16.mxu0 0
  %55 = vmatpush1.bf16.msra.mxu0 %v44
  %56 = vmatprep.subr.bf16.mxu0 0
  %57 = vmatpush1.bf16.msra.mxu0 %v45
  %58 = vmatprep.subr.bf16.mxu0 0
  %59 = vmatpush1.bf16.msra.mxu0 %v46
  %60 = vmatprep.subr.bf16.mxu0 0
  %61 = vmatpush1.bf16.msra.mxu0 %v47
  %62 = vmatprep.subr.bf16.mxu0 0
  %63 = vmatpush1.bf16.msra.mxu0 %v48
  %64 = vmatprep.subr.bf16.mxu0 0
  %65 = vmatpush1.bf16.msra.mxu0 %v49
  %66 = vmatprep.subr.bf16.mxu0 0
  %67 = vmatpush1.bf16.msra.mxu0 0
  %68 = vmatprep.subr.bf16.mxu0 0
  %69 = vmatpush1.bf16.msra.mxu0 0
  %70 = vmatprep.subr.bf16.mxu0 0
  %71 = vmatpush1.bf16.msra.mxu0 0
  %72 = vmatprep.subr.bf16.mxu0 0
  %73 = vmatpush1.bf16.msra.mxu0 0
  %74 = vmatprep.subr.bf16.mxu0 0
  %75 = vmatpush1.bf16.msra.mxu0 0
  %76 = vmatprep.subr.bf16.mxu0 0
  %77 = vmatpush1.bf16.msra.mxu0 0
  %78 = vmatprep.subr.bf16.mxu0 0
  %79 = vmatpush1.bf16.msra.mxu0 0
  %80 = vmatprep.subr.bf16.mxu0 0
  %81 = vmatpush1.bf16.msra.mxu0 0
  %82 = vmatprep.mubr.bf16.mxu0 0
  %83 = vmatmul.mubr.bf16.gmra.mrb[0].mxu0 %v25
  %v84 = vpop.f32.mrb[0].mxu0
  %v85 = vadd.f32 0.0, %v84
  %v86 = vpop.f32.mrb[0].mxu0
  %v87 = vpop.f32.mrb[0].mxu0
  %v88 = vadd.f32 0.0, %v87
  %v89 = vpop.f32.mrb[0].mxu0
  %90 = vdwg.mxu0
  %v91 = vadd.f32 %v21, %v85
  %v92 = vadd.f32 %v22, %v88
  %93 = vst [vmem:[#allocation2] sm:$0xff] %v91
  %94 = vst [vmem:[#allocation2 + $0x8] sm:$0xff] %v92
  // Predicated region
  $region18: #{transformer_forward.28} parent=0 // pred_check
    %p95 = pneg %p15
  $region19: #{transformer_forward.28} parent=0 // pred_check_branch
    %97 = sbr.rel (%p95) target = $region21
  $region20: #{transformer_forward.28} parent=0 // pred_region
    %v98 = vld [vmem:[#allocation2] sm:$0xff]
    %v99 = vld [vmem:[#allocation2 + $0x8] sm:$0xff]
    %v100 = vld [vmem:[%s2] sm:$0x1]
    %v102 = vlaneseq
    %v103 = vshrl.u32 %v102, 7
    %v104 = vsub.s32 0, %v103
    %v105 = vrot.slane %v100, %v104
    %v107 = vadd.f32 %v98, %v105
    %v108 = vadd.f32 %v99, %v105
    %109 = vst [vmem:[%s3] sm:$0xff] %v107
    %110 = vst [vmem:[%s3 + $0x8] sm:$0xff] %v108
  $region21: #{transformer_forward.28} parent=0 // pred_fallthru
    _
  // Predicated region
  $region22: #{transformer_forward.28} parent=0 // pred_check
    _
  $region23: #{transformer_forward.28} parent=0 // pred_check_branch
    %112 = sbr.rel (0) target = $region25
  $region24: #{transformer_forward.28} parent=0 // pred_region
    _
  $region25: #{transformer_forward.28} parent=0 // pred_fallthru
    _
  // Predicated region
  $region26: #{transformer_forward.28} parent=0 // pred_check
    _
  $region27: #{transformer_forward.28} parent=0 // pred_check_branch
    %114 = sbr.rel (0) target = $region29
  $region28: #{transformer_forward.28} parent=0 // pred_region
    _
  $region29: #{transformer_forward.28} parent=0 // pred_fallthru
    _

// kernel: transformer_forward.31
$region0: #{transformer_forward.31}
  #allocation0 [shape = 'u32[]', space=smem, size = 0x4, offset = 0x4, fixed_abs, tag = 'smem constant byte address 0x4 - core index']
  #allocation1 [shape = 'u32[144,128]{1,0:T(1,128)}', space=vmem, size = 0x12000, scoped, tag = 'internal scratch']
  #allocation2 [shape = 'f32[4,8,1]{2,1,0:T(8,128)}', space=vmem, size = 0x4000, scoped, tag = 'scratch operand']
  #allocation3 [shape = 'f32[4,8,1]{2,1,0:T(8,128)}', space=vmem, size = 0x4000, scoped, tag = 'scratch operand']
  #allocation4 [shape = 'f32[4,8,32]{2,1,0:T(8,128)}', space=vmem, size = 0x4000, scoped, tag = 'scratch operand']
  %s0 = inlined_call_operand.vmem [shape: f32[2,8,128], index: 0, kind: input, shape index: {}]
  %s1 = inlined_call_operand.vmem [shape: f32[2,8,128], index: 1, kind: input, shape index: {}]
  %s2 = inlined_call_operand.vmem [shape: f32[2,8,128], index: 2, kind: input, shape index: {}]
  %s3 = inlined_call_operand.vmem [shape: f32[2,8,128], index: 3, kind: output, shape index: {}]
  %s4 = sld [smem:[#allocation0]]
  $region53: #{transformer_forward.31} parent=0
    _
  %s6 = ssub.s32 1, %s4
  %s7 = scalar_select 0, %s6, %s4
  loop: start=0, step=1, limit=4
  $region2: #{transformer_forward.31} parent=0 // loop_pre_header
    _
  $region3: #{transformer_forward.31} parent=0 // loop_header
    %s9 = sphi 0, %s13
    %p10 = scmp.ge.s32.totalorder %s9, 4
    %s16 = sphi 0, %s42
    %s17 = sphi 0, %s38
    %s18 = sphi 0, %s34
    %s19 = sphi 0, %s30
    %s20 = sphi 0, %s16
    %s21 = sphi 0, %s17
    %s22 = sphi 0, %s18
    %s23 = sphi 0, %s19
    %s24 = sphi 0, %s20
    %s25 = sphi 0, %s21
    %s26 = sphi 0, %s22
    %s27 = sphi 0, %s23
    %s49 = sphi 0, %s51
    %s52 = sphi 0, %s49
    %s53 = sphi 0, %s52
    %s69 = sphi 0, %s53
    %s79 = sphi 0, %s81
    %s82 = sphi 0, %s79
    %s83 = sphi 0, %s82
    %s99 = sphi 0, %s83
    %s109 = sphi 0, %s111
    %s112 = sphi 0, %s109
    %s113 = sphi 0, %s112
    %s129 = sphi 0, %s113
    %s139 = sphi 0, %s141
    %s142 = sphi 0, %s139
    %s143 = sphi 0, %s142
    %s159 = sphi 0, %s143
  $region4: #{transformer_forward.31} parent=0 // loop_header_branch
    %12 = sbr.rel (%p10) target = $region8
  $region5: #{transformer_forward.31} parent=0 // loop_body
    %s14 = ssub.s32 %s9, 1
    %s15 = ssub.s32 %s9, 2
    %s28 = sadd.s32 1, %s19
    %p29 = scmp.ge.s32.totalorder %s28, 1
    %s30 = scalar_select %p29, 0, %s28
    %s31 = sadd.s32 1, %s18
    %s32 = scalar_select %p29, %s31, %s18
    %p33 = scmp.ge.s32.totalorder %s32, 1
    %s34 = scalar_select %p33, 0, %s32
    %s35 = sadd.s32 1, %s17
    %s36 = scalar_select %p33, %s35, %s17
    %p37 = scmp.ge.s32.totalorder %s36, 1
    %s38 = scalar_select %p37, 0, %s36
    %s39 = sadd.s32 1, %s16
    %s40 = scalar_select %p37, %s39, %s16
    %p41 = scmp.ge.s32.totalorder %s40, 2
    %s42 = scalar_select %p41, 0, %s40
    %s43 = ssub.s32 %s16, %s42
    %s44 = ssub.s32 %s18, %s34
    %s45 = sor.u32 %s43, %s44
    %s46 = ssub.s32 %s17, %s38
    %s47 = sor.u32 %s45, %s46
    %p48 = scmp.eq.s32.totalorder %s47, 0
    %s50 = sadd.s32 %s49, 1
    %s51 = scalar_select %p48, %s49, %s50
    %p54 = pneg %p48
    %p55 = scmp.eq.s32.totalorder %s9, 1
    %p56 = por %p54, %p55
    %p57 = scmp.ne.s32.totalorder %s49, %s52
    %p58 = scmp.eq.s32.totalorder %s9, 0
    %p59 = por %p57, %p58
    %p60 = scmp.ne.s32.totalorder %s49, %s52
    %p61 = scmp.eq.s32.totalorder %s14, 1
    %p62 = por %p60, %p61
    %p63 = scmp.ne.s32.totalorder %s52, %s53
    %p64 = scmp.eq.s32.totalorder %s14, 0
    %p65 = por %p63, %p64
    %p66 = scmp.ne.s32.totalorder %s52, %s53
    %p67 = scmp.eq.s32.totalorder %s15, 1
    %p68 = por %p66, %p67
    %p70 = scmp.ne.s32.totalorder %s53, %s69
    %p71 = scmp.eq.s32.totalorder %s15, 0
    %p72 = por %p70, %p71
    %s73 = ssub.s32 %s16, %s42
    %s74 = ssub.s32 %s19, %s30
    %s75 = sor.u32 %s73, %s74
    %s76 = ssub.s32 %s17, %s38
    %s77 = sor.u32 %s75, %s76
    %p78 = scmp.eq.s32.totalorder %s77, 0
    %s80 = sadd.s32 %s79, 1
    %s81 = scalar_select %p78, %s79, %s80
    %p84 = pneg %p78
    %p85 = scmp.eq.s32.totalorder %s9, 1
    %p86 = por %p84, %p85
    %p87 = scmp.ne.s32.totalorder %s79, %s82
    %p88 = scmp.eq.s32.totalorder %s9, 0
    %p89 = por %p87, %p88
    %p90 = scmp.ne.s32.totalorder %s79, %s82
    %p91 = scmp.eq.s32.totalorder %s14, 1
    %p92 = por %p90, %p91
    %p93 = scmp.ne.s32.totalorder %s82, %s83
    %p94 = scmp.eq.s32.totalorder %s14, 0
    %p95 = por %p93, %p94
    %p96 = scmp.ne.s32.totalorder %s82, %s83
    %p97 = scmp.eq.s32.totalorder %s15, 1
    %p98 = por %p96, %p97
    %p100 = scmp.ne.s32.totalorder %s83, %s99
    %p101 = scmp.eq.s32.totalorder %s15, 0
    %p102 = por %p100, %p101
    %s103 = ssub.s32 %s16, %s42
    %s104 = ssub.s32 %s19, %s30
    %s105 = sor.u32 %s103, %s104
    %s106 = ssub.s32 %s17, %s38
    %s107 = sor.u32 %s105, %s106
    %p108 = scmp.eq.s32.totalorder %s107, 0
    %s110 = sadd.s32 %s109, 1
    %s111 = scalar_select %p108, %s109, %s110
    %p114 = pneg %p108
    %p115 = scmp.eq.s32.totalorder %s9, 1
    %p116 = por %p114, %p115
    %p117 = scmp.ne.s32.totalorder %s109, %s112
    %p118 = scmp.eq.s32.totalorder %s9, 0
    %p119 = por %p117, %p118
    %p120 = scmp.ne.s32.totalorder %s109, %s112
    %p121 = scmp.eq.s32.totalorder %s14, 1
    %p122 = por %p120, %p121
    %p123 = scmp.ne.s32.totalorder %s112, %s113
    %p124 = scmp.eq.s32.totalorder %s14, 0
    %p125 = por %p123, %p124
    %p126 = scmp.ne.s32.totalorder %s112, %s113
    %p127 = scmp.eq.s32.totalorder %s15, 1
    %p128 = por %p126, %p127
    %p130 = scmp.ne.s32.totalorder %s113, %s129
    %p131 = scmp.eq.s32.totalorder %s15, 0
    %p132 = por %p130, %p131
    %s133 = ssub.s32 %s16, %s42
    %s134 = ssub.s32 %s18, %s34
    %s135 = sor.u32 %s133, %s134
    %s136 = ssub.s32 %s17, %s38
    %s137 = sor.u32 %s135, %s136
    %p138 = scmp.eq.s32.totalorder %s137, 0
    %s140 = sadd.s32 %s139, 1
    %s141 = scalar_select %p138, %s139, %s140
    %p144 = pneg %p138
    %p145 = scmp.eq.s32.totalorder %s9, 1
    %p146 = por %p144, %p145
    %p147 = scmp.ne.s32.totalorder %s139, %s142
    %p148 = scmp.eq.s32.totalorder %s9, 0
    %p149 = por %p147, %p148
    %p150 = scmp.ne.s32.totalorder %s139, %s142
    %p151 = scmp.eq.s32.totalorder %s14, 1
    %p152 = por %p150, %p151
    %p153 = scmp.ne.s32.totalorder %s142, %s143
    %p154 = scmp.eq.s32.totalorder %s14, 0
    %p155 = por %p153, %p154
    %p156 = scmp.ne.s32.totalorder %s142, %s143
    %p157 = scmp.eq.s32.totalorder %s15, 1
    %p158 = por %p156, %p157
    %p160 = scmp.ne.s32.totalorder %s143, %s159
    %p161 = scmp.eq.s32.totalorder %s15, 0
    %p162 = por %p160, %p161
    %p163 = scmp.le.s32.totalorder 1, %s9
    %p164 = scmp.lt.s32.totalorder %s9, 3
    %p165 = pnand %p163, %p164
    %p166 = pneg %p165
    // Predicated region
    $region9: #{transformer_forward.31} parent=5 // pred_check
      _
    $region10: #{transformer_forward.31} parent=5 // pred_check_branch
      %168 = sbr.rel (%p165) target = $region12
    $region11: #{transformer_forward.31} parent=5 // pred_region
      %s169 = ssub.s32 %s9, 1
    $region12: #{transformer_forward.31} parent=5 // pred_fallthru
      _
    %p170 = scmp.lt.s32.totalorder %s9, 2
    // Predicated region
    $region13: #{transformer_forward.31} parent=5 // pred_check
      %p171 = pneg %p170
    $region14: #{transformer_forward.31} parent=5 // pred_check_branch
      %173 = sbr.rel (%p171) target = $region16
    $region15: #{transformer_forward.31} parent=5 // pred_region
      // Predicated region
      $region17: #{transformer_forward.31} parent=15 // pred_check
        %p174 = pneg %p59
      $region18: #{transformer_forward.31} parent=15 // pred_check_branch
        %176 = sbr.rel (%p174) target = $region20
      $region19: #{transformer_forward.31} parent=15 // pred_region
        %p177 = scmp.lt.s32.totalorder %s16, 1
        %s178 = scalar_select %p177, %s16, 1
        %p179 = scmp.lt.s32.totalorder %s18, 0
        %s180 = scalar_select %p179, %s18, 0
        %p181 = scmp.lt.s32.totalorder %s17, 0
        %s182 = scalar_select %p181, %s17, 0
        %s183 = sadd.s32 %s182, %s180
        %s184 = sadd.s32 %s183, %s178
        %s185 = smul.addr %s184, 8
        %s186 = scalar_lea.vmem %s0, %s185
      $region20: #{transformer_forward.31} parent=15 // pred_fallthru
        _
      // Predicated region
      $region21: #{transformer_forward.31} parent=15 // pred_check
        %p187 = pneg %p89
      $region22: #{transformer_forward.31} parent=15 // pred_check_branch
        %189 = sbr.rel (%p187) target = $region24
      $region23: #{transformer_forward.31} parent=15 // pred_region
        %p190 = scmp.lt.s32.totalorder %s16, 1
        %s191 = scalar_select %p190, %s16, 1
        %p192 = scmp.lt.s32.totalorder %s19, 0
        %s193 = scalar_select %p192, %s19, 0
        %p194 = scmp.lt.s32.totalorder %s17, 0
        %s195 = scalar_select %p194, %s17, 0
        %s196 = sadd.s32 %s195, %s193
        %s197 = sadd.s32 %s196, %s191
        %s198 = smul.addr %s197, 8
        %s199 = scalar_lea.vmem %s1, %s198
      $region24: #{transformer_forward.31} parent=15 // pred_fallthru
        _
      // Predicated region
      $region25: #{transformer_forward.31} parent=15 // pred_check
        %p200 = pneg %p119
      $region26: #{transformer_forward.31} parent=15 // pred_check_branch
        %202 = sbr.rel (%p200) target = $region28
      $region27: #{transformer_forward.31} parent=15 // pred_region
        %p203 = scmp.lt.s32.totalorder %s16, 1
        %s204 = scalar_select %p203, %s16, 1
        %p205 = scmp.lt.s32.totalorder %s19, 0
        %s206 = scalar_select %p205, %s19, 0
        %p207 = scmp.lt.s32.totalorder %s17, 0
        %s208 = scalar_select %p207, %s17, 0
        %s209 = sadd.s32 %s208, %s206
        %s210 = sadd.s32 %s209, %s204
        %s211 = smul.addr %s210, 8
        %s212 = scalar_lea.vmem %s2, %s211
      $region28: #{transformer_forward.31} parent=15 // pred_fallthru
        _
    $region16: #{transformer_forward.31} parent=5 // pred_fallthru
      _
    %p213 = scmp.le.s32.totalorder 1, %s9
    %p214 = scmp.lt.s32.totalorder %s9, 3
    %p215 = pnand %p213, %p214
    %p216 = pneg %p215
    // Predicated region
    $region29: #{transformer_forward.31} parent=5 // pred_check
      _
    $region30: #{transformer_forward.31} parent=5 // pred_check_branch
      %218 = sbr.rel (%p215) target = $region32
    $region31: #{transformer_forward.31} parent=5 // pred_region
      %s219 = ssub.s32 %s9, 1
      %p220 = scmp.lt.s32.totalorder %s20, 1
      %s221 = scalar_select %p220, %s20, 1
      %p222 = scmp.lt.s32.totalorder %s22, 0
      %s223 = scalar_select %p222, %s22, 0
      %p224 = scmp.lt.s32.totalorder %s21, 0
      %s225 = scalar_select %p224, %s21, 0
      %s226 = sadd.s32 %s225, %s223
      %s227 = sadd.s32 %s226, %s221
      %s228 = smul.addr %s227, 8
      %s229 = scalar_lea.vmem %s0, %s228
      %p230 = pneg %p65
      %p231 = pneg %p62
      %p232 = scmp.lt.s32.totalorder %s20, 1
      %s233 = scalar_select %p232, %s20, 1
      %p234 = scmp.lt.s32.totalorder %s23, 0
      %s235 = scalar_select %p234, %s23, 0
      %p236 = scmp.lt.s32.totalorder %s21, 0
      %s237 = scalar_select %p236, %s21, 0
      %s238 = sadd.s32 %s237, %s235
      %s239 = sadd.s32 %s238, %s233
      %s240 = smul.addr %s239, 8
      %s241 = scalar_lea.vmem %s1, %s240
      %p242 = pneg %p95
      %p243 = pneg %p92
      %p244 = scmp.lt.s32.totalorder %s20, 1
      %s245 = scalar_select %p244, %s20, 1
      %p246 = scmp.lt.s32.totalorder %s23, 0
      %s247 = scalar_select %p246, %s23, 0
      %p248 = scmp.lt.s32.totalorder %s21, 0
      %s249 = scalar_select %p248, %s21, 0
      %s250 = sadd.s32 %s249, %s247
      %s251 = sadd.s32 %s250, %s245
      %s252 = smul.addr %s251, 8
      %s253 = scalar_lea.vmem %s2, %s252
      %p254 = pneg %p125
      %p255 = pneg %p122
      %p256 = pneg %p155
      %p257 = pneg %p152
      %p258 = scmp.lt.s32.totalorder %s20, 1
      %s259 = scalar_select %p258, %s20, 1
      %p260 = scmp.lt.s32.totalorder %s22, 0
      %s261 = scalar_select %p260, %s22, 0
      %p262 = scmp.lt.s32.totalorder %s21, 0
      %s263 = scalar_select %p262, %s21, 0
      %s264 = sadd.s32 %s263, %s261
      %s265 = sadd.s32 %s264, %s259
      %s266 = smul.addr %s265, 8
      %s267 = scalar_lea.vmem %s3, %s266
      %p268 = scmp.lt.s32.totalorder %s20, 1
      %s269 = scalar_select %p268, %s20, 1
      %p270 = scmp.lt.s32.totalorder %s22, 0
      %s271 = scalar_select %p270, %s22, 0
      %p272 = scmp.lt.s32.totalorder %s21, 0
      %s273 = scalar_select %p272, %s21, 0
      %s274 = sadd.s32 %s273, %s271
      %s275 = sadd.s32 %s274, %s269
      %s276 = smul.addr %s275, 8
      %s277 = scalar_lea.vmem %s0, %s276
      %p278 = scmp.lt.s32.totalorder %s20, 1
      %s279 = scalar_select %p278, %s20, 1
      %p280 = scmp.lt.s32.totalorder %s23, 0
      %s281 = scalar_select %p280, %s23, 0
      %p282 = scmp.lt.s32.totalorder %s21, 0
      %s283 = scalar_select %p282, %s21, 0
      %s284 = sadd.s32 %s283, %s281
      %s285 = sadd.s32 %s284, %s279
      %s286 = smul.addr %s285, 8
      %s287 = scalar_lea.vmem %s1, %s286
      %p288 = scmp.lt.s32.totalorder %s20, 1
      %s289 = scalar_select %p288, %s20, 1
      %p290 = scmp.lt.s32.totalorder %s23, 0
      %s291 = scalar_select %p290, %s23, 0
      %p292 = scmp.lt.s32.totalorder %s21, 0
      %s293 = scalar_select %p292, %s21, 0
      %s294 = sadd.s32 %s293, %s291
      %s295 = sadd.s32 %s294, %s289
      %s296 = smul.addr %s295, 8
      %s297 = scalar_lea.vmem %s2, %s296
      %p298 = scmp.lt.s32.totalorder %s20, 1
      %s299 = scalar_select %p298, %s20, 1
      %p300 = scmp.lt.s32.totalorder %s22, 0
      %s301 = scalar_select %p300, %s22, 0
      %p302 = scmp.lt.s32.totalorder %s21, 0
      %s303 = scalar_select %p302, %s21, 0
      %s304 = sadd.s32 %s303, %s301
      %s305 = sadd.s32 %s304, %s299
      %s306 = smul.addr %s305, 8
      %s307 = scalar_lea.vmem %s3, %s306
      %p309 = scmp.eq.s32.totalorder %s23, 0
      // Predicated region
      $region33: #{transformer_forward.31} parent=31 // pred_check
        %p310 = pneg %p309
      $region34: #{transformer_forward.31} parent=31 // pred_check_branch
        %312 = sbr.rel (%p310) target = $region36
      $region35: #{transformer_forward.31} parent=31 // pred_region
        %vm313 = vcmask 7168
        %314 = vst.msk [vmem:[#allocation2] sm:$0xff] %vm313, -inf
        %315 = vst.msk [vmem:[#allocation2 + $0x8] sm:$0xff] %vm313, -inf
        %316 = vst.msk [vmem:[#allocation2 + $0x10] sm:$0xff] %vm313, -inf
        %317 = vst.msk [vmem:[#allocation2 + $0x18] sm:$0xff] %vm313, -inf
        %318 = vst.msk [vmem:[#allocation3] sm:$0xff] %vm313, 0.0
        %319 = vst.msk [vmem:[#allocation3 + $0x8] sm:$0xff] %vm313, 0.0
        %320 = vst.msk [vmem:[#allocation3 + $0x10] sm:$0xff] %vm313, 0.0
        %321 = vst.msk [vmem:[#allocation3 + $0x18] sm:$0xff] %vm313, 0.0
        %vm322 = vcmask 261120
        %323 = vst.msk [vmem:[#allocation4] sm:$0xff] %vm322, 0.0
        %324 = vst.msk [vmem:[#allocation4 + $0x8] sm:$0xff] %vm322, 0.0
        %325 = vst.msk [vmem:[#allocation4 + $0x10] sm:$0xff] %vm322, 0.0
        %326 = vst.msk [vmem:[#allocation4 + $0x18] sm:$0xff] %vm322, 0.0
      $region36: #{transformer_forward.31} parent=31 // pred_fallthru
        _
      %v327 = vld [vmem:[%s277] sm:$0xff]
      %v328 = vld [vmem:[%s287] sm:$0xff]
      %v329 = vld [vmem:[%s297] sm:$0xff]
      %s330 = smul.u32 %s22, 8
      %v331 = vlaneseq
      %v332 = vshrl.u32 %v331, 7
      %v333 = vstv %s330
      %v334 = vadd.s32 %v333, %v332
      %s335 = smul.u32 %s23, 8
      %v336 = vlaneseq
      %v337 = vand.u32 %v336, 127
      %v338 = vstv %s335
      %v339 = vadd.s32 %v338, %v337
      %vm340 = vcmp.gt.s32.totalorder %v339, %v334
      %v341 = vsel %vm340, -1e+30, 0.0
      %v342 = vpack.c.bf16 %v327, %v327
      %v343 = vpack.c.bf16 %v328, %v328
      %v344 = vpack.c.bf16 %v329, %v329
      %vm345 = vcmask 261120
      %v347 = vsel %vm345, %v342, 0
      %v350 = vsel %vm345, %v343, 0
      %352 = vmatprep.subr.bf16.mxu0 0
      %353 = vmatpush1.bf16.xpose.msra.mxu0 %v350
      %354 = vmatprep.subr.bf16.mxu0 0
      %355 = vmatpush1.bf16.xpose.msra.mxu0 0
      %356 = vmatprep.subr.bf16.mxu0 0
      %357 = vmatpush1.bf16.xpose.msra.mxu0 0
      %358 = vmatprep.subr.bf16.mxu0 0
      %359 = vmatpush1.bf16.xpose.msra.mxu0 0
      %360 = vmatprep.subr.bf16.mxu0 0
      %361 = vmatpush1.bf16.xpose.msra.mxu0 0
      %362 = vmatprep.subr.bf16.mxu0 0
      %363 = vmatpush1.bf16.xpose.msra.mxu0 0
      %364 = vmatprep.subr.bf16.mxu0 0
      %365 = vmatpush1.bf16.xpose.msra.mxu0 0
      %366 = vmatprep.subr.bf16.mxu0 0
      %367 = vmatpush1.bf16.xpose.msra.mxu0 0
      %368 = vmatprep.subr.bf16.mxu0 0
      %369 = vmatpush1.bf16.xpose.msra.mxu0 0
      %370 = vmatprep.subr.bf16.mxu0 0
      %371 = vmatpush1.bf16.xpose.msra.mxu0 0
      %372 = vmatprep.subr.bf16.mxu0 0
      %373 = vmatpush1.bf16.xpose.msra.mxu0 0
      %374 = vmatprep.subr.bf16.mxu0 0
      %375 = vmatpush1.bf16.xpose.msra.mxu0 0
      %376 = vmatprep.subr.bf16.mxu0 0
      %377 = vmatpush1.bf16.xpose.msra.mxu0 0
      %378 = vmatprep.subr.bf16.mxu0 0
      %379 = vmatpush1.bf16.xpose.msra.mxu0 0
      %380 = vmatprep.subr.bf16.mxu0 0
      %381 = vmatpush1.bf16.xpose.msra.mxu0 0
      %382 = vmatprep.subr.bf16.mxu0 0
      %383 = vmatpush1.bf16.xpose.msra.mxu0 0
      %384 = vmatprep.mubr.bf16.mxu0 0
      %385 = vmatmul.mubr.bf16.gmra.mrb[0].mxu0 %v347
      %v386 = vpop.f32.mrb[0].mxu0
      %v387 = vadd.f32 %v341, %v386
      %v388 = vpop.f32.mrb[0].mxu0
      %v389 = vpop.f32.mrb[0].mxu0
      %v390 = vpop.f32.mrb[0].mxu0
      %391 = vdwg.mxu0
      %v392 = vld [vmem:[#allocation2] sm:$0xff]
      %v393 = vld [vmem:[#allocation3] sm:$0xff]
      %vm394 = vcmask 64512
      %v395 = vsel %vm394, %v387, -inf
      %396 = vmax.xlane.f32.xlu0 %v395
      %v397 = vpop.xlane.xlu0 %396
      %v398 = vmax.f32 %v392, %v397
      %v399 = vsub.f32 %v392, %v398
      %v400 = vmul.f32 %v399, 1.442695
      %v401 = vpow.pop %v400
      %403 = vset.pattern.permute.xlu0 0
      %404 = vperm.xlu0 %403, %v398
      %v405 = vpop.permute.xlu0 %404
      %v407 = vsub.f32 %v387, %v405
      %v408 = vmul.f32 %v407, 1.442695
      %v409 = vpow.pop %v408
      %v410 = vmul.f32 %v401, %v393
      %v411 = vsel %vm394, %v409, 0.0
      %412 = vadd.xlane.f32.xlu0 %v411
      %v413 = vpop.xlane.xlu0 %412
      %v414 = vadd.f32 %v410, %v413
      %vm415 = vcmask 7168
      %416 = vst.msk [vmem:[#allocation3] sm:$0xff] %vm415, %v414
      %v417 = vld [vmem:[#allocation4] sm:$0xff]
      %419 = vset.pattern.permute.xlu0 0
      %420 = vperm.xlu0 %419, %v401
      %v421 = vpop.permute.xlu0 %420
      %v423 = vmul.f32 %v421, %v417
      %v424 = vpack.c.bf16 %v409, %v409
      %v426 = vsel %vm394, %v424, 0
      %vm428 = vcmask 1043456
      %v430 = vsel %vm428, %v344, 0
      %432 = vmatprep.subr.bf16.mxu0 0
      %433 = vmatpush1.bf16.msra.mxu0 %v430
      %434 = vmatprep.subr.bf16.mxu0 0
      %435 = vmatpush1.bf16.msra.mxu0 0
      %436 = vmatprep.subr.bf16.mxu0 0
      %437 = vmatpush1.bf16.msra.mxu0 0
      %438 = vmatprep.subr.bf16.mxu0 0
      %439 = vmatpush1.bf16.msra.mxu0 0
      %440 = vmatprep.subr.bf16.mxu0 0
      %441 = vmatpush1.bf16.msra.mxu0 0
      %442 = vmatprep.subr.bf16.mxu0 0
      %443 = vmatpush1.bf16.msra.mxu0 0
      %444 = vmatprep.subr.bf16.mxu0 0
      %445 = vmatpush1.bf16.msra.mxu0 0
      %446 = vmatprep.subr.bf16.mxu0 0
      %447 = vmatpush1.bf16.msra.mxu0 0
      %448 = vmatprep.subr.bf16.mxu0 0
      %449 = vmatpush1.bf16.msra.mxu0 0
      %450 = vmatprep.subr.bf16.mxu0 0
      %451 = vmatpush1.bf16.msra.mxu0 0
      %452 = vmatprep.subr.bf16.mxu0 0
      %453 = vmatpush1.bf16.msra.mxu0 0
      %454 = vmatprep.subr.bf16.mxu0 0
      %455 = vmatpush1.bf16.msra.mxu0 0
      %456 = vmatprep.subr.bf16.mxu0 0
      %457 = vmatpush1.bf16.msra.mxu0 0
      %458 = vmatprep.subr.bf16.mxu0 0
      %459 = vmatpush1.bf16.msra.mxu0 0
      %460 = vmatprep.subr.bf16.mxu0 0
      %461 = vmatpush1.bf16.msra.mxu0 0
      %462 = vmatprep.subr.bf16.mxu0 0
      %463 = vmatpush1.bf16.msra.mxu0 0
      %464 = vmatprep.mubr.bf16.mxu0 0
      %465 = vmatmul.mubr.bf16.gmra.mrb[0].mxu0 %v426
      %v466 = vpop.f32.mrb[0].mxu0
      %v467 = vadd.f32 0.0, %v466
      %v468 = vpop.f32.mrb[0].mxu0
      %v469 = vpop.f32.mrb[0].mxu0
      %v470 = vpop.f32.mrb[0].mxu0
      %471 = vdwg.mxu0
      %v472 = vadd.f32 %v423, %v467
      %473 = vst.msk [vmem:[#allocation4] sm:$0xff] %vm345, %v472
      %474 = vst.msk [vmem:[#allocation2] sm:$0xff] %vm415, %v398
      %476 = vrot.lane.b32.xlu0 %v342, 96
      %v477 = vpop.permute.xlu0 %476
      %479 = vrot.lane.b32.xlu0 %v343, 96
      %v480 = vpop.permute.xlu0 %479
      %v482 = vsel %vm345, %v477, 0
      %v485 = vsel %vm345, %v480, 0
      %487 = vmatprep.subr.bf16.mxu0 0
      %488 = vmatpush1.bf16.xpose.msra.mxu0 %v485
      %489 = vmatprep.subr.bf16.mxu0 0
      %490 = vmatpush1.bf16.xpose.msra.mxu0 0
      %491 = vmatprep.subr.bf16.mxu0 0
      %492 = vmatpush1.bf16.xpose.msra.mxu0 0
      %493 = vmatprep.subr.bf16.mxu0 0
      %494 = vmatpush1.bf16.xpose.msra.mxu0 0
      %495 = vmatprep.subr.bf16.mxu0 0
      %496 = vmatpush1.bf16.xpose.msra.mxu0 0
      %497 = vmatprep.subr.bf16.mxu0 0
      %498 = vmatpush1.bf16.xpose.msra.mxu0 0
      %499 = vmatprep.subr.bf16.mxu0 0
      %500 = vmatpush1.bf16.xpose.msra.mxu0 0
      %501 = vmatprep.subr.bf16.mxu0 0
      %502 = vmatpush1.bf16.xpose.msra.mxu0 0
      %503 = vmatprep.subr.bf16.mxu0 0
      %504 = vmatpush1.bf16.xpose.msra.mxu0 0
      %505 = vmatprep.subr.bf16.mxu0 0
      %506 = vmatpush1.bf16.xpose.msra.mxu0 0
      %507 = vmatprep.subr.bf16.mxu0 0
      %508 = vmatpush1.bf16.xpose.msra.mxu0 0
      %509 = vmatprep.subr.bf16.mxu0 0
      %510 = vmatpush1.bf16.xpose.msra.mxu0 0
      %511 = vmatprep.subr.bf16.mxu0 0
      %512 = vmatpush1.bf16.xpose.msra.mxu0 0
      %513 = vmatprep.subr.bf16.mxu0 0
      %514 = vmatpush1.bf16.xpose.msra.mxu0 0
      %515 = vmatprep.subr.bf16.mxu0 0
      %516 = vmatpush1.bf16.xpose.msra.mxu0 0
      %517 = vmatprep.subr.bf16.mxu0 0
      %518 = vmatpush1.bf16.xpose.msra.mxu0 0
      %519 = vmatprep.mubr.bf16.mxu0 0
      %520 = vmatmul.mubr.bf16.gmra.mrb[0].mxu0 %v482
      %v521 = vpop.f32.mrb[0].mxu0
      %v522 = vadd.f32 %v341, %v521
      %v523 = vpop.f32.mrb[0].mxu0
      %v524 = vpop.f32.mrb[0].mxu0
      %v525 = vpop.f32.mrb[0].mxu0
      %526 = vdwg.mxu0
      %s527 = scalar_lea.vmem [#allocation2], 8
      %v528 = vld [vmem:[%s527] sm:$0xff]
      %s529 = scalar_lea.vmem [#allocation3], 8
      %v530 = vld [vmem:[%s529] sm:$0xff]
      %v531 = vsel %vm394, %v522, -inf
      %532 = vmax.xlane.f32.xlu0 %v531
      %v533 = vpop.xlane.xlu0 %532
      %v534 = vmax.f32 %v528, %v533
      %v535 = vsub.f32 %v528, %v534
      %v536 = vmul.f32 %v535, 1.442695
      %v537 = vpow.pop %v536
      %539 = vset.pattern.permute.xlu0 0
      %540 = vperm.xlu0 %539, %v534
      %v541 = vpop.permute.xlu0 %540
      %v543 = vsub.f32 %v522, %v541
      %v544 = vmul.f32 %v543, 1.442695
      %v545 = vpow.pop %v544
      %v546 = vmul.f32 %v537, %v530
      %v547 = vsel %vm394, %v545, 0.0
      %548 = vadd.xlane.f32.xlu0 %v547
      %v549 = vpop.xlane.xlu0 %548
      %v550 = vadd.f32 %v546, %v549
      %551 = vst.msk [vmem:[%s529] sm:$0xff] %vm415, %v550
      %s552 = scalar_lea.vmem [#allocation4], 8
      %v553 = vld [vmem:[%s552] sm:$0xff]
      %555 = vset.pattern.permute.xlu0 0
      %556 = vperm.xlu0 %555, %v537
      %v557 = vpop.permute.xlu0 %556
      %v559 = vmul.f32 %v557, %v553
      %v560 = vpack.c.bf16 %v545, %v545
      %562 = vrot.lane.b32.xlu0 %v344, 96
      %v563 = vpop.permute.xlu0 %562
      %v565 = vsel %vm394, %v560, 0
      %v568 = vsel %vm428, %v563, 0
      %570 = vmatprep.subr.bf16.mxu0 0
      %571 = vmatpush1.bf16.msra.mxu0 %v568
      %572 = vmatprep.subr.bf16.mxu0 0
      %573 = vmatpush1.bf16.msra.mxu0 0
      %574 = vmatprep.subr.bf16.mxu0 0
      %575 = vmatpush1.bf16.msra.mxu0 0
      %576 = vmatprep.subr.bf16.mxu0 0
      %577 = vmatpush1.bf16.msra.mxu0 0
      %578 = vmatprep.subr.bf16.mxu0 0
      %579 = vmatpush1.bf16.msra.mxu0 0
      %580 = vmatprep.subr.bf16.mxu0 0
      %581 = vmatpush1.bf16.msra.mxu0 0
      %582 = vmatprep.subr.bf16.mxu0 0
      %583 = vmatpush1.bf16.msra.mxu0 0
      %584 = vmatprep.subr.bf16.mxu0 0
      %585 = vmatpush1.bf16.msra.mxu0 0
      %586 = vmatprep.subr.bf16.mxu0 0
      %587 = vmatpush1.bf16.msra.mxu0 0
      %588 = vmatprep.subr.bf16.mxu0 0
      %589 = vmatpush1.bf16.msra.mxu0 0
      %590 = vmatprep.subr.bf16.mxu0 0
      %591 = vmatpush1.bf16.msra.mxu0 0
      %592 = vmatprep.subr.bf16.mxu0 0
      %593 = vmatpush1.bf16.msra.mxu0 0
      %594 = vmatprep.subr.bf16.mxu0 0
      %595 = vmatpush1.bf16.msra.mxu0 0
      %596 = vmatprep.subr.bf16.mxu0 0
      %597 = vmatpush1.bf16.msra.mxu0 0
      %598 = vmatprep.subr.bf16.mxu0 0
      %599 = vmatpush1.bf16.msra.mxu0 0
      %600 = vmatprep.subr.bf16.mxu0 0
      %601 = vmatpush1.bf16.msra.mxu0 0
      %602 = vmatprep.mubr.bf16.mxu0 0
      %603 = vmatmul.mubr.bf16.gmra.mrb[0].mxu0 %v565
      %v604 = vpop.f32.mrb[0].mxu0
      %v605 = vadd.f32 0.0, %v604
      %v606 = vpop.f32.mrb[0].mxu0
      %v607 = vpop.f32.mrb[0].mxu0
      %v608 = vpop.f32.mrb[0].mxu0
      %609 = vdwg.mxu0
      %v610 = vadd.f32 %v559, %v605
      %611 = vst.msk [vmem:[%s552] sm:$0xff] %vm345, %v610
      %612 = vst.msk [vmem:[%s527] sm:$0xff] %vm415, %v534
      %613 = vrot.lane.b32.xlu0 %v342, 64
      %v614 = vpop.permute.xlu0 %613
      %615 = vrot.lane.b32.xlu0 %v343, 64
      %v616 = vpop.permute.xlu0 %615
      %v618 = vsel %vm345, %v614, 0
      %v621 = vsel %vm345, %v616, 0
      %623 = vmatprep.subr.bf16.mxu0 0
      %624 = vmatpush1.bf16.xpose.msra.mxu0 %v621
      %625 = vmatprep.subr.bf16.mxu0 0
      %626 = vmatpush1.bf16.xpose.msra.mxu0 0
      %627 = vmatprep.subr.bf16.mxu0 0
      %628 = vmatpush1.bf16.xpose.msra.mxu0 0
      %629 = vmatprep.subr.bf16.mxu0 0
      %630 = vmatpush1.bf16.xpose.msra.mxu0 0
      %631 = vmatprep.subr.bf16.mxu0 0
      %632 = vmatpush1.bf16.xpose.msra.mxu0 0
      %633 = vmatprep.subr.bf16.mxu0 0
      %634 = vmatpush1.bf16.xpose.msra.mxu0 0
      %635 = vmatprep.subr.bf16.mxu0 0
      %636 = vmatpush1.bf16.xpose.msra.mxu0 0
      %637 = vmatprep.subr.bf16.mxu0 0
      %638 = vmatpush1.bf16.xpose.msra.mxu0 0
      %639 = vmatprep.subr.bf16.mxu0 0
      %640 = vmatpush1.bf16.xpose.msra.mxu0 0
      %641 = vmatprep.subr.bf16.mxu0 0
      %642 = vmatpush1.bf16.xpose.msra.mxu0 0
      %643 = vmatprep.subr.bf16.mxu0 0
      %644 = vmatpush1.bf16.xpose.msra.mxu0 0
      %645 = vmatprep.subr.bf16.mxu0 0
      %646 = vmatpush1.bf16.xpose.msra.mxu0 0
      %647 = vmatprep.subr.bf16.mxu0 0
      %648 = vmatpush1.bf16.xpose.msra.mxu0 0
      %649 = vmatprep.subr.bf16.mxu0 0
      %650 = vmatpush1.bf16.xpose.msra.mxu0 0
      %651 = vmatprep.subr.bf16.mxu0 0
      %652 = vmatpush1.bf16.xpose.msra.mxu0 0
      %653 = vmatprep.subr.bf16.mxu0 0
      %654 = vmatpush1.bf16.xpose.msra.mxu0 0
      %655 = vmatprep.mubr.bf16.mxu0 0
      %656 = vmatmul.mubr.bf16.gmra.mrb[0].mxu0 %v618
      %v657 = vpop.f32.mrb[0].mxu0
      %v658 = vadd.f32 %v341, %v657
      %v659 = vpop.f32.mrb[0].mxu0
      %v660 = vpop.f32.mrb[0].mxu0
      %v661 = vpop.f32.mrb[0].mxu0
      %662 = vdwg.mxu0
      %s663 = scalar_lea.vmem [#allocation2], 16
      %v664 = vld [vmem:[%s663] sm:$0xff]
      %s665 = scalar_lea.vmem [#allocation3], 16
      %v666 = vld [vmem:[%s665] sm:$0xff]
      %v667 = vsel %vm394, %v658, -inf
      %668 = vmax.xlane.f32.xlu0 %v667
      %v669 = vpop.xlane.xlu0 %668
      %v670 = vmax.f32 %v664, %v669
      %v671 = vsub.f32 %v664, %v670
      %v672 = vmul.f32 %v671, 1.442695
      %v673 = vpow.pop %v672
      %675 = vset.pattern.permute.xlu0 0
      %676 = vperm.xlu0 %675, %v670
      %v677 = vpop.permute.xlu0 %676
      %v679 = vsub.f32 %v658, %v677
      %v680 = vmul.f32 %v679, 1.442695
      %v681 = vpow.pop %v680
      %v682 = vmul.f32 %v673, %v666
      %v683 = vsel %vm394, %v681, 0.0
      %684 = vadd.xlane.f32.xlu0 %v683
      %v685 = vpop.xlane.xlu0 %684
      %v686 = vadd.f32 %v682, %v685
      %687 = vst.msk [vmem:[%s665] sm:$0xff] %vm415, %v686
      %s688 = scalar_lea.vmem [#allocation4], 16
      %v689 = vld [vmem:[%s688] sm:$0xff]
      %691 = vset.pattern.permute.xlu0 0
      %692 = vperm.xlu0 %691, %v673
      %v693 = vpop.permute.xlu0 %692
      %v695 = vmul.f32 %v693, %v689
      %v696 = vpack.c.bf16 %v681, %v681
      %697 = vrot.lane.b32.xlu0 %v344, 64
      %v698 = vpop.permute.xlu0 %697
      %v700 = vsel %vm394, %v696, 0
      %v703 = vsel %vm428, %v698, 0
      %705 = vmatprep.subr.bf16.mxu0 0
      %706 = vmatpush1.bf16.msra.mxu0 %v703
      %707 = vmatprep.subr.bf16.mxu0 0
      %708 = vmatpush1.bf16.msra.mxu0 0
      %709 = vmatprep.subr.bf16.mxu0 0
      %710 = vmatpush1.bf16.msra.mxu0 0
      %711 = vmatprep.subr.bf16.mxu0 0
      %712 = vmatpush1.bf16.msra.mxu0 0
      %713 = vmatprep.subr.bf16.mxu0 0
      %714 = vmatpush1.bf16.msra.mxu0 0
      %715 = vmatprep.subr.bf16.mxu0 0
      %716 = vmatpush1.bf16.msra.mxu0 0
      %717 = vmatprep.subr.bf16.mxu0 0
      %718 = vmatpush1.bf16.msra.mxu0 0
      %719 = vmatprep.subr.bf16.mxu0 0
      %720 = vmatpush1.bf16.msra.mxu0 0
      %721 = vmatprep.subr.bf16.mxu0 0
      %722 = vmatpush1.bf16.msra.mxu0 0
      %723 = vmatprep.subr.bf16.mxu0 0
      %724 = vmatpush1.bf16.msra.mxu0 0
      %725 = vmatprep.subr.bf16.mxu0 0
      %726 = vmatpush1.bf16.msra.mxu0 0
      %727 = vmatprep.subr.bf16.mxu0 0
      %728 = vmatpush1.bf16.msra.mxu0 0
      %729 = vmatprep.subr.bf16.mxu0 0
      %730 = vmatpush1.bf16.msra.mxu0 0
      %731 = vmatprep.subr.bf16.mxu0 0
      %732 = vmatpush1.bf16.msra.mxu0 0
      %733 = vmatprep.subr.bf16.mxu0 0
      %734 = vmatpush1.bf16.msra.mxu0 0
      %735 = vmatprep.subr.bf16.mxu0 0
      %736 = vmatpush1.bf16.msra.mxu0 0
      %737 = vmatprep.mubr.bf16.mxu0 0
      %738 = vmatmul.mubr.bf16.gmra.mrb[0].mxu0 %v700
      %v739 = vpop.f32.mrb[0].mxu0
      %v740 = vadd.f32 0.0, %v739
      %v741 = vpop.f32.mrb[0].mxu0
      %v742 = vpop.f32.mrb[0].mxu0
      %v743 = vpop.f32.mrb[0].mxu0
      %744 = vdwg.mxu0
      %v745 = vadd.f32 %v695, %v740
      %746 = vst.msk [vmem:[%s688] sm:$0xff] %vm345, %v745
      %747 = vst.msk [vmem:[%s663] sm:$0xff] %vm415, %v670
      %748 = vrot.lane.b32.xlu0 %v342, 32
      %v749 = vpop.permute.xlu0 %748
      %750 = vrot.lane.b32.xlu0 %v343, 32
      %v751 = vpop.permute.xlu0 %750
      %v753 = vsel %vm345, %v749, 0
      %v756 = vsel %vm345, %v751, 0
      %758 = vmatprep.subr.bf16.mxu0 0
      %759 = vmatpush1.bf16.xpose.msra.mxu0 %v756
      %760 = vmatprep.subr.bf16.mxu0 0
      %761 = vmatpush1.bf16.xpose.msra.mxu0 0
      %762 = vmatprep.subr.bf16.mxu0 0
      %763 = vmatpush1.bf16.xpose.msra.mxu0 0
      %764 = vmatprep.subr.bf16.mxu0 0
      %765 = vmatpush1.bf16.xpose.msra.mxu0 0
      %766 = vmatprep.subr.bf16.mxu0 0
      %767 = vmatpush1.bf16.xpose.msra.mxu0 0
      %768 = vmatprep.subr.bf16.mxu0 0
      %769 = vmatpush1.bf16.xpose.msra.mxu0 0
      %770 = vmatprep.subr.bf16.mxu0 0
      %771 = vmatpush1.bf16.xpose.msra.mxu0 0
      %772 = vmatprep.subr.bf16.mxu0 0
      %773 = vmatpush1.bf16.xpose.msra.mxu0 0
      %774 = vmatprep.subr.bf16.mxu0 0
      %775 = vmatpush1.bf16.xpose.msra.mxu0 0
      %776 = vmatprep.subr.bf16.mxu0 0
      %777 = vmatpush1.bf16.xpose.msra.mxu0 0
      %778 = vmatprep.subr.bf16.mxu0 0
      %779 = vmatpush1.bf16.xpose.msra.mxu0 0
      %780 = vmatprep.subr.bf16.mxu0 0
      %781 = vmatpush1.bf16.xpose.msra.mxu0 0
      %782 = vmatprep.subr.bf16.mxu0 0
      %783 = vmatpush1.bf16.xpose.msra.mxu0 0
      %784 = vmatprep.subr.bf16.mxu0 0
      %785 = vmatpush1.bf16.xpose.msra.mxu0 0
      %786 = vmatprep.subr.bf16.mxu0 0
      %787 = vmatpush1.bf16.xpose.msra.mxu0 0
      %788 = vmatprep.subr.bf16.mxu0 0
      %789 = vmatpush1.bf16.xpose.msra.mxu0 0
      %790 = vmatprep.mubr.bf16.mxu0 0
      %791 = vmatmul.mubr.bf16.gmra.mrb[0].mxu0 %v753
      %v792 = vpop.f32.mrb[0].mxu0
      %v793 = vadd.f32 %v341, %v792
      %v794 = vpop.f32.mrb[0].mxu0
      %v795 = vpop.f32.mrb[0].mxu0
      %v796 = vpop.f32.mrb[0].mxu0
      %797 = vdwg.mxu0
      %s798 = scalar_lea.vmem [#allocation2], 24
      %v799 = vld [vmem:[%s798] sm:$0xff]
      %s800 = scalar_lea.vmem [#allocation3], 24
      %v801 = vld [vmem:[%s800] sm:$0xff]
      %v802 = vsel %vm394, %v793, -inf
      %803 = vmax.xlane.f32.xlu0 %v802
      %v804 = vpop.xlane.xlu0 %803
      %v805 = vmax.f32 %v799, %v804
      %v806 = vsub.f32 %v799, %v805
      %v807 = vmul.f32 %v806, 1.442695
      %v808 = vpow.pop %v807
      %810 = vset.pattern.permute.xlu0 0
      %811 = vperm.xlu0 %810, %v805
      %v812 = vpop.permute.xlu0 %811
      %v814 = vsub.f32 %v793, %v812
      %v815 = vmul.f32 %v814, 1.442695
      %v816 = vpow.pop %v815
      %v817 = vmul.f32 %v808, %v801
      %v818 = vsel %vm394, %v816, 0.0
      %819 = vadd.xlane.f32.xlu0 %v818
      %v820 = vpop.xlane.xlu0 %819
      %v821 = vadd.f32 %v817, %v820
      %822 = vst.msk [vmem:[%s800] sm:$0xff] %vm415, %v821
      %s823 = scalar_lea.vmem [#allocation4], 24
      %v824 = vld [vmem:[%s823] sm:$0xff]
      %826 = vset.pattern.permute.xlu0 0
      %827 = vperm.xlu0 %826, %v808
      %v828 = vpop.permute.xlu0 %827
      %v830 = vmul.f32 %v828, %v824
      %v831 = vpack.c.bf16 %v816, %v816
      %832 = vrot.lane.b32.xlu0 %v344, 32
      %v833 = vpop.permute.xlu0 %832
      %v835 = vsel %vm394, %v831, 0
      %v838 = vsel %vm428, %v833, 0
      %840 = vmatprep.subr.bf16.mxu0 0
      %841 = vmatpush1.bf16.msra.mxu0 %v838
      %842 = vmatprep.subr.bf16.mxu0 0
      %843 = vmatpush1.bf16.msra.mxu0 0
      %844 = vmatprep.subr.bf16.mxu0 0
      %845 = vmatpush1.bf16.msra.mxu0 0
      %846 = vmatprep.subr.bf16.mxu0 0
      %847 = vmatpush1.bf16.msra.mxu0 0
      %848 = vmatprep.subr.bf16.mxu0 0
      %849 = vmatpush1.bf16.msra.mxu0 0
      %850 = vmatprep.subr.bf16.mxu0 0
      %851 = vmatpush1.bf16.msra.mxu0 0
      %852 = vmatprep.subr.bf16.mxu0 0
      %853 = vmatpush1.bf16.msra.mxu0 0
      %854 = vmatprep.subr.bf16.mxu0 0
      %855 = vmatpush1.bf16.msra.mxu0 0
      %856 = vmatprep.subr.bf16.mxu0 0
      %857 = vmatpush1.bf16.msra.mxu0 0
      %858 = vmatprep.subr.bf16.mxu0 0
      %859 = vmatpush1.bf16.msra.mxu0 0
      %860 = vmatprep.subr.bf16.mxu0 0
      %861 = vmatpush1.bf16.msra.mxu0 0
      %862 = vmatprep.subr.bf16.mxu0 0
      %863 = vmatpush1.bf16.msra.mxu0 0
      %864 = vmatprep.subr.bf16.mxu0 0
      %865 = vmatpush1.bf16.msra.mxu0 0
      %866 = vmatprep.subr.bf16.mxu0 0
      %867 = vmatpush1.bf16.msra.mxu0 0
      %868 = vmatprep.subr.bf16.mxu0 0
      %869 = vmatpush1.bf16.msra.mxu0 0
      %870 = vmatprep.subr.bf16.mxu0 0
      %871 = vmatpush1.bf16.msra.mxu0 0
      %872 = vmatprep.mubr.bf16.mxu0 0
      %873 = vmatmul.mubr.bf16.gmra.mrb[0].mxu0 %v835
      %v874 = vpop.f32.mrb[0].mxu0
      %v875 = vadd.f32 0.0, %v874
      %v876 = vpop.f32.mrb[0].mxu0
      %v877 = vpop.f32.mrb[0].mxu0
      %v878 = vpop.f32.mrb[0].mxu0
      %879 = vdwg.mxu0
      %v880 = vadd.f32 %v830, %v875
      %881 = vst.msk [vmem:[%s823] sm:$0xff] %vm345, %v880
      %882 = vst.msk [vmem:[%s798] sm:$0xff] %vm415, %v805
      // Predicated region
      $region37: #{transformer_forward.31} parent=31 // pred_check
        %p883 = pneg %p309
      $region38: #{transformer_forward.31} parent=31 // pred_check_branch
        %885 = sbr.rel (%p883) target = $region40
      $region39: #{transformer_forward.31} parent=31 // pred_region
        %v886 = vld [vmem:[#allocation4] sm:$0xff]
        %v887 = vld [vmem:[#allocation3] sm:$0xff]
        %v888 = vrcp.pop %v887
        %890 = vset.pattern.permute.xlu0 0
        %891 = vperm.xlu0 %890, %v888
        %v892 = vpop.permute.xlu0 %891
        %v894 = vmul.f32 %v886, %v892
        %v895 = vld [vmem:[%s552] sm:$0xff]
        %v896 = vld [vmem:[%s529] sm:$0xff]
        %v897 = vrcp.pop %v896
        %899 = vset.pattern.permute.xlu0 0
        %900 = vperm.xlu0 %899, %v897
        %v901 = vpop.permute.xlu0 %900
        %v903 = vmul.f32 %v895, %v901
        %v904 = vld [vmem:[%s688] sm:$0xff]
        %v905 = vld [vmem:[%s665] sm:$0xff]
        %v906 = vrcp.pop %v905
        %908 = vset.pattern.permute.xlu0 0
        %909 = vperm.xlu0 %908, %v906
        %v910 = vpop.permute.xlu0 %909
        %v912 = vmul.f32 %v904, %v910
        %v913 = vld [vmem:[%s823] sm:$0xff]
        %v914 = vld [vmem:[%s800] sm:$0xff]
        %v915 = vrcp.pop %v914
        %917 = vset.pattern.permute.xlu0 0
        %918 = vperm.xlu0 %917, %v915
        %v919 = vpop.permute.xlu0 %918
        %v921 = vmul.f32 %v913, %v919
        %923 = vrot.lane.b32.xlu0 %v903, 32
        %v924 = vpop.permute.xlu0 %923
        %927 = vrot.lane.b32.xlu0 %v912, 64
        %v928 = vpop.permute.xlu0 %927
        %931 = vrot.lane.b32.xlu0 %v921, 96
        %v932 = vpop.permute.xlu0 %931
        %v934 = vsel %vm345, %v894, %v924
        %vm935 = vcmask 523264
        %v936 = vsel %vm935, %v934, %v928
        %vm937 = vcmask 785408
        %v938 = vsel %vm937, %v936, %v932
        %939 = vst [vmem:[%s307] sm:$0xff] %v938
      $region40: #{transformer_forward.31} parent=31 // pred_fallthru
        _
      %p940 = scmp.lt.s32.totalorder %s20, 1
      %s941 = scalar_select %p940, %s20, 1
      %p942 = scmp.lt.s32.totalorder %s22, 0
      %s943 = scalar_select %p942, %s22, 0
      %p944 = scmp.lt.s32.totalorder %s21, 0
      %s945 = scalar_select %p944, %s21, 0
      %s946 = sadd.s32 %s945, %s943
      %s947 = sadd.s32 %s946, %s941
      %s948 = smul.addr %s947, 8
      %s949 = scalar_lea.vmem %s3, %s948
      // Predicated region
      $region41: #{transformer_forward.31} parent=31 // pred_check
        %p950 = pneg %p152
      $region42: #{transformer_forward.31} parent=31 // pred_check_branch
        %952 = sbr.rel (%p950) target = $region44
      $region43: #{transformer_forward.31} parent=31 // pred_region
        _
      $region44: #{transformer_forward.31} parent=31 // pred_fallthru
        _
    $region32: #{transformer_forward.31} parent=5 // pred_fallthru
      _
    %p953 = scmp.le.s32.totalorder 2, %s9
    // Predicated region
    $region45: #{transformer_forward.31} parent=5 // pred_check
      %p954 = pneg %p953
    $region46: #{transformer_forward.31} parent=5 // pred_check_branch
      %956 = sbr.rel (%p954) target = $region48
    $region47: #{transformer_forward.31} parent=5 // pred_region
      %s957 = ssub.s32 %s9, 2
      // Predicated region
      $region49: #{transformer_forward.31} parent=47 // pred_check
        %p958 = pneg %p158
      $region50: #{transformer_forward.31} parent=47 // pred_check_branch
        %960 = sbr.rel (%p958) target = $region52
      $region51: #{transformer_forward.31} parent=47 // pred_region
        %p961 = scmp.lt.s32.totalorder %s24, 1
        %s962 = scalar_select %p961, %s24, 1
        %p963 = scmp.lt.s32.totalorder %s26, 0
        %s964 = scalar_select %p963, %s26, 0
        %p965 = scmp.lt.s32.totalorder %s25, 0
        %s966 = scalar_select %p965, %s25, 0
        %s967 = sadd.s32 %s966, %s964
        %s968 = sadd.s32 %s967, %s962
        %s969 = smul.addr %s968, 8
        %s970 = scalar_lea.vmem %s3, %s969
      $region52: #{transformer_forward.31} parent=47 // pred_fallthru
        _
    $region48: #{transformer_forward.31} parent=5 // pred_fallthru
      _
  $region6: #{transformer_forward.31} parent=0 // loop_footer
    %s13 = sadd.s32 1, %s9
  $region7: #{transformer_forward.31} parent=0 // loop_footer_branch
    %8 = sbr.rel target = $region3
  $region8: #{transformer_forward.31} parent=0 // loop_exit
    _

// kernel: transformer_forward.24
$region0: #{transformer_forward.24}
  #allocation0 [shape = 'u32[]', space=smem, size = 0x4, offset = 0x4, fixed_abs, tag = 'smem constant byte address 0x4 - core index']
  #allocation1 [shape = 'u32[144,128]{1,0:T(1,128)}', space=vmem, size = 0x12000, scoped, tag = 'internal scratch']
  #allocation2 [shape = 'f32[4,8,1]{2,1,0:T(8,128)}', space=vmem, size = 0x4000, scoped, tag = 'scratch operand']
  #allocation3 [shape = 'f32[4,8,1]{2,1,0:T(8,128)}', space=vmem, size = 0x4000, scoped, tag = 'scratch operand']
  #allocation4 [shape = 'f32[4,8,32]{2,1,0:T(8,128)}', space=vmem, size = 0x4000, scoped, tag = 'scratch operand']
  %s0 = inlined_call_operand.vmem [shape: f32[2,8,128], index: 0, kind: input, shape index: {}]
  %s1 = inlined_call_operand.vmem [shape: f32[2,8,128], index: 1, kind: input, shape index: {}]
  %s2 = inlined_call_operand.vmem [shape: f32[2,8,128], index: 2, kind: input, shape index: {}]
  %s3 = inlined_call_operand.vmem [shape: f32[2,8,128], index: 3, kind: output, shape index: {}]
  %s4 = sld [smem:[#allocation0]]
  $region53: #{transformer_forward.24} parent=0
    _
  %s6 = ssub.s32 1, %s4
  %s7 = scalar_select 0, %s6, %s4
  loop: start=0, step=1, limit=4
  $region2: #{transformer_forward.24} parent=0 // loop_pre_header
    _
  $region3: #{transformer_forward.24} parent=0 // loop_header
    %s9 = sphi 0, %s13
    %p10 = scmp.ge.s32.totalorder %s9, 4
    %s16 = sphi 0, %s42
    %s17 = sphi 0, %s38
    %s18 = sphi 0, %s34
    %s19 = sphi 0, %s30
    %s20 = sphi 0, %s16
    %s21 = sphi 0, %s17
    %s22 = sphi 0, %s18
    %s23 = sphi 0, %s19
    %s24 = sphi 0, %s20
    %s25 = sphi 0, %s21
    %s26 = sphi 0, %s22
    %s27 = sphi 0, %s23
    %s49 = sphi 0, %s51
    %s52 = sphi 0, %s49
    %s53 = sphi 0, %s52
    %s69 = sphi 0, %s53
    %s79 = sphi 0, %s81
    %s82 = sphi 0, %s79
    %s83 = sphi 0, %s82
    %s99 = sphi 0, %s83
    %s109 = sphi 0, %s111
    %s112 = sphi 0, %s109
    %s113 = sphi 0, %s112
    %s129 = sphi 0, %s113
    %s139 = sphi 0, %s141
    %s142 = sphi 0, %s139
    %s143 = sphi 0, %s142
    %s159 = sphi 0, %s143
  $region4: #{transformer_forward.24} parent=0 // loop_header_branch
    %12 = sbr.rel (%p10) target = $region8
  $region5: #{transformer_forward.24} parent=0 // loop_body
    %s14 = ssub.s32 %s9, 1
    %s15 = ssub.s32 %s9, 2
    %s28 = sadd.s32 1, %s19
    %p29 = scmp.ge.s32.totalorder %s28, 1
    %s30 = scalar_select %p29, 0, %s28
    %s31 = sadd.s32 1, %s18
    %s32 = scalar_select %p29, %s31, %s18
    %p33 = scmp.ge.s32.totalorder %s32, 1
    %s34 = scalar_select %p33, 0, %s32
    %s35 = sadd.s32 1, %s17
    %s36 = scalar_select %p33, %s35, %s17
    %p37 = scmp.ge.s32.totalorder %s36, 1
    %s38 = scalar_select %p37, 0, %s36
    %s39 = sadd.s32 1, %s16
    %s40 = scalar_select %p37, %s39, %s16
    %p41 = scmp.ge.s32.totalorder %s40, 2
    %s42 = scalar_select %p41, 0, %s40
    %s43 = ssub.s32 %s16, %s42
    %s44 = ssub.s32 %s18, %s34
    %s45 = sor.u32 %s43, %s44
    %s46 = ssub.s32 %s17, %s38
    %s47 = sor.u32 %s45, %s46
    %p48 = scmp.eq.s32.totalorder %s47, 0
    %s50 = sadd.s32 %s49, 1
    %s51 = scalar_select %p48, %s49, %s50
    %p54 = pneg %p48
    %p55 = scmp.eq.s32.totalorder %s9, 1
    %p56 = por %p54, %p55
    %p57 = scmp.ne.s32.totalorder %s49, %s52
    %p58 = scmp.eq.s32.totalorder %s9, 0
    %p59 = por %p57, %p58
    %p60 = scmp.ne.s32.totalorder %s49, %s52
    %p61 = scmp.eq.s32.totalorder %s14, 1
    %p62 = por %p60, %p61
    %p63 = scmp.ne.s32.totalorder %s52, %s53
    %p64 = scmp.eq.s32.totalorder %s14, 0
    %p65 = por %p63, %p64
    %p66 = scmp.ne.s32.totalorder %s52, %s53
    %p67 = scmp.eq.s32.totalorder %s15, 1
    %p68 = por %p66, %p67
    %p70 = scmp.ne.s32.totalorder %s53, %s69
    %p71 = scmp.eq.s32.totalorder %s15, 0
    %p72 = por %p70, %p71
    %s73 = ssub.s32 %s16, %s42
    %s74 = ssub.s32 %s19, %s30
    %s75 = sor.u32 %s73, %s74
    %s76 = ssub.s32 %s17, %s38
    %s77 = sor.u32 %s75, %s76
    %p78 = scmp.eq.s32.totalorder %s77, 0
    %s80 = sadd.s32 %s79, 1
    %s81 = scalar_select %p78, %s79, %s80
    %p84 = pneg %p78
    %p85 = scmp.eq.s32.totalorder %s9, 1
    %p86 = por %p84, %p85
    %p87 = scmp.ne.s32.totalorder %s79, %s82
    %p88 = scmp.eq.s32.totalorder %s9, 0
    %p89 = por %p87, %p88
    %p90 = scmp.ne.s32.totalorder %s79, %s82
    %p91 = scmp.eq.s32.totalorder %s14, 1
    %p92 = por %p90, %p91
    %p93 = scmp.ne.s32.totalorder %s82, %s83
    %p94 = scmp.eq.s32.totalorder %s14, 0
    %p95 = por %p93, %p94
    %p96 = scmp.ne.s32.totalorder %s82, %s83
    %p97 = scmp.eq.s32.totalorder %s15, 1
    %p98 = por %p96, %p97
    %p100 = scmp.ne.s32.totalorder %s83, %s99
    %p101 = scmp.eq.s32.totalorder %s15, 0
    %p102 = por %p100, %p101
    %s103 = ssub.s32 %s16, %s42
    %s104 = ssub.s32 %s19, %s30
    %s105 = sor.u32 %s103, %s104
    %s106 = ssub.s32 %s17, %s38
    %s107 = sor.u32 %s105, %s106
    %p108 = scmp.eq.s32.totalorder %s107, 0
    %s110 = sadd.s32 %s109, 1
    %s111 = scalar_select %p108, %s109, %s110
    %p114 = pneg %p108
    %p115 = scmp.eq.s32.totalorder %s9, 1
    %p116 = por %p114, %p115
    %p117 = scmp.ne.s32.totalorder %s109, %s112
    %p118 = scmp.eq.s32.totalorder %s9, 0
    %p119 = por %p117, %p118
    %p120 = scmp.ne.s32.totalorder %s109, %s112
    %p121 = scmp.eq.s32.totalorder %s14, 1
    %p122 = por %p120, %p121
    %p123 = scmp.ne.s32.totalorder %s112, %s113
    %p124 = scmp.eq.s32.totalorder %s14, 0
    %p125 = por %p123, %p124
    %p126 = scmp.ne.s32.totalorder %s112, %s113
    %p127 = scmp.eq.s32.totalorder %s15, 1
    %p128 = por %p126, %p127
    %p130 = scmp.ne.s32.totalorder %s113, %s129
    %p131 = scmp.eq.s32.totalorder %s15, 0
    %p132 = por %p130, %p131
    %s133 = ssub.s32 %s16, %s42
    %s134 = ssub.s32 %s18, %s34
    %s135 = sor.u32 %s133, %s134
    %s136 = ssub.s32 %s17, %s38
    %s137 = sor.u32 %s135, %s136
    %p138 = scmp.eq.s32.totalorder %s137, 0
    %s140 = sadd.s32 %s139, 1
    %s141 = scalar_select %p138, %s139, %s140
    %p144 = pneg %p138
    %p145 = scmp.eq.s32.totalorder %s9, 1
    %p146 = por %p144, %p145
    %p147 = scmp.ne.s32.totalorder %s139, %s142
    %p148 = scmp.eq.s32.totalorder %s9, 0
    %p149 = por %p147, %p148
    %p150 = scmp.ne.s32.totalorder %s139, %s142
    %p151 = scmp.eq.s32.totalorder %s14, 1
    %p152 = por %p150, %p151
    %p153 = scmp.ne.s32.totalorder %s142, %s143
    %p154 = scmp.eq.s32.totalorder %s14, 0
    %p155 = por %p153, %p154
    %p156 = scmp.ne.s32.totalorder %s142, %s143
    %p157 = scmp.eq.s32.totalorder %s15, 1
    %p158 = por %p156, %p157
    %p160 = scmp.ne.s32.totalorder %s143, %s159
    %p161 = scmp.eq.s32.totalorder %s15, 0
    %p162 = por %p160, %p161
    %p163 = scmp.le.s32.totalorder 1, %s9
    %p164 = scmp.lt.s32.totalorder %s9, 3
    %p165 = pnand %p163, %p164
    %p166 = pneg %p165
    // Predicated region
    $region9: #{transformer_forward.24} parent=5 // pred_check
      _
    $region10: #{transformer_forward.24} parent=5 // pred_check_branch
      %168 = sbr.rel (%p165) target = $region12
    $region11: #{transformer_forward.24} parent=5 // pred_region
      %s169 = ssub.s32 %s9, 1
    $region12: #{transformer_forward.24} parent=5 // pred_fallthru
      _
    %p170 = scmp.lt.s32.totalorder %s9, 2
    // Predicated region
    $region13: #{transformer_forward.24} parent=5 // pred_check
      %p171 = pneg %p170
    $region14: #{transformer_forward.24} parent=5 // pred_check_branch
      %173 = sbr.rel (%p171) target = $region16
    $region15: #{transformer_forward.24} parent=5 // pred_region
      // Predicated region
      $region17: #{transformer_forward.24} parent=15 // pred_check
        %p174 = pneg %p59
      $region18: #{transformer_forward.24} parent=15 // pred_check_branch
        %176 = sbr.rel (%p174) target = $region20
      $region19: #{transformer_forward.24} parent=15 // pred_region
        %p177 = scmp.lt.s32.totalorder %s16, 1
        %s178 = scalar_select %p177, %s16, 1
        %p179 = scmp.lt.s32.totalorder %s18, 0
        %s180 = scalar_select %p179, %s18, 0
        %p181 = scmp.lt.s32.totalorder %s17, 0
        %s182 = scalar_select %p181, %s17, 0
        %s183 = sadd.s32 %s182, %s180
        %s184 = sadd.s32 %s183, %s178
        %s185 = smul.addr %s184, 8
        %s186 = scalar_lea.vmem %s0, %s185
      $region20: #{transformer_forward.24} parent=15 // pred_fallthru
        _
      // Predicated region
      $region21: #{transformer_forward.24} parent=15 // pred_check
        %p187 = pneg %p89
      $region22: #{transformer_forward.24} parent=15 // pred_check_branch
        %189 = sbr.rel (%p187) target = $region24
      $region23: #{transformer_forward.24} parent=15 // pred_region
        %p190 = scmp.lt.s32.totalorder %s16, 1
        %s191 = scalar_select %p190, %s16, 1
        %p192 = scmp.lt.s32.totalorder %s19, 0
        %s193 = scalar_select %p192, %s19, 0
        %p194 = scmp.lt.s32.totalorder %s17, 0
        %s195 = scalar_select %p194, %s17, 0
        %s196 = sadd.s32 %s195, %s193
        %s197 = sadd.s32 %s196, %s191
        %s198 = smul.addr %s197, 8
        %s199 = scalar_lea.vmem %s1, %s198
      $region24: #{transformer_forward.24} parent=15 // pred_fallthru
        _
      // Predicated region
      $region25: #{transformer_forward.24} parent=15 // pred_check
        %p200 = pneg %p119
      $region26: #{transformer_forward.24} parent=15 // pred_check_branch
        %202 = sbr.rel (%p200) target = $region28
      $region27: #{transformer_forward.24} parent=15 // pred_region
        %p203 = scmp.lt.s32.totalorder %s16, 1
        %s204 = scalar_select %p203, %s16, 1
        %p205 = scmp.lt.s32.totalorder %s19, 0
        %s206 = scalar_select %p205, %s19, 0
        %p207 = scmp.lt.s32.totalorder %s17, 0
        %s208 = scalar_select %p207, %s17, 0
        %s209 = sadd.s32 %s208, %s206
        %s210 = sadd.s32 %s209, %s204
        %s211 = smul.addr %s210, 8
        %s212 = scalar_lea.vmem %s2, %s211
      $region28: #{transformer_forward.24} parent=15 // pred_fallthru
        _
    $region16: #{transformer_forward.24} parent=5 // pred_fallthru
      _
    %p213 = scmp.le.s32.totalorder 1, %s9
    %p214 = scmp.lt.s32.totalorder %s9, 3
    %p215 = pnand %p213, %p214
    %p216 = pneg %p215
    // Predicated region
    $region29: #{transformer_forward.24} parent=5 // pred_check
      _
    $region30: #{transformer_forward.24} parent=5 // pred_check_branch
      %218 = sbr.rel (%p215) target = $region32
    $region31: #{transformer_forward.24} parent=5 // pred_region
      %s219 = ssub.s32 %s9, 1
      %p220 = scmp.lt.s32.totalorder %s20, 1
      %s221 = scalar_select %p220, %s20, 1
      %p222 = scmp.lt.s32.totalorder %s22, 0
      %s223 = scalar_select %p222, %s22, 0
      %p224 = scmp.lt.s32.totalorder %s21, 0
      %s225 = scalar_select %p224, %s21, 0
      %s226 = sadd.s32 %s225, %s223
      %s227 = sadd.s32 %s226, %s221
      %s228 = smul.addr %s227, 8
      %s229 = scalar_lea.vmem %s0, %s228
      %p230 = pneg %p65
      %p231 = pneg %p62
      %p232 = scmp.lt.s32.totalorder %s20, 1
      %s233 = scalar_select %p232, %s20, 1
      %p234 = scmp.lt.s32.totalorder %s23, 0
      %s235 = scalar_select %p234, %s23, 0
      %p236 = scmp.lt.s32.totalorder %s21, 0
      %s237 = scalar_select %p236, %s21, 0
      %s238 = sadd.s32 %s237, %s235
      %s239 = sadd.s32 %s238, %s233
      %s240 = smul.addr %s239, 8
      %s241 = scalar_lea.vmem %s1, %s240
      %p242 = pneg %p95
      %p243 = pneg %p92
      %p244 = scmp.lt.s32.totalorder %s20, 1
      %s245 = scalar_select %p244, %s20, 1
      %p246 = scmp.lt.s32.totalorder %s23, 0
      %s247 = scalar_select %p246, %s23, 0
      %p248 = scmp.lt.s32.totalorder %s21, 0
      %s249 = scalar_select %p248, %s21, 0
      %s250 = sadd.s32 %s249, %s247
      %s251 = sadd.s32 %s250, %s245
      %s252 = smul.addr %s251, 8
      %s253 = scalar_lea.vmem %s2, %s252
      %p254 = pneg %p125
      %p255 = pneg %p122
      %p256 = pneg %p155
      %p257 = pneg %p152
      %p258 = scmp.lt.s32.totalorder %s20, 1
      %s259 = scalar_select %p258, %s20, 1
      %p260 = scmp.lt.s32.totalorder %s22, 0
      %s261 = scalar_select %p260, %s22, 0
      %p262 = scmp.lt.s32.totalorder %s21, 0
      %s263 = scalar_select %p262, %s21, 0
      %s264 = sadd.s32 %s263, %s261
      %s265 = sadd.s32 %s264, %s259
      %s266 = smul.addr %s265, 8
      %s267 = scalar_lea.vmem %s3, %s266
      %p268 = scmp.lt.s32.totalorder %s20, 1
      %s269 = scalar_select %p268, %s20, 1
      %p270 = scmp.lt.s32.totalorder %s22, 0
      %s271 = scalar_select %p270, %s22, 0
      %p272 = scmp.lt.s32.totalorder %s21, 0
      %s273 = scalar_select %p272, %s21, 0
      %s274 = sadd.s32 %s273, %s271
      %s275 = sadd.s32 %s274, %s269
      %s276 = smul.addr %s275, 8
      %s277 = scalar_lea.vmem %s0, %s276
      %p278 = scmp.lt.s32.totalorder %s20, 1
      %s279 = scalar_select %p278, %s20, 1
      %p280 = scmp.lt.s32.totalorder %s23, 0
      %s281 = scalar_select %p280, %s23, 0
      %p282 = scmp.lt.s32.totalorder %s21, 0
      %s283 = scalar_select %p282, %s21, 0
      %s284 = sadd.s32 %s283, %s281
      %s285 = sadd.s32 %s284, %s279
      %s286 = smul.addr %s285, 8
      %s287 = scalar_lea.vmem %s1, %s286
      %p288 = scmp.lt.s32.totalorder %s20, 1
      %s289 = scalar_select %p288, %s20, 1
      %p290 = scmp.lt.s32.totalorder %s23, 0
      %s291 = scalar_select %p290, %s23, 0
      %p292 = scmp.lt.s32.totalorder %s21, 0
      %s293 = scalar_select %p292, %s21, 0
      %s294 = sadd.s32 %s293, %s291
      %s295 = sadd.s32 %s294, %s289
      %s296 = smul.addr %s295, 8
      %s297 = scalar_lea.vmem %s2, %s296
      %p298 = scmp.lt.s32.totalorder %s20, 1
      %s299 = scalar_select %p298, %s20, 1
      %p300 = scmp.lt.s32.totalorder %s22, 0
      %s301 = scalar_select %p300, %s22, 0
      %p302 = scmp.lt.s32.totalorder %s21, 0
      %s303 = scalar_select %p302, %s21, 0
      %s304 = sadd.s32 %s303, %s301
      %s305 = sadd.s32 %s304, %s299
      %s306 = smul.addr %s305, 8
      %s307 = scalar_lea.vmem %s3, %s306
      %p309 = scmp.eq.s32.totalorder %s23, 0
      // Predicated region
      $region33: #{transformer_forward.24} parent=31 // pred_check
        %p310 = pneg %p309
      $region34: #{transformer_forward.24} parent=31 // pred_check_branch
        %312 = sbr.rel (%p310) target = $region36
      $region35: #{transformer_forward.24} parent=31 // pred_region
        %vm313 = vcmask 7168
        %314 = vst.msk [vmem:[#allocation2] sm:$0xff] %vm313, -inf
        %315 = vst.msk [vmem:[#allocation2 + $0x8] sm:$0xff] %vm313, -inf
        %316 = vst.msk [vmem:[#allocation2 + $0x10] sm:$0xff] %vm313, -inf
        %317 = vst.msk [vmem:[#allocation2 + $0x18] sm:$0xff] %vm313, -inf
        %318 = vst.msk [vmem:[#allocation3] sm:$0xff] %vm313, 0.0
        %319 = vst.msk [vmem:[#allocation3 + $0x8] sm:$0xff] %vm313, 0.0
        %320 = vst.msk [vmem:[#allocation3 + $0x10] sm:$0xff] %vm313, 0.0
        %321 = vst.msk [vmem:[#allocation3 + $0x18] sm:$0xff] %vm313, 0.0
        %vm322 = vcmask 261120
        %323 = vst.msk [vmem:[#allocation4] sm:$0xff] %vm322, 0.0
        %324 = vst.msk [vmem:[#allocation4 + $0x8] sm:$0xff] %vm322, 0.0
        %325 = vst.msk [vmem:[#allocation4 + $0x10] sm:$0xff] %vm322, 0.0
        %326 = vst.msk [vmem:[#allocation4 + $0x18] sm:$0xff] %vm322, 0.0
      $region36: #{transformer_forward.24} parent=31 // pred_fallthru
        _
      %v327 = vld [vmem:[%s277] sm:$0xff]
      %v328 = vld [vmem:[%s287] sm:$0xff]
      %v329 = vld [vmem:[%s297] sm:$0xff]
      %v330 = vpack.c.bf16 %v327, %v327
      %v331 = vpack.c.bf16 %v328, %v328
      %v332 = vpack.c.bf16 %v329, %v329
      %vm333 = vcmask 261120
      %v335 = vsel %vm333, %v330, 0
      %v338 = vsel %vm333, %v331, 0
      %340 = vmatprep.subr.bf16.mxu0 0
      %341 = vmatpush1.bf16.xpose.msra.mxu0 %v338
      %342 = vmatprep.subr.bf16.mxu0 0
      %343 = vmatpush1.bf16.xpose.msra.mxu0 0
      %344 = vmatprep.subr.bf16.mxu0 0
      %345 = vmatpush1.bf16.xpose.msra.mxu0 0
      %346 = vmatprep.subr.bf16.mxu0 0
      %347 = vmatpush1.bf16.xpose.msra.mxu0 0
      %348 = vmatprep.subr.bf16.mxu0 0
      %349 = vmatpush1.bf16.xpose.msra.mxu0 0
      %350 = vmatprep.subr.bf16.mxu0 0
      %351 = vmatpush1.bf16.xpose.msra.mxu0 0
      %352 = vmatprep.subr.bf16.mxu0 0
      %353 = vmatpush1.bf16.xpose.msra.mxu0 0
      %354 = vmatprep.subr.bf16.mxu0 0
      %355 = vmatpush1.bf16.xpose.msra.mxu0 0
      %356 = vmatprep.subr.bf16.mxu0 0
      %357 = vmatpush1.bf16.xpose.msra.mxu0 0
      %358 = vmatprep.subr.bf16.mxu0 0
      %359 = vmatpush1.bf16.xpose.msra.mxu0 0
      %360 = vmatprep.subr.bf16.mxu0 0
      %361 = vmatpush1.bf16.xpose.msra.mxu0 0
      %362 = vmatprep.subr.bf16.mxu0 0
      %363 = vmatpush1.bf16.xpose.msra.mxu0 0
      %364 = vmatprep.subr.bf16.mxu0 0
      %365 = vmatpush1.bf16.xpose.msra.mxu0 0
      %366 = vmatprep.subr.bf16.mxu0 0
      %367 = vmatpush1.bf16.xpose.msra.mxu0 0
      %368 = vmatprep.subr.bf16.mxu0 0
      %369 = vmatpush1.bf16.xpose.msra.mxu0 0
      %370 = vmatprep.subr.bf16.mxu0 0
      %371 = vmatpush1.bf16.xpose.msra.mxu0 0
      %372 = vmatprep.mubr.bf16.mxu0 0
      %373 = vmatmul.mubr.bf16.gmra.mrb[0].mxu0 %v335
      %v374 = vpop.f32.mrb[0].mxu0
      %v375 = vadd.f32 0.0, %v374
      %v376 = vpop.f32.mrb[0].mxu0
      %v377 = vpop.f32.mrb[0].mxu0
      %v378 = vpop.f32.mrb[0].mxu0
      %379 = vdwg.mxu0
      %v380 = vld [vmem:[#allocation2] sm:$0xff]
      %v381 = vld [vmem:[#allocation3] sm:$0xff]
      %vm382 = vcmask 64512
      %v383 = vsel %vm382, %v375, -inf
      %384 = vmax.xlane.f32.xlu0 %v383
      %v385 = vpop.xlane.xlu0 %384
      %v386 = vmax.f32 %v380, %v385
      %v387 = vsub.f32 %v380, %v386
      %v388 = vmul.f32 %v387, 1.442695
      %v389 = vpow.pop %v388
      %391 = vset.pattern.permute.xlu0 0
      %392 = vperm.xlu0 %391, %v386
      %v393 = vpop.permute.xlu0 %392
      %v395 = vsub.f32 %v375, %v393
      %v396 = vmul.f32 %v395, 1.442695
      %v397 = vpow.pop %v396
      %v398 = vmul.f32 %v389, %v381
      %v399 = vsel %vm382, %v397, 0.0
      %400 = vadd.xlane.f32.xlu0 %v399
      %v401 = vpop.xlane.xlu0 %400
      %v402 = vadd.f32 %v398, %v401
      %vm403 = vcmask 7168
      %404 = vst.msk [vmem:[#allocation3] sm:$0xff] %vm403, %v402
      %v405 = vld [vmem:[#allocation4] sm:$0xff]
      %407 = vset.pattern.permute.xlu0 0
      %408 = vperm.xlu0 %407, %v389
      %v409 = vpop.permute.xlu0 %408
      %v411 = vmul.f32 %v409, %v405
      %v412 = vpack.c.bf16 %v397, %v397
      %v414 = vsel %vm382, %v412, 0
      %vm416 = vcmask 1043456
      %v418 = vsel %vm416, %v332, 0
      %420 = vmatprep.subr.bf16.mxu0 0
      %421 = vmatpush1.bf16.msra.mxu0 %v418
      %422 = vmatprep.subr.bf16.mxu0 0
      %423 = vmatpush1.bf16.msra.mxu0 0
      %424 = vmatprep.subr.bf16.mxu0 0
      %425 = vmatpush1.bf16.msra.mxu0 0
      %426 = vmatprep.subr.bf16.mxu0 0
      %427 = vmatpush1.bf16.msra.mxu0 0
      %428 = vmatprep.subr.bf16.mxu0 0
      %429 = vmatpush1.bf16.msra.mxu0 0
      %430 = vmatprep.subr.bf16.mxu0 0
      %431 = vmatpush1.bf16.msra.mxu0 0
      %432 = vmatprep.subr.bf16.mxu0 0
      %433 = vmatpush1.bf16.msra.mxu0 0
      %434 = vmatprep.subr.bf16.mxu0 0
      %435 = vmatpush1.bf16.msra.mxu0 0
      %436 = vmatprep.subr.bf16.mxu0 0
      %437 = vmatpush1.bf16.msra.mxu0 0
      %438 = vmatprep.subr.bf16.mxu0 0
      %439 = vmatpush1.bf16.msra.mxu0 0
      %440 = vmatprep.subr.bf16.mxu0 0
      %441 = vmatpush1.bf16.msra.mxu0 0
      %442 = vmatprep.subr.bf16.mxu0 0
      %443 = vmatpush1.bf16.msra.mxu0 0
      %444 = vmatprep.subr.bf16.mxu0 0
      %445 = vmatpush1.bf16.msra.mxu0 0
      %446 = vmatprep.subr.bf16.mxu0 0
      %447 = vmatpush1.bf16.msra.mxu0 0
      %448 = vmatprep.subr.bf16.mxu0 0
      %449 = vmatpush1.bf16.msra.mxu0 0
      %450 = vmatprep.subr.bf16.mxu0 0
      %451 = vmatpush1.bf16.msra.mxu0 0
      %452 = vmatprep.mubr.bf16.mxu0 0
      %453 = vmatmul.mubr.bf16.gmra.mrb[0].mxu0 %v414
      %v454 = vpop.f32.mrb[0].mxu0
      %v455 = vadd.f32 0.0, %v454
      %v456 = vpop.f32.mrb[0].mxu0
      %v457 = vpop.f32.mrb[0].mxu0
      %v458 = vpop.f32.mrb[0].mxu0
      %459 = vdwg.mxu0
      %v460 = vadd.f32 %v411, %v455
      %461 = vst.msk [vmem:[#allocation4] sm:$0xff] %vm333, %v460
      %462 = vst.msk [vmem:[#allocation2] sm:$0xff] %vm403, %v386
      %464 = vrot.lane.b32.xlu0 %v330, 96
      %v465 = vpop.permute.xlu0 %464
      %467 = vrot.lane.b32.xlu0 %v331, 96
      %v468 = vpop.permute.xlu0 %467
      %v470 = vsel %vm333, %v465, 0
      %v473 = vsel %vm333, %v468, 0
      %475 = vmatprep.subr.bf16.mxu0 0
      %476 = vmatpush1.bf16.xpose.msra.mxu0 %v473
      %477 = vmatprep.subr.bf16.mxu0 0
      %478 = vmatpush1.bf16.xpose.msra.mxu0 0
      %479 = vmatprep.subr.bf16.mxu0 0
      %480 = vmatpush1.bf16.xpose.msra.mxu0 0
      %481 = vmatprep.subr.bf16.mxu0 0
      %482 = vmatpush1.bf16.xpose.msra.mxu0 0
      %483 = vmatprep.subr.bf16.mxu0 0
      %484 = vmatpush1.bf16.xpose.msra.mxu0 0
      %485 = vmatprep.subr.bf16.mxu0 0
      %486 = vmatpush1.bf16.xpose.msra.mxu0 0
      %487 = vmatprep.subr.bf16.mxu0 0
      %488 = vmatpush1.bf16.xpose.msra.mxu0 0
      %489 = vmatprep.subr.bf16.mxu0 0
      %490 = vmatpush1.bf16.xpose.msra.mxu0 0
      %491 = vmatprep.subr.bf16.mxu0 0
      %492 = vmatpush1.bf16.xpose.msra.mxu0 0
      %493 = vmatprep.subr.bf16.mxu0 0
      %494 = vmatpush1.bf16.xpose.msra.mxu0 0
      %495 = vmatprep.subr.bf16.mxu0 0
      %496 = vmatpush1.bf16.xpose.msra.mxu0 0
      %497 = vmatprep.subr.bf16.mxu0 0
      %498 = vmatpush1.bf16.xpose.msra.mxu0 0
      %499 = vmatprep.subr.bf16.mxu0 0
      %500 = vmatpush1.bf16.xpose.msra.mxu0 0
      %501 = vmatprep.subr.bf16.mxu0 0
      %502 = vmatpush1.bf16.xpose.msra.mxu0 0
      %503 = vmatprep.subr.bf16.mxu0 0
      %504 = vmatpush1.bf16.xpose.msra.mxu0 0
      %505 = vmatprep.subr.bf16.mxu0 0
      %506 = vmatpush1.bf16.xpose.msra.mxu0 0
      %507 = vmatprep.mubr.bf16.mxu0 0
      %508 = vmatmul.mubr.bf16.gmra.mrb[0].mxu0 %v470
      %v509 = vpop.f32.mrb[0].mxu0
      %v510 = vadd.f32 0.0, %v509
      %v511 = vpop.f32.mrb[0].mxu0
      %v512 = vpop.f32.mrb[0].mxu0
      %v513 = vpop.f32.mrb[0].mxu0
      %514 = vdwg.mxu0
      %s515 = scalar_lea.vmem [#allocation2], 8
      %v516 = vld [vmem:[%s515] sm:$0xff]
      %s517 = scalar_lea.vmem [#allocation3], 8
      %v518 = vld [vmem:[%s517] sm:$0xff]
      %v519 = vsel %vm382, %v510, -inf
      %520 = vmax.xlane.f32.xlu0 %v519
      %v521 = vpop.xlane.xlu0 %520
      %v522 = vmax.f32 %v516, %v521
      %v523 = vsub.f32 %v516, %v522
      %v524 = vmul.f32 %v523, 1.442695
      %v525 = vpow.pop %v524
      %527 = vset.pattern.permute.xlu0 0
      %528 = vperm.xlu0 %527, %v522
      %v529 = vpop.permute.xlu0 %528
      %v531 = vsub.f32 %v510, %v529
      %v532 = vmul.f32 %v531, 1.442695
      %v533 = vpow.pop %v532
      %v534 = vmul.f32 %v525, %v518
      %v535 = vsel %vm382, %v533, 0.0
      %536 = vadd.xlane.f32.xlu0 %v535
      %v537 = vpop.xlane.xlu0 %536
      %v538 = vadd.f32 %v534, %v537
      %539 = vst.msk [vmem:[%s517] sm:$0xff] %vm403, %v538
      %s540 = scalar_lea.vmem [#allocation4], 8
      %v541 = vld [vmem:[%s540] sm:$0xff]
      %543 = vset.pattern.permute.xlu0 0
      %544 = vperm.xlu0 %543, %v525
      %v545 = vpop.permute.xlu0 %544
      %v547 = vmul.f32 %v545, %v541
      %v548 = vpack.c.bf16 %v533, %v533
      %550 = vrot.lane.b32.xlu0 %v332, 96
      %v551 = vpop.permute.xlu0 %550
      %v553 = vsel %vm382, %v548, 0
      %v556 = vsel %vm416, %v551, 0
      %558 = vmatprep.subr.bf16.mxu0 0
      %559 = vmatpush1.bf16.msra.mxu0 %v556
      %560 = vmatprep.subr.bf16.mxu0 0
      %561 = vmatpush1.bf16.msra.mxu0 0
      %562 = vmatprep.subr.bf16.mxu0 0
      %563 = vmatpush1.bf16.msra.mxu0 0
      %564 = vmatprep.subr.bf16.mxu0 0
      %565 = vmatpush1.bf16.msra.mxu0 0
      %566 = vmatprep.subr.bf16.mxu0 0
      %567 = vmatpush1.bf16.msra.mxu0 0
      %568 = vmatprep.subr.bf16.mxu0 0
      %569 = vmatpush1.bf16.msra.mxu0 0
      %570 = vmatprep.subr.bf16.mxu0 0
      %571 = vmatpush1.bf16.msra.mxu0 0
      %572 = vmatprep.subr.bf16.mxu0 0
      %573 = vmatpush1.bf16.msra.mxu0 0
      %574 = vmatprep.subr.bf16.mxu0 0
      %575 = vmatpush1.bf16.msra.mxu0 0
      %576 = vmatprep.subr.bf16.mxu0 0
      %577 = vmatpush1.bf16.msra.mxu0 0
      %578 = vmatprep.subr.bf16.mxu0 0
      %579 = vmatpush1.bf16.msra.mxu0 0
      %580 = vmatprep.subr.bf16.mxu0 0
      %581 = vmatpush1.bf16.msra.mxu0 0
      %582 = vmatprep.subr.bf16.mxu0 0
      %583 = vmatpush1.bf16.msra.mxu0 0
      %584 = vmatprep.subr.bf16.mxu0 0
      %585 = vmatpush1.bf16.msra.mxu0 0
      %586 = vmatprep.subr.bf16.mxu0 0
      %587 = vmatpush1.bf16.msra.mxu0 0
      %588 = vmatprep.subr.bf16.mxu0 0
      %589 = vmatpush1.bf16.msra.mxu0 0
      %590 = vmatprep.mubr.bf16.mxu0 0
      %591 = vmatmul.mubr.bf16.gmra.mrb[0].mxu0 %v553
      %v592 = vpop.f32.mrb[0].mxu0
      %v593 = vadd.f32 0.0, %v592
      %v594 = vpop.f32.mrb[0].mxu0
      %v595 = vpop.f32.mrb[0].mxu0
      %v596 = vpop.f32.mrb[0].mxu0
      %597 = vdwg.mxu0
      %v598 = vadd.f32 %v547, %v593
      %599 = vst.msk [vmem:[%s540] sm:$0xff] %vm333, %v598
      %600 = vst.msk [vmem:[%s515] sm:$0xff] %vm403, %v522
      %601 = vrot.lane.b32.xlu0 %v330, 64
      %v602 = vpop.permute.xlu0 %601
      %603 = vrot.lane.b32.xlu0 %v331, 64
      %v604 = vpop.permute.xlu0 %603
      %v606 = vsel %vm333, %v602, 0
      %v609 = vsel %vm333, %v604, 0
      %611 = vmatprep.subr.bf16.mxu0 0
      %612 = vmatpush1.bf16.xpose.msra.mxu0 %v609
      %613 = vmatprep.subr.bf16.mxu0 0
      %614 = vmatpush1.bf16.xpose.msra.mxu0 0
      %615 = vmatprep.subr.bf16.mxu0 0
      %616 = vmatpush1.bf16.xpose.msra.mxu0 0
      %617 = vmatprep.subr.bf16.mxu0 0
      %618 = vmatpush1.bf16.xpose.msra.mxu0 0
      %619 = vmatprep.subr.bf16.mxu0 0
      %620 = vmatpush1.bf16.xpose.msra.mxu0 0
      %621 = vmatprep.subr.bf16.mxu0 0
      %622 = vmatpush1.bf16.xpose.msra.mxu0 0
      %623 = vmatprep.subr.bf16.mxu0 0
      %624 = vmatpush1.bf16.xpose.msra.mxu0 0
      %625 = vmatprep.subr.bf16.mxu0 0
      %626 = vmatpush1.bf16.xpose.msra.mxu0 0
      %627 = vmatprep.subr.bf16.mxu0 0
      %628 = vmatpush1.bf16.xpose.msra.mxu0 0
      %629 = vmatprep.subr.bf16.mxu0 0
      %630 = vmatpush1.bf16.xpose.msra.mxu0 0
      %631 = vmatprep.subr.bf16.mxu0 0
      %632 = vmatpush1.bf16.xpose.msra.mxu0 0
      %633 = vmatprep.subr.bf16.mxu0 0
      %634 = vmatpush1.bf16.xpose.msra.mxu0 0
      %635 = vmatprep.subr.bf16.mxu0 0
      %636 = vmatpush1.bf16.xpose.msra.mxu0 0
      %637 = vmatprep.subr.bf16.mxu0 0
      %638 = vmatpush1.bf16.xpose.msra.mxu0 0
      %639 = vmatprep.subr.bf16.mxu0 0
      %640 = vmatpush1.bf16.xpose.msra.mxu0 0
      %641 = vmatprep.subr.bf16.mxu0 0
      %642 = vmatpush1.bf16.xpose.msra.mxu0 0
      %643 = vmatprep.mubr.bf16.mxu0 0
      %644 = vmatmul.mubr.bf16.gmra.mrb[0].mxu0 %v606
      %v645 = vpop.f32.mrb[0].mxu0
      %v646 = vadd.f32 0.0, %v645
      %v647 = vpop.f32.mrb[0].mxu0
      %v648 = vpop.f32.mrb[0].mxu0
      %v649 = vpop.f32.mrb[0].mxu0
      %650 = vdwg.mxu0
      %s651 = scalar_lea.vmem [#allocation2], 16
      %v652 = vld [vmem:[%s651] sm:$0xff]
      %s653 = scalar_lea.vmem [#allocation3], 16
      %v654 = vld [vmem:[%s653] sm:$0xff]
      %v655 = vsel %vm382, %v646, -inf
      %656 = vmax.xlane.f32.xlu0 %v655
      %v657 = vpop.xlane.xlu0 %656
      %v658 = vmax.f32 %v652, %v657
      %v659 = vsub.f32 %v652, %v658
      %v660 = vmul.f32 %v659, 1.442695
      %v661 = vpow.pop %v660
      %663 = vset.pattern.permute.xlu0 0
      %664 = vperm.xlu0 %663, %v658
      %v665 = vpop.permute.xlu0 %664
      %v667 = vsub.f32 %v646, %v665
      %v668 = vmul.f32 %v667, 1.442695
      %v669 = vpow.pop %v668
      %v670 = vmul.f32 %v661, %v654
      %v671 = vsel %vm382, %v669, 0.0
      %672 = vadd.xlane.f32.xlu0 %v671
      %v673 = vpop.xlane.xlu0 %672
      %v674 = vadd.f32 %v670, %v673
      %675 = vst.msk [vmem:[%s653] sm:$0xff] %vm403, %v674
      %s676 = scalar_lea.vmem [#allocation4], 16
      %v677 = vld [vmem:[%s676] sm:$0xff]
      %679 = vset.pattern.permute.xlu0 0
      %680 = vperm.xlu0 %679, %v661
      %v681 = vpop.permute.xlu0 %680
      %v683 = vmul.f32 %v681, %v677
      %v684 = vpack.c.bf16 %v669, %v669
      %685 = vrot.lane.b32.xlu0 %v332, 64
      %v686 = vpop.permute.xlu0 %685
      %v688 = vsel %vm382, %v684, 0
      %v691 = vsel %vm416, %v686, 0
      %693 = vmatprep.subr.bf16.mxu0 0
      %694 = vmatpush1.bf16.msra.mxu0 %v691
      %695 = vmatprep.subr.bf16.mxu0 0
      %696 = vmatpush1.bf16.msra.mxu0 0
      %697 = vmatprep.subr.bf16.mxu0 0
      %698 = vmatpush1.bf16.msra.mxu0 0
      %699 = vmatprep.subr.bf16.mxu0 0
      %700 = vmatpush1.bf16.msra.mxu0 0
      %701 = vmatprep.subr.bf16.mxu0 0
      %702 = vmatpush1.bf16.msra.mxu0 0
      %703 = vmatprep.subr.bf16.mxu0 0
      %704 = vmatpush1.bf16.msra.mxu0 0
      %705 = vmatprep.subr.bf16.mxu0 0
      %706 = vmatpush1.bf16.msra.mxu0 0
      %707 = vmatprep.subr.bf16.mxu0 0
      %708 = vmatpush1.bf16.msra.mxu0 0
      %709 = vmatprep.subr.bf16.mxu0 0
      %710 = vmatpush1.bf16.msra.mxu0 0
      %711 = vmatprep.subr.bf16.mxu0 0
      %712 = vmatpush1.bf16.msra.mxu0 0
      %713 = vmatprep.subr.bf16.mxu0 0
      %714 = vmatpush1.bf16.msra.mxu0 0
      %715 = vmatprep.subr.bf16.mxu0 0
      %716 = vmatpush1.bf16.msra.mxu0 0
      %717 = vmatprep.subr.bf16.mxu0 0
      %718 = vmatpush1.bf16.msra.mxu0 0
      %719 = vmatprep.subr.bf16.mxu0 0
      %720 = vmatpush1.bf16.msra.mxu0 0
      %721 = vmatprep.subr.bf16.mxu0 0
      %722 = vmatpush1.bf16.msra.mxu0 0
      %723 = vmatprep.subr.bf16.mxu0 0
      %724 = vmatpush1.bf16.msra.mxu0 0
      %725 = vmatprep.mubr.bf16.mxu0 0
      %726 = vmatmul.mubr.bf16.gmra.mrb[0].mxu0 %v688
      %v727 = vpop.f32.mrb[0].mxu0
      %v728 = vadd.f32 0.0, %v727
      %v729 = vpop.f32.mrb[0].mxu0
      %v730 = vpop.f32.mrb[0].mxu0
      %v731 = vpop.f32.mrb[0].mxu0
      %732 = vdwg.mxu0
      %v733 = vadd.f32 %v683, %v728
      %734 = vst.msk [vmem:[%s676] sm:$0xff] %vm333, %v733
      %735 = vst.msk [vmem:[%s651] sm:$0xff] %vm403, %v658
      %736 = vrot.lane.b32.xlu0 %v330, 32
      %v737 = vpop.permute.xlu0 %736
      %738 = vrot.lane.b32.xlu0 %v331, 32
      %v739 = vpop.permute.xlu0 %738
      %v741 = vsel %vm333, %v737, 0
      %v744 = vsel %vm333, %v739, 0
      %746 = vmatprep.subr.bf16.mxu0 0
      %747 = vmatpush1.bf16.xpose.msra.mxu0 %v744
      %748 = vmatprep.subr.bf16.mxu0 0
      %749 = vmatpush1.bf16.xpose.msra.mxu0 0
      %750 = vmatprep.subr.bf16.mxu0 0
      %751 = vmatpush1.bf16.xpose.msra.mxu0 0
      %752 = vmatprep.subr.bf16.mxu0 0
      %753 = vmatpush1.bf16.xpose.msra.mxu0 0
      %754 = vmatprep.subr.bf16.mxu0 0
      %755 = vmatpush1.bf16.xpose.msra.mxu0 0
      %756 = vmatprep.subr.bf16.mxu0 0
      %757 = vmatpush1.bf16.xpose.msra.mxu0 0
      %758 = vmatprep.subr.bf16.mxu0 0
      %759 = vmatpush1.bf16.xpose.msra.mxu0 0
      %760 = vmatprep.subr.bf16.mxu0 0
      %761 = vmatpush1.bf16.xpose.msra.mxu0 0
      %762 = vmatprep.subr.bf16.mxu0 0
      %763 = vmatpush1.bf16.xpose.msra.mxu0 0
      %764 = vmatprep.subr.bf16.mxu0 0
      %765 = vmatpush1.bf16.xpose.msra.mxu0 0
      %766 = vmatprep.subr.bf16.mxu0 0
      %767 = vmatpush1.bf16.xpose.msra.mxu0 0
      %768 = vmatprep.subr.bf16.mxu0 0
      %769 = vmatpush1.bf16.xpose.msra.mxu0 0
      %770 = vmatprep.subr.bf16.mxu0 0
      %771 = vmatpush1.bf16.xpose.msra.mxu0 0
      %772 = vmatprep.subr.bf16.mxu0 0
      %773 = vmatpush1.bf16.xpose.msra.mxu0 0
      %774 = vmatprep.subr.bf16.mxu0 0
      %775 = vmatpush1.bf16.xpose.msra.mxu0 0
      %776 = vmatprep.subr.bf16.mxu0 0
      %777 = vmatpush1.bf16.xpose.msra.mxu0 0
      %778 = vmatprep.mubr.bf16.mxu0 0
      %779 = vmatmul.mubr.bf16.gmra.mrb[0].mxu0 %v741
      %v780 = vpop.f32.mrb[0].mxu0
      %v781 = vadd.f32 0.0, %v780
      %v782 = vpop.f32.mrb[0].mxu0
      %v783 = vpop.f32.mrb[0].mxu0
      %v784 = vpop.f32.mrb[0].mxu0
      %785 = vdwg.mxu0
      %s786 = scalar_lea.vmem [#allocation2], 24
      %v787 = vld [vmem:[%s786] sm:$0xff]
      %s788 = scalar_lea.vmem [#allocation3], 24
      %v789 = vld [vmem:[%s788] sm:$0xff]
      %v790 = vsel %vm382, %v781, -inf
      %791 = vmax.xlane.f32.xlu0 %v790
      %v792 = vpop.xlane.xlu0 %791
      %v793 = vmax.f32 %v787, %v792
      %v794 = vsub.f32 %v787, %v793
      %v795 = vmul.f32 %v794, 1.442695
      %v796 = vpow.pop %v795
      %798 = vset.pattern.permute.xlu0 0
      %799 = vperm.xlu0 %798, %v793
      %v800 = vpop.permute.xlu0 %799
      %v802 = vsub.f32 %v781, %v800
      %v803 = vmul.f32 %v802, 1.442695
      %v804 = vpow.pop %v803
      %v805 = vmul.f32 %v796, %v789
      %v806 = vsel %vm382, %v804, 0.0
      %807 = vadd.xlane.f32.xlu0 %v806
      %v808 = vpop.xlane.xlu0 %807
      %v809 = vadd.f32 %v805, %v808
      %810 = vst.msk [vmem:[%s788] sm:$0xff] %vm403, %v809
      %s811 = scalar_lea.vmem [#allocation4], 24
      %v812 = vld [vmem:[%s811] sm:$0xff]
      %814 = vset.pattern.permute.xlu0 0
      %815 = vperm.xlu0 %814, %v796
      %v816 = vpop.permute.xlu0 %815
      %v818 = vmul.f32 %v816, %v812
      %v819 = vpack.c.bf16 %v804, %v804
      %820 = vrot.lane.b32.xlu0 %v332, 32
      %v821 = vpop.permute.xlu0 %820
      %v823 = vsel %vm382, %v819, 0
      %v826 = vsel %vm416, %v821, 0
      %828 = vmatprep.subr.bf16.mxu0 0
      %829 = vmatpush1.bf16.msra.mxu0 %v826
      %830 = vmatprep.subr.bf16.mxu0 0
      %831 = vmatpush1.bf16.msra.mxu0 0
      %832 = vmatprep.subr.bf16.mxu0 0
      %833 = vmatpush1.bf16.msra.mxu0 0
      %834 = vmatprep.subr.bf16.mxu0 0
      %835 = vmatpush1.bf16.msra.mxu0 0
      %836 = vmatprep.subr.bf16.mxu0 0
      %837 = vmatpush1.bf16.msra.mxu0 0
      %838 = vmatprep.subr.bf16.mxu0 0
      %839 = vmatpush1.bf16.msra.mxu0 0
      %840 = vmatprep.subr.bf16.mxu0 0
      %841 = vmatpush1.bf16.msra.mxu0 0
      %842 = vmatprep.subr.bf16.mxu0 0
      %843 = vmatpush1.bf16.msra.mxu0 0
      %844 = vmatprep.subr.bf16.mxu0 0
      %845 = vmatpush1.bf16.msra.mxu0 0
      %846 = vmatprep.subr.bf16.mxu0 0
      %847 = vmatpush1.bf16.msra.mxu0 0
      %848 = vmatprep.subr.bf16.mxu0 0
      %849 = vmatpush1.bf16.msra.mxu0 0
      %850 = vmatprep.subr.bf16.mxu0 0
      %851 = vmatpush1.bf16.msra.mxu0 0
      %852 = vmatprep.subr.bf16.mxu0 0
      %853 = vmatpush1.bf16.msra.mxu0 0
      %854 = vmatprep.subr.bf16.mxu0 0
      %855 = vmatpush1.bf16.msra.mxu0 0
      %856 = vmatprep.subr.bf16.mxu0 0
      %857 = vmatpush1.bf16.msra.mxu0 0
      %858 = vmatprep.subr.bf16.mxu0 0
      %859 = vmatpush1.bf16.msra.mxu0 0
      %860 = vmatprep.mubr.bf16.mxu0 0
      %861 = vmatmul.mubr.bf16.gmra.mrb[0].mxu0 %v823
      %v862 = vpop.f32.mrb[0].mxu0
      %v863 = vadd.f32 0.0, %v862
      %v864 = vpop.f32.mrb[0].mxu0
      %v865 = vpop.f32.mrb[0].mxu0
      %v866 = vpop.f32.mrb[0].mxu0
      %867 = vdwg.mxu0
      %v868 = vadd.f32 %v818, %v863
      %869 = vst.msk [vmem:[%s811] sm:$0xff] %vm333, %v868
      %870 = vst.msk [vmem:[%s786] sm:$0xff] %vm403, %v793
      // Predicated region
      $region37: #{transformer_forward.24} parent=31 // pred_check
        %p871 = pneg %p309
      $region38: #{transformer_forward.24} parent=31 // pred_check_branch
        %873 = sbr.rel (%p871) target = $region40
      $region39: #{transformer_forward.24} parent=31 // pred_region
        %v874 = vld [vmem:[#allocation4] sm:$0xff]
        %v875 = vld [vmem:[#allocation3] sm:$0xff]
        %v876 = vrcp.pop %v875
        %878 = vset.pattern.permute.xlu0 0
        %879 = vperm.xlu0 %878, %v876
        %v880 = vpop.permute.xlu0 %879
        %v882 = vmul.f32 %v874, %v880
        %v883 = vld [vmem:[%s540] sm:$0xff]
        %v884 = vld [vmem:[%s517] sm:$0xff]
        %v885 = vrcp.pop %v884
        %887 = vset.pattern.permute.xlu0 0
        %888 = vperm.xlu0 %887, %v885
        %v889 = vpop.permute.xlu0 %888
        %v891 = vmul.f32 %v883, %v889
        %v892 = vld [vmem:[%s676] sm:$0xff]
        %v893 = vld [vmem:[%s653] sm:$0xff]
        %v894 = vrcp.pop %v893
        %896 = vset.pattern.permute.xlu0 0
        %897 = vperm.xlu0 %896, %v894
        %v898 = vpop.permute.xlu0 %897
        %v900 = vmul.f32 %v892, %v898
        %v901 = vld [vmem:[%s811] sm:$0xff]
        %v902 = vld [vmem:[%s788] sm:$0xff]
        %v903 = vrcp.pop %v902
        %905 = vset.pattern.permute.xlu0 0
        %906 = vperm.xlu0 %905, %v903
        %v907 = vpop.permute.xlu0 %906
        %v909 = vmul.f32 %v901, %v907
        %911 = vrot.lane.b32.xlu0 %v891, 32
        %v912 = vpop.permute.xlu0 %911
        %915 = vrot.lane.b32.xlu0 %v900, 64
        %v916 = vpop.permute.xlu0 %915
        %919 = vrot.lane.b32.xlu0 %v909, 96
        %v920 = vpop.permute.xlu0 %919
        %v922 = vsel %vm333, %v882, %v912
        %vm923 = vcmask 523264
        %v924 = vsel %vm923, %v922, %v916
        %vm925 = vcmask 785408
        %v926 = vsel %vm925, %v924, %v920
        %927 = vst [vmem:[%s307] sm:$0xff] %v926
      $region40: #{transformer_forward.24} parent=31 // pred_fallthru
        _
      %p928 = scmp.lt.s32.totalorder %s20, 1
      %s929 = scalar_select %p928, %s20, 1
      %p930 = scmp.lt.s32.totalorder %s22, 0
      %s931 = scalar_select %p930, %s22, 0
      %p932 = scmp.lt.s32.totalorder %s21, 0
      %s933 = scalar_select %p932, %s21, 0
      %s934 = sadd.s32 %s933, %s931
      %s935 = sadd.s32 %s934, %s929
      %s936 = smul.addr %s935, 8
      %s937 = scalar_lea.vmem %s3, %s936
      // Predicated region
      $region41: #{transformer_forward.24} parent=31 // pred_check
        %p938 = pneg %p152
      $region42: #{transformer_forward.24} parent=31 // pred_check_branch
        %940 = sbr.rel (%p938) target = $region44
      $region43: #{transformer_forward.24} parent=31 // pred_region
        _
      $region44: #{transformer_forward.24} parent=31 // pred_fallthru
        _
    $region32: #{transformer_forward.24} parent=5 // pred_fallthru
      _
    %p941 = scmp.le.s32.totalorder 2, %s9
    // Predicated region
    $region45: #{transformer_forward.24} parent=5 // pred_check
      %p942 = pneg %p941
    $region46: #{transformer_forward.24} parent=5 // pred_check_branch
      %944 = sbr.rel (%p942) target = $region48
    $region47: #{transformer_forward.24} parent=5 // pred_region
      %s945 = ssub.s32 %s9, 2
      // Predicated region
      $region49: #{transformer_forward.24} parent=47 // pred_check
        %p946 = pneg %p158
      $region50: #{transformer_forward.24} parent=47 // pred_check_branch
        %948 = sbr.rel (%p946) target = $region52
      $region51: #{transformer_forward.24} parent=47 // pred_region
        %p949 = scmp.lt.s32.totalorder %s24, 1
        %s950 = scalar_select %p949, %s24, 1
        %p951 = scmp.lt.s32.totalorder %s26, 0
        %s952 = scalar_select %p951, %s26, 0
        %p953 = scmp.lt.s32.totalorder %s25, 0
        %s954 = scalar_select %p953, %s25, 0
        %s955 = sadd.s32 %s954, %s952
        %s956 = sadd.s32 %s955, %s950
        %s957 = smul.addr %s956, 8
        %s958 = scalar_lea.vmem %s3, %s957
      $region52: #{transformer_forward.24} parent=47 // pred_fallthru
        _
    $region48: #{transformer_forward.24} parent=5 // pred_fallthru
      _
  $region6: #{transformer_forward.24} parent=0 // loop_footer
    %s13 = sadd.s32 1, %s9
  $region7: #{transformer_forward.24} parent=0 // loop_footer_branch
    %8 = sbr.rel target = $region3
  $region8: #{transformer_forward.24} parent=0 // loop_exit
    _

// kernel: transformer_forward.27
$region0: #{transformer_forward.27}
  #allocation0 [shape = 'u32[]', space=smem, size = 0x4, offset = 0x4, fixed_abs, tag = 'smem constant byte address 0x4 - core index']
  #allocation1 [shape = 'u32[144,128]{1,0:T(1,128)}', space=vmem, size = 0x12000, scoped, tag = 'internal scratch']
  #allocation2 [shape = 'f32[16,128]{1,0:T(8,128)}', space=vmem, size = 0x2000, scoped, tag = 'scratch operand']
  %s0 = inlined_call_operand.vmem [shape: f32[16,512], index: 0, kind: input, shape index: {}]
  %s1 = inlined_call_operand.vmem [shape: f32[512,128], index: 1, kind: input, shape index: {}]
  %s2 = inlined_call_operand.vmem [shape: f32[1,128], index: 2, kind: input, shape index: {}]
  %s3 = inlined_call_operand.vmem [shape: f32[16,128], index: 3, kind: input, shape index: {}]
  %s4 = inlined_call_operand.vmem [shape: f32[1,128], index: 4, kind: input, shape index: {}]
  %s5 = inlined_call_operand.vmem [shape: f32[16,128], index: 5, kind: output, shape index: {}]
  %s6 = sld [smem:[#allocation0]]
  $region38: #{transformer_forward.27} parent=0
    _
  %s8 = ssub.s32 1, %s6
  %s9 = scalar_select 0, %s8, %s6
  // Predicated region
  $region2: #{transformer_forward.27} parent=0 // pred_check
    _
  $region3: #{transformer_forward.27} parent=0 // pred_check_branch
    %11 = sbr.rel (0) target = $region5
  $region4: #{transformer_forward.27} parent=0 // pred_region
    _
  $region5: #{transformer_forward.27} parent=0 // pred_fallthru
    _
  // Predicated region
  $region6: #{transformer_forward.27} parent=0 // pred_check
    _
  $region7: #{transformer_forward.27} parent=0 // pred_check_branch
    %13 = sbr.rel (0) target = $region9
  $region8: #{transformer_forward.27} parent=0 // pred_region
    _
  $region9: #{transformer_forward.27} parent=0 // pred_fallthru
    _
  // Predicated region
  $region10: #{transformer_forward.27} parent=0 // pred_check
    _
  $region11: #{transformer_forward.27} parent=0 // pred_check_branch
    %15 = sbr.rel (0) target = $region13
  $region12: #{transformer_forward.27} parent=0 // pred_region
    _
  $region13: #{transformer_forward.27} parent=0 // pred_fallthru
    _
  // Predicated region
  $region14: #{transformer_forward.27} parent=0 // pred_check
    _
  $region15: #{transformer_forward.27} parent=0 // pred_check_branch
    %17 = sbr.rel (0) target = $region17
  $region16: #{transformer_forward.27} parent=0 // pred_region
    _
  $region17: #{transformer_forward.27} parent=0 // pred_fallthru
    _
  // Predicated region
  $region18: #{transformer_forward.27} parent=0 // pred_check
    _
  $region19: #{transformer_forward.27} parent=0 // pred_check_branch
    %19 = sbr.rel (0) target = $region21
  $region20: #{transformer_forward.27} parent=0 // pred_region
    _
  $region21: #{transformer_forward.27} parent=0 // pred_fallthru
    _
  %p21 = scmp.eq.s32.totalorder 0, 0
  // Predicated region
  $region22: #{transformer_forward.27} parent=0 // pred_check
    %p22 = pneg %p21
  $region23: #{transformer_forward.27} parent=0 // pred_check_branch
    %24 = sbr.rel (%p22) target = $region25
  $region24: #{transformer_forward.27} parent=0 // pred_region
    %25 = vst [vmem:[#allocation2] sm:$0xff] 0.0
    %26 = vst [vmem:[#allocation2 + $0x8] sm:$0xff] 0.0
  $region25: #{transformer_forward.27} parent=0 // pred_fallthru
    _
  %v27 = vld [vmem:[#allocation2] sm:$0xff]
  %v28 = vld [vmem:[#allocation2 + $0x8] sm:$0xff]
  %v29 = vld [vmem:[%s0] sm:$0xff]
  %v30 = vld [vmem:[%s0 + $0x8] sm:$0xff]
  %v31 = vld [vmem:[%s0 + $0x10] sm:$0xff]
  %v32 = vld [vmem:[%s0 + $0x18] sm:$0xff]
  %v33 = vld [vmem:[%s0 + $0x20] sm:$0xff]
  %v34 = vld [vmem:[%s0 + $0x28] sm:$0xff]
  %v35 = vld [vmem:[%s0 + $0x30] sm:$0xff]
  %v36 = vld [vmem:[%s0 + $0x38] sm:$0xff]
  %v37 = vpack.c.bf16 %v33, %v29
  %v38 = vpack.c.bf16 %v34, %v30
  %v39 = vpack.c.bf16 %v35, %v31
  %v40 = vpack.c.bf16 %v36, %v32
  %v41 = vld [vmem:[%s1] sm:$0xff]
  %v42 = vld [vmem:[%s1 + $0x8] sm:$0xff]
  %v43 = vld [vmem:[%s1 + $0x10] sm:$0xff]
  %v44 = vld [vmem:[%s1 + $0x18] sm:$0xff]
  %v45 = vld [vmem:[%s1 + $0x20] sm:$0xff]
  %v46 = vld [vmem:[%s1 + $0x28] sm:$0xff]
  %v47 = vld [vmem:[%s1 + $0x30] sm:$0xff]
  %v48 = vld [vmem:[%s1 + $0x38] sm:$0xff]
  %v49 = vld [vmem:[%s1 + $0x40] sm:$0xff]
  %v50 = vld [vmem:[%s1 + $0x48] sm:$0xff]
  %v51 = vld [vmem:[%s1 + $0x50] sm:$0xff]
  %v52 = vld [vmem:[%s1 + $0x58] sm:$0xff]
  %v53 = vld [vmem:[%s1 + $0x60] sm:$0xff]
  %v54 = vld [vmem:[%s1 + $0x68] sm:$0xff]
  %v55 = vld [vmem:[%s1 + $0x70] sm:$0xff]
  %v56 = vld [vmem:[%s1 + $0x78] sm:$0xff]
  %v57 = vld [vmem:[%s1 + $0x80] sm:$0xff]
  %v58 = vld [vmem:[%s1 + $0x88] sm:$0xff]
  %v59 = vld [vmem:[%s1 + $0x90] sm:$0xff]
  %v60 = vld [vmem:[%s1 + $0x98] sm:$0xff]
  %v61 = vld [vmem:[%s1 + $0xa0] sm:$0xff]
  %v62 = vld [vmem:[%s1 + $0xa8] sm:$0xff]
  %v63 = vld [vmem:[%s1 + $0xb0] sm:$0xff]
  %v64 = vld [vmem:[%s1 + $0xb8] sm:$0xff]
  %v65 = vld [vmem:[%s1 + $0xc0] sm:$0xff]
  %v66 = vld [vmem:[%s1 + $0xc8] sm:$0xff]
  %v67 = vld [vmem:[%s1 + $0xd0] sm:$0xff]
  %v68 = vld [vmem:[%s1 + $0xd8] sm:$0xff]
  %v69 = vld [vmem:[%s1 + $0xe0] sm:$0xff]
  %v70 = vld [vmem:[%s1 + $0xe8] sm:$0xff]
  %v71 = vld [vmem:[%s1 + $0xf0] sm:$0xff]
  %v72 = vld [vmem:[%s1 + $0xf8] sm:$0xff]
  %v73 = vld [vmem:[%s1 + $0x100] sm:$0xff]
  %v74 = vld [vmem:[%s1 + $0x108] sm:$0xff]
  %v75 = vld [vmem:[%s1 + $0x110] sm:$0xff]
  %v76 = vld [vmem:[%s1 + $0x118] sm:$0xff]
  %v77 = vld [vmem:[%s1 + $0x120] sm:$0xff]
  %v78 = vld [vmem:[%s1 + $0x128] sm:$0xff]
  %v79 = vld [vmem:[%s1 + $0x130] sm:$0xff]
  %v80 = vld [vmem:[%s1 + $0x138] sm:$0xff]
  %v81 = vld [vmem:[%s1 + $0x140] sm:$0xff]
  %v82 = vld [vmem:[%s1 + $0x148] sm:$0xff]
  %v83 = vld [vmem:[%s1 + $0x150] sm:$0xff]
  %v84 = vld [vmem:[%s1 + $0x158] sm:$0xff]
  %v85 = vld [vmem:[%s1 + $0x160] sm:$0xff]
  %v86 = vld [vmem:[%s1 + $0x168] sm:$0xff]
  %v87 = vld [vmem:[%s1 + $0x170] sm:$0xff]
  %v88 = vld [vmem:[%s1 + $0x178] sm:$0xff]
  %v89 = vld [vmem:[%s1 + $0x180] sm:$0xff]
  %v90 = vld [vmem:[%s1 + $0x188] sm:$0xff]
  %v91 = vld [vmem:[%s1 + $0x190] sm:$0xff]
  %v92 = vld [vmem:[%s1 + $0x198] sm:$0xff]
  %v93 = vld [vmem:[%s1 + $0x1a0] sm:$0xff]
  %v94 = vld [vmem:[%s1 + $0x1a8] sm:$0xff]
  %v95 = vld [vmem:[%s1 + $0x1b0] sm:$0xff]
  %v96 = vld [vmem:[%s1 + $0x1b8] sm:$0xff]
  %v97 = vld [vmem:[%s1 + $0x1c0] sm:$0xff]
  %v98 = vld [vmem:[%s1 + $0x1c8] sm:$0xff]
  %v99 = vld [vmem:[%s1 + $0x1d0] sm:$0xff]
  %v100 = vld [vmem:[%s1 + $0x1d8] sm:$0xff]
  %v101 = vld [vmem:[%s1 + $0x1e0] sm:$0xff]
  %v102 = vld [vmem:[%s1 + $0x1e8] sm:$0xff]
  %v103 = vld [vmem:[%s1 + $0x1f0] sm:$0xff]
  %v104 = vld [vmem:[%s1 + $0x1f8] sm:$0xff]
  %v105 = vpack.c.bf16 %v42, %v41
  %v106 = vpack.c.bf16 %v44, %v43
  %v107 = vpack.c.bf16 %v46, %v45
  %v108 = vpack.c.bf16 %v48, %v47
  %v109 = vpack.c.bf16 %v50, %v49
  %v110 = vpack.c.bf16 %v52, %v51
  %v111 = vpack.c.bf16 %v54, %v53
  %v112 = vpack.c.bf16 %v56, %v55
  %v113 = vpack.c.bf16 %v58, %v57
  %v114 = vpack.c.bf16 %v60, %v59
  %v115 = vpack.c.bf16 %v62, %v61
  %v116 = vpack.c.bf16 %v64, %v63
  %v117 = vpack.c.bf16 %v66, %v65
  %v118 = vpack.c.bf16 %v68, %v67
  %v119 = vpack.c.bf16 %v70, %v69
  %v120 = vpack.c.bf16 %v72, %v71
  %v121 = vpack.c.bf16 %v74, %v73
  %v122 = vpack.c.bf16 %v76, %v75
  %v123 = vpack.c.bf16 %v78, %v77
  %v124 = vpack.c.bf16 %v80, %v79
  %v125 = vpack.c.bf16 %v82, %v81
  %v126 = vpack.c.bf16 %v84, %v83
  %v127 = vpack.c.bf16 %v86, %v85
  %v128 = vpack.c.bf16 %v88, %v87
  %v129 = vpack.c.bf16 %v90, %v89
  %v130 = vpack.c.bf16 %v92, %v91
  %v131 = vpack.c.bf16 %v94, %v93
  %v132 = vpack.c.bf16 %v96, %v95
  %v133 = vpack.c.bf16 %v98, %v97
  %v134 = vpack.c.bf16 %v100, %v99
  %v135 = vpack.c.bf16 %v102, %v101
  %v136 = vpack.c.bf16 %v104, %v103
  %137 = vmatprep.subr.bf16.mxu0 0
  %138 = vmatpush1.bf16.msra.mxu0 %v105
  %139 = vmatprep.subr.bf16.mxu0 0
  %140 = vmatpush1.bf16.msra.mxu0 %v106
  %141 = vmatprep.subr.bf16.mxu0 0
  %142 = vmatpush1.bf16.msra.mxu0 %v107
  %143 = vmatprep.subr.bf16.mxu0 0
  %144 = vmatpush1.bf16.msra.mxu0 %v108
  %145 = vmatprep.subr.bf16.mxu0 0
  %146 = vmatpush1.bf16.msra.mxu0 %v109
  %147 = vmatprep.subr.bf16.mxu0 0
  %148 = vmatpush1.bf16.msra.mxu0 %v110
  %149 = vmatprep.subr.bf16.mxu0 0
  %150 = vmatpush1.bf16.msra.mxu0 %v111
  %151 = vmatprep.subr.bf16.mxu0 0
  %152 = vmatpush1.bf16.msra.mxu0 %v112
  %153 = vmatprep.subr.bf16.mxu0 0
  %154 = vmatpush1.bf16.msra.mxu0 %v113
  %155 = vmatprep.subr.bf16.mxu0 0
  %156 = vmatpush1.bf16.msra.mxu0 %v114
  %157 = vmatprep.subr.bf16.mxu0 0
  %158 = vmatpush1.bf16.msra.mxu0 %v115
  %159 = vmatprep.subr.bf16.mxu0 0
  %160 = vmatpush1.bf16.msra.mxu0 %v116
  %161 = vmatprep.subr.bf16.mxu0 0
  %162 = vmatpush1.bf16.msra.mxu0 %v117
  %163 = vmatprep.subr.bf16.mxu0 0
  %164 = vmatpush1.bf16.msra.mxu0 %v118
  %165 = vmatprep.subr.bf16.mxu0 0
  %166 = vmatpush1.bf16.msra.mxu0 %v119
  %167 = vmatprep.subr.bf16.mxu0 0
  %168 = vmatpush1.bf16.msra.mxu0 %v120
  %169 = vmatprep.mubr.bf16.mxu0 %v38
  %170 = vmatmul.mubr.bf16.gmra.mrb[0].mxu0 %v37
  %v171 = vpop.f32.mrb[0].mxu0
  %v172 = vadd.f32 0.0, %v171
  %v173 = vpop.f32.mrb[0].mxu0
  %v174 = vpop.f32.mrb[0].mxu0
  %v175 = vadd.f32 0.0, %v174
  %v176 = vpop.f32.mrb[0].mxu0
  %177 = vdwg.mxu0
  %178 = vmatprep.subr.bf16.mxu0 0
  %179 = vmatpush1.bf16.msra.mxu0 %v121
  %180 = vmatprep.subr.bf16.mxu0 0
  %181 = vmatpush1.bf16.msra.mxu0 %v122
  %182 = vmatprep.subr.bf16.mxu0 0
  %183 = vmatpush1.bf16.msra.mxu0 %v123
  %184 = vmatprep.subr.bf16.mxu0 0
  %185 = vmatpush1.bf16.msra.mxu0 %v124
  %186 = vmatprep.subr.bf16.mxu0 0
  %187 = vmatpush1.bf16.msra.mxu0 %v125
  %188 = vmatprep.subr.bf16.mxu0 0
  %189 = vmatpush1.bf16.msra.mxu0 %v126
  %190 = vmatprep.subr.bf16.mxu0 0
  %191 = vmatpush1.bf16.msra.mxu0 %v127
  %192 = vmatprep.subr.bf16.mxu0 0
  %193 = vmatpush1.bf16.msra.mxu0 %v128
  %194 = vmatprep.subr.bf16.mxu0 0
  %195 = vmatpush1.bf16.msra.mxu0 %v129
  %196 = vmatprep.subr.bf16.mxu0 0
  %197 = vmatpush1.bf16.msra.mxu0 %v130
  %198 = vmatprep.subr.bf16.mxu0 0
  %199 = vmatpush1.bf16.msra.mxu0 %v131
  %200 = vmatprep.subr.bf16.mxu0 0
  %201 = vmatpush1.bf16.msra.mxu0 %v132
  %202 = vmatprep.subr.bf16.mxu0 0
  %203 = vmatpush1.bf16.msra.mxu0 %v133
  %204 = vmatprep.subr.bf16.mxu0 0
  %205 = vmatpush1.bf16.msra.mxu0 %v134
  %206 = vmatprep.subr.bf16.mxu0 0
  %207 = vmatpush1.bf16.msra.mxu0 %v135
  %208 = vmatprep.subr.bf16.mxu0 0
  %209 = vmatpush1.bf16.msra.mxu0 %v136
  %210 = vmatprep.mubr.bf16.mxu0 %v40
  %211 = vmatmul.mubr.bf16.gmra.mrb[0].mxu0 %v39
  %v212 = vpop.f32.mrb[0].mxu0
  %v213 = vadd.f32 %v172, %v212
  %v214 = vpop.f32.mrb[0].mxu0
  %v215 = vpop.f32.mrb[0].mxu0
  %v216 = vadd.f32 %v175, %v215
  %v217 = vpop.f32.mrb[0].mxu0
  %218 = vdwg.mxu0
  %v219 = vadd.f32 %v27, %v213
  %v220 = vadd.f32 %v28, %v216
  %221 = vst [vmem:[#allocation2] sm:$0xff] %v219
  %222 = vst [vmem:[#allocation2 + $0x8] sm:$0xff] %v220
  // Predicated region
  $region26: #{transformer_forward.27} parent=0 // pred_check
    %p223 = pneg %p21
  $region27: #{transformer_forward.27} parent=0 // pred_check_branch
    %225 = sbr.rel (%p223) target = $region29
  $region28: #{transformer_forward.27} parent=0 // pred_region
    %v226 = vld [vmem:[#allocation2] sm:$0xff]
    %v227 = vld [vmem:[#allocation2 + $0x8] sm:$0xff]
    %v228 = vld [vmem:[%s2] sm:$0x1]
    %v230 = vlaneseq
    %v231 = vshrl.u32 %v230, 7
    %v232 = vsub.s32 0, %v231
    %v233 = vrot.slane %v228, %v232
    %v235 = vadd.f32 %v226, %v233
    %v236 = vadd.f32 %v227, %v233
    %v237 = vld [vmem:[%s3] sm:$0xff]
    %v238 = vld [vmem:[%s3 + $0x8] sm:$0xff]
    %v239 = vadd.f32 %v235, %v237
    %v240 = vadd.f32 %v236, %v238
    %v241 = vmul.f32 %v239, %v239
    %v242 = vmul.f32 %v240, %v240
    %243 = vadd.xlane.f32.xlu0 %v241
    %v244 = vpop.xlane.xlu0 %243
    %245 = vadd.xlane.f32.xlu0 %v242
    %v246 = vpop.xlane.xlu0 %245
    %v247 = vmul.f32 %v244, 0.0078125
    %v248 = vmul.f32 %v246, 0.0078125
    %v249 = vadd.f32 %v247, 1e-05
    %v250 = vadd.f32 %v248, 1e-05
    %v251 = vrsqrt.pop %v249
    %v252 = vrsqrt.pop %v250
    %v253 = vmul.f32 %v239, %v251
    %v254 = vmul.f32 %v240, %v252
    %v255 = vld [vmem:[%s4] sm:$0x1]
    %v257 = vlaneseq
    %v258 = vshrl.u32 %v257, 7
    %v259 = vsub.s32 0, %v258
    %v260 = vrot.slane %v255, %v259
    %v262 = vmul.f32 %v253, %v260
    %v263 = vmul.f32 %v254, %v260
    %264 = vst [vmem:[%s5] sm:$0xff] %v262
    %265 = vst [vmem:[%s5 + $0x8] sm:$0xff] %v263
  $region29: #{transformer_forward.27} parent=0 // pred_fallthru
    _
  // Predicated region
  $region30: #{transformer_forward.27} parent=0 // pred_check
    _
  $region31: #{transformer_forward.27} parent=0 // pred_check_branch
    %267 = sbr.rel (0) target = $region33
  $region32: #{transformer_forward.27} parent=0 // pred_region
    _
  $region33: #{transformer_forward.27} parent=0 // pred_fallthru
    _
  // Predicated region
  $region34: #{transformer_forward.27} parent=0 // pred_check
    _
  $region35: #{transformer_forward.27} parent=0 // pred_check_branch
    %269 = sbr.rel (0) target = $region37
  $region36: #{transformer_forward.27} parent=0 // pred_region
    _
  $region37: #{transformer_forward.27} parent=0 // pred_fallthru
    _

// kernel: transformer_forward.40
$region0: #{transformer_forward.40}
  #allocation0 [shape = 'u32[]', space=smem, size = 0x4, offset = 0x4, fixed_abs, tag = 'smem constant byte address 0x4 - core index']
  #allocation1 [shape = 'u32[144,128]{1,0:T(1,128)}', space=vmem, size = 0x12000, scoped, tag = 'internal scratch']
  #allocation2 [shape = 'f32[16,256]{1,0:T(8,128)}', space=vmem, size = 0x4000, scoped, tag = 'scratch operand']
  %s0 = inlined_call_operand.vmem [shape: f32[16,128], index: 0, kind: input, shape index: {}]
  %s1 = inlined_call_operand.vmem [shape: f32[128,256], index: 1, kind: input, shape index: {}]
  %s2 = inlined_call_operand.vmem [shape: f32[1,256], index: 2, kind: input, shape index: {}]
  %s3 = inlined_call_operand.vmem [shape: f32[16,256], index: 3, kind: output, shape index: {}]
  %s4 = sld [smem:[#allocation0]]
  $region30: #{transformer_forward.40} parent=0
    _
  %s6 = ssub.s32 1, %s4
  %s7 = scalar_select 0, %s6, %s4
  // Predicated region
  $region2: #{transformer_forward.40} parent=0 // pred_check
    _
  $region3: #{transformer_forward.40} parent=0 // pred_check_branch
    %9 = sbr.rel (0) target = $region5
  $region4: #{transformer_forward.40} parent=0 // pred_region
    _
  $region5: #{transformer_forward.40} parent=0 // pred_fallthru
    _
  // Predicated region
  $region6: #{transformer_forward.40} parent=0 // pred_check
    _
  $region7: #{transformer_forward.40} parent=0 // pred_check_branch
    %11 = sbr.rel (0) target = $region9
  $region8: #{transformer_forward.40} parent=0 // pred_region
    _
  $region9: #{transformer_forward.40} parent=0 // pred_fallthru
    _
  // Predicated region
  $region10: #{transformer_forward.40} parent=0 // pred_check
    _
  $region11: #{transformer_forward.40} parent=0 // pred_check_branch
    %13 = sbr.rel (0) target = $region13
  $region12: #{transformer_forward.40} parent=0 // pred_region
    _
  $region13: #{transformer_forward.40} parent=0 // pred_fallthru
    _
  %p15 = scmp.eq.s32.totalorder 0, 0
  // Predicated region
  $region14: #{transformer_forward.40} parent=0 // pred_check
    %p16 = pneg %p15
  $region15: #{transformer_forward.40} parent=0 // pred_check_branch
    %18 = sbr.rel (%p16) target = $region17
  $region16: #{transformer_forward.40} parent=0 // pred_region
    %19 = vst [vmem:[#allocation2] sm:$0xff] 0.0
    %20 = vst [vmem:[#allocation2 + $0x8] sm:$0xff] 0.0
    %21 = vst [vmem:[#allocation2 + $0x10] sm:$0xff] 0.0
    %22 = vst [vmem:[#allocation2 + $0x18] sm:$0xff] 0.0
  $region17: #{transformer_forward.40} parent=0 // pred_fallthru
    _
  %v23 = vld [vmem:[#allocation2] sm:$0xff]
  %v24 = vld [vmem:[#allocation2 + $0x8] sm:$0xff]
  %v25 = vld [vmem:[#allocation2 + $0x10] sm:$0xff]
  %v26 = vld [vmem:[#allocation2 + $0x18] sm:$0xff]
  %v27 = vld [vmem:[%s0] sm:$0xff]
  %v28 = vld [vmem:[%s0 + $0x8] sm:$0xff]
  %v29 = vpack.c.bf16 %v28, %v27
  %v30 = vld [vmem:[%s1] sm:$0xff]
  %v31 = vld [vmem:[%s1 + $0x8] sm:$0xff]
  %v32 = vld [vmem:[%s1 + $0x10] sm:$0xff]
  %v33 = vld [vmem:[%s1 + $0x18] sm:$0xff]
  %v34 = vld [vmem:[%s1 + $0x20] sm:$0xff]
  %v35 = vld [vmem:[%s1 + $0x28] sm:$0xff]
  %v36 = vld [vmem:[%s1 + $0x30] sm:$0xff]
  %v37 = vld [vmem:[%s1 + $0x38] sm:$0xff]
  %v38 = vld [vmem:[%s1 + $0x40] sm:$0xff]
  %v39 = vld [vmem:[%s1 + $0x48] sm:$0xff]
  %v40 = vld [vmem:[%s1 + $0x50] sm:$0xff]
  %v41 = vld [vmem:[%s1 + $0x58] sm:$0xff]
  %v42 = vld [vmem:[%s1 + $0x60] sm:$0xff]
  %v43 = vld [vmem:[%s1 + $0x68] sm:$0xff]
  %v44 = vld [vmem:[%s1 + $0x70] sm:$0xff]
  %v45 = vld [vmem:[%s1 + $0x78] sm:$0xff]
  %v46 = vld [vmem:[%s1 + $0x80] sm:$0xff]
  %v47 = vld [vmem:[%s1 + $0x88] sm:$0xff]
  %v48 = vld [vmem:[%s1 + $0x90] sm:$0xff]
  %v49 = vld [vmem:[%s1 + $0x98] sm:$0xff]
  %v50 = vld [vmem:[%s1 + $0xa0] sm:$0xff]
  %v51 = vld [vmem:[%s1 + $0xa8] sm:$0xff]
  %v52 = vld [vmem:[%s1 + $0xb0] sm:$0xff]
  %v53 = vld [vmem:[%s1 + $0xb8] sm:$0xff]
  %v54 = vld [vmem:[%s1 + $0xc0] sm:$0xff]
  %v55 = vld [vmem:[%s1 + $0xc8] sm:$0xff]
  %v56 = vld [vmem:[%s1 + $0xd0] sm:$0xff]
  %v57 = vld [vmem:[%s1 + $0xd8] sm:$0xff]
  %v58 = vld [vmem:[%s1 + $0xe0] sm:$0xff]
  %v59 = vld [vmem:[%s1 + $0xe8] sm:$0xff]
  %v60 = vld [vmem:[%s1 + $0xf0] sm:$0xff]
  %v61 = vld [vmem:[%s1 + $0xf8] sm:$0xff]
  %v62 = vpack.c.bf16 %v32, %v30
  %v63 = vpack.c.bf16 %v33, %v31
  %v64 = vpack.c.bf16 %v36, %v34
  %v65 = vpack.c.bf16 %v37, %v35
  %v66 = vpack.c.bf16 %v40, %v38
  %v67 = vpack.c.bf16 %v41, %v39
  %v68 = vpack.c.bf16 %v44, %v42
  %v69 = vpack.c.bf16 %v45, %v43
  %v70 = vpack.c.bf16 %v48, %v46
  %v71 = vpack.c.bf16 %v49, %v47
  %v72 = vpack.c.bf16 %v52, %v50
  %v73 = vpack.c.bf16 %v53, %v51
  %v74 = vpack.c.bf16 %v56, %v54
  %v75 = vpack.c.bf16 %v57, %v55
  %v76 = vpack.c.bf16 %v60, %v58
  %v77 = vpack.c.bf16 %v61, %v59
  %78 = vmatprep.subr.bf16.mxu0 %v63
  %79 = vmatpush1.bf16.msra.mxu0 %v62
  %80 = vmatprep.subr.bf16.mxu0 %v65
  %81 = vmatpush1.bf16.msra.mxu0 %v64
  %82 = vmatprep.subr.bf16.mxu0 %v67
  %83 = vmatpush1.bf16.msra.mxu0 %v66
  %84 = vmatprep.subr.bf16.mxu0 %v69
  %85 = vmatpush1.bf16.msra.mxu0 %v68
  %86 = vmatprep.subr.bf16.mxu0 %v71
  %87 = vmatpush1.bf16.msra.mxu0 %v70
  %88 = vmatprep.subr.bf16.mxu0 %v73
  %89 = vmatpush1.bf16.msra.mxu0 %v72
  %90 = vmatprep.subr.bf16.mxu0 %v75
  %91 = vmatpush1.bf16.msra.mxu0 %v74
  %92 = vmatprep.subr.bf16.mxu0 %v77
  %93 = vmatpush1.bf16.msra.mxu0 %v76
  %94 = vmatprep.subr.bf16.mxu0 0
  %95 = vmatpush1.bf16.msra.mxu0 0
  %96 = vmatprep.subr.bf16.mxu0 0
  %97 = vmatpush1.bf16.msra.mxu0 0
  %98 = vmatprep.subr.bf16.mxu0 0
  %99 = vmatpush1.bf16.msra.mxu0 0
  %100 = vmatprep.subr.bf16.mxu0 0
  %101 = vmatpush1.bf16.msra.mxu0 0
  %102 = vmatprep.subr.bf16.mxu0 0
  %103 = vmatpush1.bf16.msra.mxu0 0
  %104 = vmatprep.subr.bf16.mxu0 0
  %105 = vmatpush1.bf16.msra.mxu0 0
  %106 = vmatprep.subr.bf16.mxu0 0
  %107 = vmatpush1.bf16.msra.mxu0 0
  %108 = vmatprep.subr.bf16.mxu0 0
  %109 = vmatpush1.bf16.msra.mxu0 0
  %110 = vmatprep.mubr.bf16.mxu0 0
  %111 = vmatmul.mubr.bf16.gmra.mrb[0].mxu0 %v29
  %v112 = vpop.f32.mrb[0].mxu0
  %v113 = vadd.f32 0.0, %v112
  %v114 = vpop.f32.mrb[0].mxu0
  %v115 = vadd.f32 0.0, %v114
  %v116 = vpop.f32.mrb[0].mxu0
  %v117 = vadd.f32 0.0, %v116
  %v118 = vpop.f32.mrb[0].mxu0
  %v119 = vadd.f32 0.0, %v118
  %120 = vdwg.mxu0
  %v121 = vadd.f32 %v23, %v113
  %v122 = vadd.f32 %v24, %v115
  %v123 = vadd.f32 %v25, %v117
  %v124 = vadd.f32 %v26, %v119
  %125 = vst [vmem:[#allocation2] sm:$0xff] %v121
  %126 = vst [vmem:[#allocation2 + $0x8] sm:$0xff] %v122
  %127 = vst [vmem:[#allocation2 + $0x10] sm:$0xff] %v123
  %128 = vst [vmem:[#allocation2 + $0x18] sm:$0xff] %v124
  // Predicated region
  $region18: #{transformer_forward.40} parent=0 // pred_check
    %p129 = pneg %p15
  $region19: #{transformer_forward.40} parent=0 // pred_check_branch
    %131 = sbr.rel (%p129) target = $region21
  $region20: #{transformer_forward.40} parent=0 // pred_region
    %v132 = vld [vmem:[#allocation2] sm:$0xff]
    %v133 = vld [vmem:[#allocation2 + $0x8] sm:$0xff]
    %v134 = vld [vmem:[#allocation2 + $0x10] sm:$0xff]
    %v135 = vld [vmem:[#allocation2 + $0x18] sm:$0xff]
    %v136 = vld [vmem:[%s2] sm:$0x3]
    %v138 = vlaneseq
    %v139 = vshrl.u32 %v138, 7
    %v140 = vsub.s32 0, %v139
    %v141 = vrot.slane %v136, %v140
    %v142 = vlaneseq
    %v143 = vshrl.u32 %v142, 7
    %v144 = vsub.s32 1, %v143
    %v145 = vrot.slane %v136, %v144
    %v148 = vadd.f32 %v132, %v141
    %v149 = vadd.f32 %v133, %v145
    %v150 = vadd.f32 %v134, %v141
    %v151 = vadd.f32 %v135, %v145
    %152 = vst [vmem:[%s3] sm:$0xff] %v148
    %153 = vst [vmem:[%s3 + $0x8] sm:$0xff] %v149
    %154 = vst [vmem:[%s3 + $0x10] sm:$0xff] %v150
    %155 = vst [vmem:[%s3 + $0x18] sm:$0xff] %v151
  $region21: #{transformer_forward.40} parent=0 // pred_fallthru
    _
  // Predicated region
  $region22: #{transformer_forward.40} parent=0 // pred_check
    _
  $region23: #{transformer_forward.40} parent=0 // pred_check_branch
    %157 = sbr.rel (0) target = $region25
  $region24: #{transformer_forward.40} parent=0 // pred_region
    _
  $region25: #{transformer_forward.40} parent=0 // pred_fallthru
    _
  // Predicated region
  $region26: #{transformer_forward.40} parent=0 // pred_check
    _
  $region27: #{transformer_forward.40} parent=0 // pred_check_branch
    %159 = sbr.rel (0) target = $region29
  $region28: #{transformer_forward.40} parent=0 // pred_region
    _
  $region29: #{transformer_forward.40} parent=0 // pred_fallthru
    _

// kernel: transformer_forward.41
$region0: #{transformer_forward.41}
  #allocation0 [shape = 'u32[]', space=smem, size = 0x4, offset = 0x4, fixed_abs, tag = 'smem constant byte address 0x4 - core index']
  #allocation1 [shape = 'u32[144,128]{1,0:T(1,128)}', space=vmem, size = 0x12000, scoped, tag = 'internal scratch']
  %s0 = inlined_call_operand.vmem [shape: f32[16,256], index: 0, kind: input, shape index: {}]
  %s1 = inlined_call_operand.hbm [shape: f32[16,256], index: 1, kind: output, shape index: {}]
  %s2 = sld [smem:[#allocation0]]
  $region37: #{transformer_forward.41} parent=0
    _
  %s4 = ssub.s32 1, %s2
  %s5 = scalar_select 0, %s4, %s2
  $region1: #{transformer_forward.41} parent=0
    #allocation2 [shape = 'u8[16384]{0}', space=vmem, size = 0x4000, scoped, tag = 'output window, operand 0']
    #allocation3 [shape = 's32[2]{0}', space=sflag, size = 0x8, scoped, tag = 'scoped memory for transformer_forward.41']
    %6 = vsyncpa [#allocation3], 0
    %s7 = scalar_lea.sflag [#allocation3], 1
    %8 = vsyncpa %s7, 0
    loop: start=0, step=1, limit=4
    $region2: #{transformer_forward.41} parent=1 // loop_pre_header
      _
    $region3: #{transformer_forward.41} parent=1 // loop_header
      %s10 = sphi 0, %s14
      %p11 = scmp.ge.s32.totalorder %s10, 4
      %s20 = sphi 0, %s22
      %s23 = sphi 0, %s20
      %s24 = sphi 0, %s23
      %s40 = sphi 0, %s24
      %s46 = sphi 0, %s48
      %s49 = sphi 0, %s46
      %s50 = sphi 0, %s49
      %s66 = sphi 0, %s50
    $region4: #{transformer_forward.41} parent=1 // loop_header_branch
      %13 = sbr.rel (%p11) target = $region8
    $region5: #{transformer_forward.41} parent=1 // loop_body
      %s15 = ssub.s32 %s10, 1
      %s16 = ssub.s32 %s10, 2
      %s17 = sadd.s32 %s10, 1
      %s18 = ssub.s32 %s10, %s17
      %p19 = scmp.eq.s32.totalorder %s18, 0
      %s21 = sadd.s32 %s20, 1
      %s22 = scalar_select %p19, %s20, %s21
      %p25 = pneg %p19
      %p26 = scmp.eq.s32.totalorder %s10, 1
      %p27 = por %p25, %p26
      %p28 = scmp.ne.s32.totalorder %s20, %s23
      %p29 = scmp.eq.s32.totalorder %s10, 0
      %p30 = por %p28, %p29
      %p31 = scmp.ne.s32.totalorder %s20, %s23
      %p32 = scmp.eq.s32.totalorder %s15, 1
      %p33 = por %p31, %p32
      %p34 = scmp.ne.s32.totalorder %s23, %s24
      %p35 = scmp.eq.s32.totalorder %s15, 0
      %p36 = por %p34, %p35
      %p37 = scmp.ne.s32.totalorder %s23, %s24
      %p38 = scmp.eq.s32.totalorder %s16, 1
      %p39 = por %p37, %p38
      %p41 = scmp.ne.s32.totalorder %s24, %s40
      %p42 = scmp.eq.s32.totalorder %s16, 0
      %p43 = por %p41, %p42
      %s44 = ssub.s32 %s10, %s17
      %p45 = scmp.eq.s32.totalorder %s44, 0
      %s47 = sadd.s32 %s46, 1
      %s48 = scalar_select %p45, %s46, %s47
      %p51 = pneg %p45
      %p52 = scmp.eq.s32.totalorder %s10, 1
      %p53 = por %p51, %p52
      %p54 = scmp.ne.s32.totalorder %s46, %s49
      %p55 = scmp.eq.s32.totalorder %s10, 0
      %p56 = por %p54, %p55
      %p57 = scmp.ne.s32.totalorder %s46, %s49
      %p58 = scmp.eq.s32.totalorder %s15, 1
      %p59 = por %p57, %p58
      %p60 = scmp.ne.s32.totalorder %s49, %s50
      %p61 = scmp.eq.s32.totalorder %s15, 0
      %p62 = por %p60, %p61
      %p63 = scmp.ne.s32.totalorder %s49, %s50
      %p64 = scmp.eq.s32.totalorder %s16, 1
      %p65 = por %p63, %p64
      %p67 = scmp.ne.s32.totalorder %s50, %s66
      %p68 = scmp.eq.s32.totalorder %s16, 0
      %p69 = por %p67, %p68
      %p70 = scmp.le.s32.totalorder 1, %s10
      %p71 = scmp.lt.s32.totalorder %s10, 3
      %p72 = pnand %p70, %p71
      %p73 = pneg %p72
      // Predicated region
      $region9: #{transformer_forward.41} parent=5 // pred_check
        _
      $region10: #{transformer_forward.41} parent=5 // pred_check_branch
        %75 = sbr.rel (%p72) target = $region12
      $region11: #{transformer_forward.41} parent=5 // pred_region
        %s76 = ssub.s32 %s10, 1
      $region12: #{transformer_forward.41} parent=5 // pred_fallthru
        _
      %p77 = scmp.lt.s32.totalorder %s10, 2
      // Predicated region
      $region13: #{transformer_forward.41} parent=5 // pred_check
        %p78 = pneg %p77
      $region14: #{transformer_forward.41} parent=5 // pred_check_branch
        %80 = sbr.rel (%p78) target = $region16
      $region15: #{transformer_forward.41} parent=5 // pred_region
        // Predicated region
        $region17: #{transformer_forward.41} parent=15 // pred_check
          %p81 = pneg %p30
        $region18: #{transformer_forward.41} parent=15 // pred_check_branch
          %83 = sbr.rel (%p81) target = $region20
        $region19: #{transformer_forward.41} parent=15 // pred_region
          %p84 = scmp.lt.s32.totalorder %s10, 1
          %s85 = scalar_select %p84, %s10, 1
          %s86 = smul.addr %s85, 2
          %s87 = smul.addr %s86, 8
          %s88 = scalar_lea.vmem %s0, %s87
        $region20: #{transformer_forward.41} parent=15 // pred_fallthru
          _
      $region16: #{transformer_forward.41} parent=5 // pred_fallthru
        _
      %p89 = scmp.le.s32.totalorder 1, %s10
      %p90 = scmp.lt.s32.totalorder %s10, 3
      %p91 = pnand %p89, %p90
      %p92 = pneg %p91
      // Predicated region
      $region21: #{transformer_forward.41} parent=5 // pred_check
        _
      $region22: #{transformer_forward.41} parent=5 // pred_check_branch
        %94 = sbr.rel (%p91) target = $region24
      $region23: #{transformer_forward.41} parent=5 // pred_region
        %s95 = ssub.s32 %s10, 1
        %p96 = scmp.lt.s32.totalorder %s15, 1
        %s97 = scalar_select %p96, %s15, 1
        %s98 = smul.addr %s97, 2
        %s99 = smul.addr %s98, 8
        %s100 = scalar_lea.vmem %s0, %s99
        %p101 = pneg %p36
        %p102 = pneg %p33
        %p103 = pneg %p62
        %p104 = pneg %p59
        %s105 = sand.u32 %s49, 1
        %s106 = scalar_lea.sflag [#allocation3], %s105
        %s107 = sand.u32 %s49, 1
        %s108 = smul.addr %s107, 16
        %s109 = scalar_lea.vmem [#allocation2], %s108
        %p110 = scmp.lt.s32.totalorder %s15, 1
        %s111 = scalar_select %p110, %s15, 1
        %s112 = smul.addr %s111, 2
        %s113 = smul.addr %s112, 8
        %s114 = scalar_lea.vmem %s0, %s113
        %v115 = vld [vmem:[%s114] sm:$0xff]
        %v116 = vld [vmem:[%s114 + $0x8] sm:$0xff]
        %v117 = vmax.f32 %v115, %v116
        %118 = vmax.xlane.f32.xlu0 %v117
        %v119 = vpop.xlane.xlu0 %118
        %v120 = vsub.f32 %v115, %v119
        %v121 = vsub.f32 %v116, %v119
        %v122 = vmul.f32 %v120, 1.442695
        %v123 = vpow.pop %v122
        %v124 = vmul.f32 %v121, 1.442695
        %v125 = vpow.pop %v124
        %v126 = vadd.f32 %v123, %v125
        %127 = vadd.xlane.f32.xlu0 %v126
        %v128 = vpop.xlane.xlu0 %127
        %v129 = vrcp.pop %v128
        %v130 = vmul.f32 %v123, %v129
        %v131 = vmul.f32 %v125, %v129
        %132 = vst [vmem:[%s109] sm:$0xff] %v130
        %133 = vst [vmem:[%s109 + $0x8] sm:$0xff] %v131
        %s134 = sand.u32 %s49, 1
        %s135 = scalar_lea.sflag [#allocation3], %s134
        %s136 = sand.u32 %s49, 1
        %s137 = smul.addr %s136, 16
        %s138 = scalar_lea.vmem [#allocation2], %s137
        // Predicated region
        $region25: #{transformer_forward.41} parent=23 // pred_check
          %p139 = pneg %p59
        $region26: #{transformer_forward.41} parent=23 // pred_check_branch
          %141 = sbr.rel (%p139) target = $region28
        $region27: #{transformer_forward.41} parent=23 // pred_region
          %s143 = ssub.s32 256, 256
          %144 = vsyncadd %s135, %s143
          %s145 = smul.addr %s15, 2
          %s146 = smul.addr %s145, 128
          %s147 = scalar_lea.hbm %s1, %s146
          %s149 = sshll.u32 %s138, 4
          %s150 = int_to_ptr.vmem [resolvable:$true] %s149
          %152 = dma.vmem_to_hbm [thread:$0]  %s150, 256, %s147, %s135
        $region28: #{transformer_forward.41} parent=23 // pred_fallthru
          _
      $region24: #{transformer_forward.41} parent=5 // pred_fallthru
        _
      %p153 = scmp.le.s32.totalorder 2, %s10
      // Predicated region
      $region29: #{transformer_forward.41} parent=5 // pred_check
        %p154 = pneg %p153
      $region30: #{transformer_forward.41} parent=5 // pred_check_branch
        %156 = sbr.rel (%p154) target = $region32
      $region31: #{transformer_forward.41} parent=5 // pred_region
        %s157 = ssub.s32 %s10, 2
        // Predicated region
        $region33: #{transformer_forward.41} parent=31 // pred_check
          %p158 = pneg %p65
        $region34: #{transformer_forward.41} parent=31 // pred_check_branch
          %160 = sbr.rel (%p158) target = $region36
        $region35: #{transformer_forward.41} parent=31 // pred_region
          %s161 = sand.u32 %s50, 1
          %s162 = scalar_lea.sflag [#allocation3], %s161
          %s163 = sand.u32 %s50, 1
          %s164 = smul.addr %s163, 16
          %s165 = scalar_lea.vmem [#allocation2], %s164
          %166 = dma.done %s162, 256
        $region36: #{transformer_forward.41} parent=31 // pred_fallthru
          _
      $region32: #{transformer_forward.41} parent=5 // pred_fallthru
        _
    $region6: #{transformer_forward.41} parent=1 // loop_footer
      %s14 = sadd.s32 1, %s10
    $region7: #{transformer_forward.41} parent=1 // loop_footer_branch
      %9 = sbr.rel target = $region3
    $region8: #{transformer_forward.41} parent=1 // loop_exit
      _
    %167 = vsyncpa [#allocation3], 1
    %s168 = scalar_lea.sflag [#allocation3], 1
    %169 = vsyncpa %s168, 1

// kernel: transformer_forward.26
$region0: #{transformer_forward.26}
  #allocation0 [shape = 'u32[]', space=smem, size = 0x4, offset = 0x4, fixed_abs, tag = 'smem constant byte address 0x4 - core index']
  #allocation1 [shape = 'u32[144,128]{1,0:T(1,128)}', space=vmem, size = 0x12000, scoped, tag = 'internal scratch']
  #allocation2 [shape = 'f32[16,512]{1,0:T(8,128)}', space=vmem, size = 0x8000, scoped, tag = 'scratch operand']
  #allocation3 [shape = 'f32[16,512]{1,0:T(8,128)}', space=vmem, size = 0x8000, scoped, tag = 'scratch operand']
  %s0 = inlined_call_operand.vmem [shape: f32[16,128], index: 0, kind: input, shape index: {}]
  %s1 = inlined_call_operand.vmem [shape: f32[128,512], index: 1, kind: input, shape index: {}]
  %s2 = inlined_call_operand.vmem [shape: f32[128,512], index: 2, kind: input, shape index: {}]
  %s3 = inlined_call_operand.vmem [shape: f32[16,512], index: 3, kind: output, shape index: {}]
  %s4 = sld [smem:[#allocation0]]
  $region30: #{transformer_forward.26} parent=0
    _
  %s6 = ssub.s32 1, %s4
  %s7 = scalar_select 0, %s6, %s4
  // Predicated region
  $region2: #{transformer_forward.26} parent=0 // pred_check
    _
  $region3: #{transformer_forward.26} parent=0 // pred_check_branch
    %9 = sbr.rel (0) target = $region5
  $region4: #{transformer_forward.26} parent=0 // pred_region
    _
  $region5: #{transformer_forward.26} parent=0 // pred_fallthru
    _
  // Predicated region
  $region6: #{transformer_forward.26} parent=0 // pred_check
    _
  $region7: #{transformer_forward.26} parent=0 // pred_check_branch
    %11 = sbr.rel (0) target = $region9
  $region8: #{transformer_forward.26} parent=0 // pred_region
    _
  $region9: #{transformer_forward.26} parent=0 // pred_fallthru
    _
  // Predicated region
  $region10: #{transformer_forward.26} parent=0 // pred_check
    _
  $region11: #{transformer_forward.26} parent=0 // pred_check_branch
    %13 = sbr.rel (0) target = $region13
  $region12: #{transformer_forward.26} parent=0 // pred_region
    _
  $region13: #{transformer_forward.26} parent=0 // pred_fallthru
    _
  %p15 = scmp.eq.s32.totalorder 0, 0
  // Predicated region
  $region14: #{transformer_forward.26} parent=0 // pred_check
    %p16 = pneg %p15
  $region15: #{transformer_forward.26} parent=0 // pred_check_branch
    %18 = sbr.rel (%p16) target = $region17
  $region16: #{transformer_forward.26} parent=0 // pred_region
    %19 = vst [vmem:[#allocation2] sm:$0xff] 0.0
    %20 = vst [vmem:[#allocation2 + $0x8] sm:$0xff] 0.0
    %21 = vst [vmem:[#allocation2 + $0x10] sm:$0xff] 0.0
    %22 = vst [vmem:[#allocation2 + $0x18] sm:$0xff] 0.0
    %23 = vst [vmem:[#allocation2 + $0x20] sm:$0xff] 0.0
    %24 = vst [vmem:[#allocation2 + $0x28] sm:$0xff] 0.0
    %25 = vst [vmem:[#allocation2 + $0x30] sm:$0xff] 0.0
    %26 = vst [vmem:[#allocation2 + $0x38] sm:$0xff] 0.0
    %27 = vst [vmem:[#allocation3] sm:$0xff] 0.0
    %28 = vst [vmem:[#allocation3 + $0x8] sm:$0xff] 0.0
    %29 = vst [vmem:[#allocation3 + $0x10] sm:$0xff] 0.0
    %30 = vst [vmem:[#allocation3 + $0x18] sm:$0xff] 0.0
    %31 = vst [vmem:[#allocation3 + $0x20] sm:$0xff] 0.0
    %32 = vst [vmem:[#allocation3 + $0x28] sm:$0xff] 0.0
    %33 = vst [vmem:[#allocation3 + $0x30] sm:$0xff] 0.0
    %34 = vst [vmem:[#allocation3 + $0x38] sm:$0xff] 0.0
  $region17: #{transformer_forward.26} parent=0 // pred_fallthru
    _
  %v35 = vld [vmem:[%s0] sm:$0xff]
  %v36 = vld [vmem:[%s0 + $0x8] sm:$0xff]
  %v37 = vpack.c.bf16 %v36, %v35
  %v38 = vld [vmem:[#allocation2] sm:$0xff]
  %v39 = vld [vmem:[#allocation2 + $0x8] sm:$0xff]
  %v40 = vld [vmem:[#allocation2 + $0x10] sm:$0xff]
  %v41 = vld [vmem:[#allocation2 + $0x18] sm:$0xff]
  %v42 = vld [vmem:[#allocation2 + $0x20] sm:$0xff]
  %v43 = vld [vmem:[#allocation2 + $0x28] sm:$0xff]
  %v44 = vld [vmem:[#allocation2 + $0x30] sm:$0xff]
  %v45 = vld [vmem:[#allocation2 + $0x38] sm:$0xff]
  %v46 = vld [vmem:[%s1] sm:$0xff]
  %v47 = vld [vmem:[%s1 + $0x8] sm:$0xff]
  %v48 = vld [vmem:[%s1 + $0x10] sm:$0xff]
  %v49 = vld [vmem:[%s1 + $0x18] sm:$0xff]
  %v50 = vld [vmem:[%s1 + $0x20] sm:$0xff]
  %v51 = vld [vmem:[%s1 + $0x28] sm:$0xff]
  %v52 = vld [vmem:[%s1 + $0x30] sm:$0xff]
  %v53 = vld [vmem:[%s1 + $0x38] sm:$0xff]
  %v54 = vld [vmem:[%s1 + $0x40] sm:$0xff]
  %v55 = vld [vmem:[%s1 + $0x48] sm:$0xff]
  %v56 = vld [vmem:[%s1 + $0x50] sm:$0xff]
  %v57 = vld [vmem:[%s1 + $0x58] sm:$0xff]
  %v58 = vld [vmem:[%s1 + $0x60] sm:$0xff]
  %v59 = vld [vmem:[%s1 + $0x68] sm:$0xff]
  %v60 = vld [vmem:[%s1 + $0x70] sm:$0xff]
  %v61 = vld [vmem:[%s1 + $0x78] sm:$0xff]
  %v62 = vld [vmem:[%s1 + $0x80] sm:$0xff]
  %v63 = vld [vmem:[%s1 + $0x88] sm:$0xff]
  %v64 = vld [vmem:[%s1 + $0x90] sm:$0xff]
  %v65 = vld [vmem:[%s1 + $0x98] sm:$0xff]
  %v66 = vld [vmem:[%s1 + $0xa0] sm:$0xff]
  %v67 = vld [vmem:[%s1 + $0xa8] sm:$0xff]
  %v68 = vld [vmem:[%s1 + $0xb0] sm:$0xff]
  %v69 = vld [vmem:[%s1 + $0xb8] sm:$0xff]
  %v70 = vld [vmem:[%s1 + $0xc0] sm:$0xff]
  %v71 = vld [vmem:[%s1 + $0xc8] sm:$0xff]
  %v72 = vld [vmem:[%s1 + $0xd0] sm:$0xff]
  %v73 = vld [vmem:[%s1 + $0xd8] sm:$0xff]
  %v74 = vld [vmem:[%s1 + $0xe0] sm:$0xff]
  %v75 = vld [vmem:[%s1 + $0xe8] sm:$0xff]
  %v76 = vld [vmem:[%s1 + $0xf0] sm:$0xff]
  %v77 = vld [vmem:[%s1 + $0xf8] sm:$0xff]
  %v78 = vld [vmem:[%s1 + $0x100] sm:$0xff]
  %v79 = vld [vmem:[%s1 + $0x108] sm:$0xff]
  %v80 = vld [vmem:[%s1 + $0x110] sm:$0xff]
  %v81 = vld [vmem:[%s1 + $0x118] sm:$0xff]
  %v82 = vld [vmem:[%s1 + $0x120] sm:$0xff]
  %v83 = vld [vmem:[%s1 + $0x128] sm:$0xff]
  %v84 = vld [vmem:[%s1 + $0x130] sm:$0xff]
  %v85 = vld [vmem:[%s1 + $0x138] sm:$0xff]
  %v86 = vld [vmem:[%s1 + $0x140] sm:$0xff]
  %v87 = vld [vmem:[%s1 + $0x148] sm:$0xff]
  %v88 = vld [vmem:[%s1 + $0x150] sm:$0xff]
  %v89 = vld [vmem:[%s1 + $0x158] sm:$0xff]
  %v90 = vld [vmem:[%s1 + $0x160] sm:$0xff]
  %v91 = vld [vmem:[%s1 + $0x168] sm:$0xff]
  %v92 = vld [vmem:[%s1 + $0x170] sm:$0xff]
  %v93 = vld [vmem:[%s1 + $0x178] sm:$0xff]
  %v94 = vld [vmem:[%s1 + $0x180] sm:$0xff]
  %v95 = vld [vmem:[%s1 + $0x188] sm:$0xff]
  %v96 = vld [vmem:[%s1 + $0x190] sm:$0xff]
  %v97 = vld [vmem:[%s1 + $0x198] sm:$0xff]
  %v98 = vld [vmem:[%s1 + $0x1a0] sm:$0xff]
  %v99 = vld [vmem:[%s1 + $0x1a8] sm:$0xff]
  %v100 = vld [vmem:[%s1 + $0x1b0] sm:$0xff]
  %v101 = vld [vmem:[%s1 + $0x1b8] sm:$0xff]
  %v102 = vld [vmem:[%s1 + $0x1c0] sm:$0xff]
  %v103 = vld [vmem:[%s1 + $0x1c8] sm:$0xff]
  %v104 = vld [vmem:[%s1 + $0x1d0] sm:$0xff]
  %v105 = vld [vmem:[%s1 + $0x1d8] sm:$0xff]
  %v106 = vld [vmem:[%s1 + $0x1e0] sm:$0xff]
  %v107 = vld [vmem:[%s1 + $0x1e8] sm:$0xff]
  %v108 = vld [vmem:[%s1 + $0x1f0] sm:$0xff]
  %v109 = vld [vmem:[%s1 + $0x1f8] sm:$0xff]
  %v110 = vpack.c.bf16 %v50, %v46
  %v111 = vpack.c.bf16 %v51, %v47
  %v112 = vpack.c.bf16 %v52, %v48
  %v113 = vpack.c.bf16 %v53, %v49
  %v114 = vpack.c.bf16 %v58, %v54
  %v115 = vpack.c.bf16 %v59, %v55
  %v116 = vpack.c.bf16 %v60, %v56
  %v117 = vpack.c.bf16 %v61, %v57
  %v118 = vpack.c.bf16 %v66, %v62
  %v119 = vpack.c.bf16 %v67, %v63
  %v120 = vpack.c.bf16 %v68, %v64
  %v121 = vpack.c.bf16 %v69, %v65
  %v122 = vpack.c.bf16 %v74, %v70
  %v123 = vpack.c.bf16 %v75, %v71
  %v124 = vpack.c.bf16 %v76, %v72
  %v125 = vpack.c.bf16 %v77, %v73
  %v126 = vpack.c.bf16 %v82, %v78
  %v127 = vpack.c.bf16 %v83, %v79
  %v128 = vpack.c.bf16 %v84, %v80
  %v129 = vpack.c.bf16 %v85, %v81
  %v130 = vpack.c.bf16 %v90, %v86
  %v131 = vpack.c.bf16 %v91, %v87
  %v132 = vpack.c.bf16 %v92, %v88
  %v133 = vpack.c.bf16 %v93, %v89
  %v134 = vpack.c.bf16 %v98, %v94
  %v135 = vpack.c.bf16 %v99, %v95
  %v136 = vpack.c.bf16 %v100, %v96
  %v137 = vpack.c.bf16 %v101, %v97
  %v138 = vpack.c.bf16 %v106, %v102
  %v139 = vpack.c.bf16 %v107, %v103
  %v140 = vpack.c.bf16 %v108, %v104
  %v141 = vpack.c.bf16 %v109, %v105
  %142 = vmatprep.subr.bf16.mxu0 %v111
  %143 = vmatpush1.bf16.msra.mxu0 %v110
  %144 = vmatprep.subr.bf16.mxu0 %v115
  %145 = vmatpush1.bf16.msra.mxu0 %v114
  %146 = vmatprep.subr.bf16.mxu0 %v119
  %147 = vmatpush1.bf16.msra.mxu0 %v118
  %148 = vmatprep.subr.bf16.mxu0 %v123
  %149 = vmatpush1.bf16.msra.mxu0 %v122
  %150 = vmatprep.subr.bf16.mxu0 %v127
  %151 = vmatpush1.bf16.msra.mxu0 %v126
  %152 = vmatprep.subr.bf16.mxu0 %v131
  %153 = vmatpush1.bf16.msra.mxu0 %v130
  %154 = vmatprep.subr.bf16.mxu0 %v135
  %155 = vmatpush1.bf16.msra.mxu0 %v134
  %156 = vmatprep.subr.bf16.mxu0 %v139
  %157 = vmatpush1.bf16.msra.mxu0 %v138
  %158 = vmatprep.subr.bf16.mxu0 0
  %159 = vmatpush1.bf16.msra.mxu0 0
  %160 = vmatprep.subr.bf16.mxu0 0
  %161 = vmatpush1.bf16.msra.mxu0 0
  %162 = vmatprep.subr.bf16.mxu0 0
  %163 = vmatpush1.bf16.msra.mxu0 0
  %164 = vmatprep.subr.bf16.mxu0 0
  %165 = vmatpush1.bf16.msra.mxu0 0
  %166 = vmatprep.subr.bf16.mxu0 0
  %167 = vmatpush1.bf16.msra.mxu0 0
  %168 = vmatprep.subr.bf16.mxu0 0
  %169 = vmatpush1.bf16.msra.mxu0 0
  %170 = vmatprep.subr.bf16.mxu0 0
  %171 = vmatpush1.bf16.msra.mxu0 0
  %172 = vmatprep.subr.bf16.mxu0 0
  %173 = vmatpush1.bf16.msra.mxu0 0
  %174 = vmatprep.mubr.bf16.mxu0 0
  %175 = vmatmul.mubr.bf16.gmra.mrb[0].mxu0 %v37
  %v176 = vpop.f32.mrb[0].mxu0
  %v177 = vadd.f32 0.0, %v176
  %v178 = vpop.f32.mrb[0].mxu0
  %v179 = vadd.f32 0.0, %v178
  %v180 = vpop.f32.mrb[0].mxu0
  %v181 = vadd.f32 0.0, %v180
  %v182 = vpop.f32.mrb[0].mxu0
  %v183 = vadd.f32 0.0, %v182
  %184 = vdwg.mxu0
  %185 = vmatprep.subr.bf16.mxu0 %v113
  %186 = vmatpush1.bf16.msra.mxu0 %v112
  %187 = vmatprep.subr.bf16.mxu0 %v117
  %188 = vmatpush1.bf16.msra.mxu0 %v116
  %189 = vmatprep.subr.bf16.mxu0 %v121
  %190 = vmatpush1.bf16.msra.mxu0 %v120
  %191 = vmatprep.subr.bf16.mxu0 %v125
  %192 = vmatpush1.bf16.msra.mxu0 %v124
  %193 = vmatprep.subr.bf16.mxu0 %v129
  %194 = vmatpush1.bf16.msra.mxu0 %v128
  %195 = vmatprep.subr.bf16.mxu0 %v133
  %196 = vmatpush1.bf16.msra.mxu0 %v132
  %197 = vmatprep.subr.bf16.mxu0 %v137
  %198 = vmatpush1.bf16.msra.mxu0 %v136
  %199 = vmatprep.subr.bf16.mxu0 %v141
  %200 = vmatpush1.bf16.msra.mxu0 %v140
  %201 = vmatprep.subr.bf16.mxu0 0
  %202 = vmatpush1.bf16.msra.mxu0 0
  %203 = vmatprep.subr.bf16.mxu0 0
  %204 = vmatpush1.bf16.msra.mxu0 0
  %205 = vmatprep.subr.bf16.mxu0 0
  %206 = vmatpush1.bf16.msra.mxu0 0
  %207 = vmatprep.subr.bf16.mxu0 0
  %208 = vmatpush1.bf16.msra.mxu0 0
  %209 = vmatprep.subr.bf16.mxu0 0
  %210 = vmatpush1.bf16.msra.mxu0 0
  %211 = vmatprep.subr.bf16.mxu0 0
  %212 = vmatpush1.bf16.msra.mxu0 0
  %213 = vmatprep.subr.bf16.mxu0 0
  %214 = vmatpush1.bf16.msra.mxu0 0
  %215 = vmatprep.subr.bf16.mxu0 0
  %216 = vmatpush1.bf16.msra.mxu0 0
  %217 = vmatprep.mubr.bf16.mxu0 0
  %218 = vmatmul.mubr.bf16.gmra.mrb[0].mxu0 %v37
  %v219 = vpop.f32.mrb[0].mxu0
  %v220 = vadd.f32 0.0, %v219
  %v221 = vpop.f32.mrb[0].mxu0
  %v222 = vadd.f32 0.0, %v221
  %v223 = vpop.f32.mrb[0].mxu0
  %v224 = vadd.f32 0.0, %v223
  %v225 = vpop.f32.mrb[0].mxu0
  %v226 = vadd.f32 0.0, %v225
  %227 = vdwg.mxu0
  %v228 = vadd.f32 %v38, %v177
  %v229 = vadd.f32 %v39, %v179
  %v230 = vadd.f32 %v40, %v220
  %v231 = vadd.f32 %v41, %v222
  %v232 = vadd.f32 %v42, %v181
  %v233 = vadd.f32 %v43, %v183
  %v234 = vadd.f32 %v44, %v224
  %v235 = vadd.f32 %v45, %v226
  %236 = vst [vmem:[#allocation2] sm:$0xff] %v228
  %237 = vst [vmem:[#allocation2 + $0x8] sm:$0xff] %v229
  %238 = vst [vmem:[#allocation2 + $0x10] sm:$0xff] %v230
  %239 = vst [vmem:[#allocation2 + $0x18] sm:$0xff] %v231
  %240 = vst [vmem:[#allocation2 + $0x20] sm:$0xff] %v232
  %241 = vst [vmem:[#allocation2 + $0x28] sm:$0xff] %v233
  %242 = vst [vmem:[#allocation2 + $0x30] sm:$0xff] %v234
  %243 = vst [vmem:[#allocation2 + $0x38] sm:$0xff] %v235
  %v244 = vld [vmem:[#allocation3] sm:$0xff]
  %v245 = vld [vmem:[#allocation3 + $0x8] sm:$0xff]
  %v246 = vld [vmem:[#allocation3 + $0x10] sm:$0xff]
  %v247 = vld [vmem:[#allocation3 + $0x18] sm:$0xff]
  %v248 = vld [vmem:[#allocation3 + $0x20] sm:$0xff]
  %v249 = vld [vmem:[#allocation3 + $0x28] sm:$0xff]
  %v250 = vld [vmem:[#allocation3 + $0x30] sm:$0xff]
  %v251 = vld [vmem:[#allocation3 + $0x38] sm:$0xff]
  %v252 = vld [vmem:[%s2] sm:$0xff]
  %v253 = vld [vmem:[%s2 + $0x8] sm:$0xff]
  %v254 = vld [vmem:[%s2 + $0x10] sm:$0xff]
  %v255 = vld [vmem:[%s2 + $0x18] sm:$0xff]
  %v256 = vld [vmem:[%s2 + $0x20] sm:$0xff]
  %v257 = vld [vmem:[%s2 + $0x28] sm:$0xff]
  %v258 = vld [vmem:[%s2 + $0x30] sm:$0xff]
  %v259 = vld [vmem:[%s2 + $0x38] sm:$0xff]
  %v260 = vld [vmem:[%s2 + $0x40] sm:$0xff]
  %v261 = vld [vmem:[%s2 + $0x48] sm:$0xff]
  %v262 = vld [vmem:[%s2 + $0x50] sm:$0xff]
  %v263 = vld [vmem:[%s2 + $0x58] sm:$0xff]
  %v264 = vld [vmem:[%s2 + $0x60] sm:$0xff]
  %v265 = vld [vmem:[%s2 + $0x68] sm:$0xff]
  %v266 = vld [vmem:[%s2 + $0x70] sm:$0xff]
  %v267 = vld [vmem:[%s2 + $0x78] sm:$0xff]
  %v268 = vld [vmem:[%s2 + $0x80] sm:$0xff]
  %v269 = vld [vmem:[%s2 + $0x88] sm:$0xff]
  %v270 = vld [vmem:[%s2 + $0x90] sm:$0xff]
  %v271 = vld [vmem:[%s2 + $0x98] sm:$0xff]
  %v272 = vld [vmem:[%s2 + $0xa0] sm:$0xff]
  %v273 = vld [vmem:[%s2 + $0xa8] sm:$0xff]
  %v274 = vld [vmem:[%s2 + $0xb0] sm:$0xff]
  %v275 = vld [vmem:[%s2 + $0xb8] sm:$0xff]
  %v276 = vld [vmem:[%s2 + $0xc0] sm:$0xff]
  %v277 = vld [vmem:[%s2 + $0xc8] sm:$0xff]
  %v278 = vld [vmem:[%s2 + $0xd0] sm:$0xff]
  %v279 = vld [vmem:[%s2 + $0xd8] sm:$0xff]
  %v280 = vld [vmem:[%s2 + $0xe0] sm:$0xff]
  %v281 = vld [vmem:[%s2 + $0xe8] sm:$0xff]
  %v282 = vld [vmem:[%s2 + $0xf0] sm:$0xff]
  %v283 = vld [vmem:[%s2 + $0xf8] sm:$0xff]
  %v284 = vld [vmem:[%s2 + $0x100] sm:$0xff]
  %v285 = vld [vmem:[%s2 + $0x108] sm:$0xff]
  %v286 = vld [vmem:[%s2 + $0x110] sm:$0xff]
  %v287 = vld [vmem:[%s2 + $0x118] sm:$0xff]
  %v288 = vld [vmem:[%s2 + $0x120] sm:$0xff]
  %v289 = vld [vmem:[%s2 + $0x128] sm:$0xff]
  %v290 = vld [vmem:[%s2 + $0x130] sm:$0xff]
  %v291 = vld [vmem:[%s2 + $0x138] sm:$0xff]
  %v292 = vld [vmem:[%s2 + $0x140] sm:$0xff]
  %v293 = vld [vmem:[%s2 + $0x148] sm:$0xff]
  %v294 = vld [vmem:[%s2 + $0x150] sm:$0xff]
  %v295 = vld [vmem:[%s2 + $0x158] sm:$0xff]
  %v296 = vld [vmem:[%s2 + $0x160] sm:$0xff]
  %v297 = vld [vmem:[%s2 + $0x168] sm:$0xff]
  %v298 = vld [vmem:[%s2 + $0x170] sm:$0xff]
  %v299 = vld [vmem:[%s2 + $0x178] sm:$0xff]
  %v300 = vld [vmem:[%s2 + $0x180] sm:$0xff]
  %v301 = vld [vmem:[%s2 + $0x188] sm:$0xff]
  %v302 = vld [vmem:[%s2 + $0x190] sm:$0xff]
  %v303 = vld [vmem:[%s2 + $0x198] sm:$0xff]
  %v304 = vld [vmem:[%s2 + $0x1a0] sm:$0xff]
  %v305 = vld [vmem:[%s2 + $0x1a8] sm:$0xff]
  %v306 = vld [vmem:[%s2 + $0x1b0] sm:$0xff]
  %v307 = vld [vmem:[%s2 + $0x1b8] sm:$0xff]
  %v308 = vld [vmem:[%s2 + $0x1c0] sm:$0xff]
  %v309 = vld [vmem:[%s2 + $0x1c8] sm:$0xff]
  %v310 = vld [vmem:[%s2 + $0x1d0] sm:$0xff]
  %v311 = vld [vmem:[%s2 + $0x1d8] sm:$0xff]
  %v312 = vld [vmem:[%s2 + $0x1e0] sm:$0xff]
  %v313 = vld [vmem:[%s2 + $0x1e8] sm:$0xff]
  %v314 = vld [vmem:[%s2 + $0x1f0] sm:$0xff]
  %v315 = vld [vmem:[%s2 + $0x1f8] sm:$0xff]
  %v316 = vpack.c.bf16 %v256, %v252
  %v317 = vpack.c.bf16 %v257, %v253
  %v318 = vpack.c.bf16 %v258, %v254
  %v319 = vpack.c.bf16 %v259, %v255
  %v320 = vpack.c.bf16 %v264, %v260
  %v321 = vpack.c.bf16 %v265, %v261
  %v322 = vpack.c.bf16 %v266, %v262
  %v323 = vpack.c.bf16 %v267, %v263
  %v324 = vpack.c.bf16 %v272, %v268
  %v325 = vpack.c.bf16 %v273, %v269
  %v326 = vpack.c.bf16 %v274, %v270
  %v327 = vpack.c.bf16 %v275, %v271
  %v328 = vpack.c.bf16 %v280, %v276
  %v329 = vpack.c.bf16 %v281, %v277
  %v330 = vpack.c.bf16 %v282, %v278
  %v331 = vpack.c.bf16 %v283, %v279
  %v332 = vpack.c.bf16 %v288, %v284
  %v333 = vpack.c.bf16 %v289, %v285
  %v334 = vpack.c.bf16 %v290, %v286
  %v335 = vpack.c.bf16 %v291, %v287
  %v336 = vpack.c.bf16 %v296, %v292
  %v337 = vpack.c.bf16 %v297, %v293
  %v338 = vpack.c.bf16 %v298, %v294
  %v339 = vpack.c.bf16 %v299, %v295
  %v340 = vpack.c.bf16 %v304, %v300
  %v341 = vpack.c.bf16 %v305, %v301
  %v342 = vpack.c.bf16 %v306, %v302
  %v343 = vpack.c.bf16 %v307, %v303
  %v344 = vpack.c.bf16 %v312, %v308
  %v345 = vpack.c.bf16 %v313, %v309
  %v346 = vpack.c.bf16 %v314, %v310
  %v347 = vpack.c.bf16 %v315, %v311
  %348 = vmatprep.subr.bf16.mxu0 %v317
  %349 = vmatpush1.bf16.msra.mxu0 %v316
  %350 = vmatprep.subr.bf16.mxu0 %v321
  %351 = vmatpush1.bf16.msra.mxu0 %v320
  %352 = vmatprep.subr.bf16.mxu0 %v325
  %353 = vmatpush1.bf16.msra.mxu0 %v324
  %354 = vmatprep.subr.bf16.mxu0 %v329
  %355 = vmatpush1.bf16.msra.mxu0 %v328
  %356 = vmatprep.subr.bf16.mxu0 %v333
  %357 = vmatpush1.bf16.msra.mxu0 %v332
  %358 = vmatprep.subr.bf16.mxu0 %v337
  %359 = vmatpush1.bf16.msra.mxu0 %v336
  %360 = vmatprep.subr.bf16.mxu0 %v341
  %361 = vmatpush1.bf16.msra.mxu0 %v340
  %362 = vmatprep.subr.bf16.mxu0 %v345
  %363 = vmatpush1.bf16.msra.mxu0 %v344
  %364 = vmatprep.subr.bf16.mxu0 0
  %365 = vmatpush1.bf16.msra.mxu0 0
  %366 = vmatprep.subr.bf16.mxu0 0
  %367 = vmatpush1.bf16.msra.mxu0 0
  %368 = vmatprep.subr.bf16.mxu0 0
  %369 = vmatpush1.bf16.msra.mxu0 0
  %370 = vmatprep.subr.bf16.mxu0 0
  %371 = vmatpush1.bf16.msra.mxu0 0
  %372 = vmatprep.subr.bf16.mxu0 0
  %373 = vmatpush1.bf16.msra.mxu0 0
  %374 = vmatprep.subr.bf16.mxu0 0
  %375 = vmatpush1.bf16.msra.mxu0 0
  %376 = vmatprep.subr.bf16.mxu0 0
  %377 = vmatpush1.bf16.msra.mxu0 0
  %378 = vmatprep.subr.bf16.mxu0 0
  %379 = vmatpush1.bf16.msra.mxu0 0
  %380 = vmatprep.mubr.bf16.mxu0 0
  %381 = vmatmul.mubr.bf16.gmra.mrb[0].mxu0 %v37
  %v382 = vpop.f32.mrb[0].mxu0
  %v383 = vadd.f32 0.0, %v382
  %v384 = vpop.f32.mrb[0].mxu0
  %v385 = vadd.f32 0.0, %v384
  %v386 = vpop.f32.mrb[0].mxu0
  %v387 = vadd.f32 0.0, %v386
  %v388 = vpop.f32.mrb[0].mxu0
  %v389 = vadd.f32 0.0, %v388
  %390 = vdwg.mxu0
  %391 = vmatprep.subr.bf16.mxu0 %v319
  %392 = vmatpush1.bf16.msra.mxu0 %v318
  %393 = vmatprep.subr.bf16.mxu0 %v323
  %394 = vmatpush1.bf16.msra.mxu0 %v322
  %395 = vmatprep.subr.bf16.mxu0 %v327
  %396 = vmatpush1.bf16.msra.mxu0 %v326
  %397 = vmatprep.subr.bf16.mxu0 %v331
  %398 = vmatpush1.bf16.msra.mxu0 %v330
  %399 = vmatprep.subr.bf16.mxu0 %v335
  %400 = vmatpush1.bf16.msra.mxu0 %v334
  %401 = vmatprep.subr.bf16.mxu0 %v339
  %402 = vmatpush1.bf16.msra.mxu0 %v338
  %403 = vmatprep.subr.bf16.mxu0 %v343
  %404 = vmatpush1.bf16.msra.mxu0 %v342
  %405 = vmatprep.subr.bf16.mxu0 %v347
  %406 = vmatpush1.bf16.msra.mxu0 %v346
  %407 = vmatprep.subr.bf16.mxu0 0
  %408 = vmatpush1.bf16.msra.mxu0 0
  %409 = vmatprep.subr.bf16.mxu0 0
  %410 = vmatpush1.bf16.msra.mxu0 0
  %411 = vmatprep.subr.bf16.mxu0 0
  %412 = vmatpush1.bf16.msra.mxu0 0
  %413 = vmatprep.subr.bf16.mxu0 0
  %414 = vmatpush1.bf16.msra.mxu0 0
  %415 = vmatprep.subr.bf16.mxu0 0
  %416 = vmatpush1.bf16.msra.mxu0 0
  %417 = vmatprep.subr.bf16.mxu0 0
  %418 = vmatpush1.bf16.msra.mxu0 0
  %419 = vmatprep.subr.bf16.mxu0 0
  %420 = vmatpush1.bf16.msra.mxu0 0
  %421 = vmatprep.subr.bf16.mxu0 0
  %422 = vmatpush1.bf16.msra.mxu0 0
  %423 = vmatprep.mubr.bf16.mxu0 0
  %424 = vmatmul.mubr.bf16.gmra.mrb[0].mxu0 %v37
  %v425 = vpop.f32.mrb[0].mxu0
  %v426 = vadd.f32 0.0, %v425
  %v427 = vpop.f32.mrb[0].mxu0
  %v428 = vadd.f32 0.0, %v427
  %v429 = vpop.f32.mrb[0].mxu0
  %v430 = vadd.f32 0.0, %v429
  %v431 = vpop.f32.mrb[0].mxu0
  %v432 = vadd.f32 0.0, %v431
  %433 = vdwg.mxu0
  %v434 = vadd.f32 %v244, %v383
  %v435 = vadd.f32 %v245, %v385
  %v436 = vadd.f32 %v246, %v426
  %v437 = vadd.f32 %v247, %v428
  %v438 = vadd.f32 %v248, %v387
  %v439 = vadd.f32 %v249, %v389
  %v440 = vadd.f32 %v250, %v430
  %v441 = vadd.f32 %v251, %v432
  %442 = vst [vmem:[#allocation3] sm:$0xff] %v434
  %443 = vst [vmem:[#allocation3 + $0x8] sm:$0xff] %v435
  %444 = vst [vmem:[#allocation3 + $0x10] sm:$0xff] %v436
  %445 = vst [vmem:[#allocation3 + $0x18] sm:$0xff] %v437
  %446 = vst [vmem:[#allocation3 + $0x20] sm:$0xff] %v438
  %447 = vst [vmem:[#allocation3 + $0x28] sm:$0xff] %v439
  %448 = vst [vmem:[#allocation3 + $0x30] sm:$0xff] %v440
  %449 = vst [vmem:[#allocation3 + $0x38] sm:$0xff] %v441
  // Predicated region
  $region18: #{transformer_forward.26} parent=0 // pred_check
    %p450 = pneg %p15
  $region19: #{transformer_forward.26} parent=0 // pred_check_branch
    %452 = sbr.rel (%p450) target = $region21
  $region20: #{transformer_forward.26} parent=0 // pred_region
    %v453 = vld [vmem:[#allocation2] sm:$0xff]
    %v454 = vld [vmem:[#allocation2 + $0x8] sm:$0xff]
    %v455 = vld [vmem:[#allocation2 + $0x10] sm:$0xff]
    %v456 = vld [vmem:[#allocation2 + $0x18] sm:$0xff]
    %v457 = vld [vmem:[#allocation2 + $0x20] sm:$0xff]
    %v458 = vld [vmem:[#allocation2 + $0x28] sm:$0xff]
    %v459 = vld [vmem:[#allocation2 + $0x30] sm:$0xff]
    %v460 = vld [vmem:[#allocation2 + $0x38] sm:$0xff]
    %v461 = vld [vmem:[#allocation3] sm:$0xff]
    %v462 = vld [vmem:[#allocation3 + $0x8] sm:$0xff]
    %v463 = vld [vmem:[#allocation3 + $0x10] sm:$0xff]
    %v464 = vld [vmem:[#allocation3 + $0x18] sm:$0xff]
    %v465 = vld [vmem:[#allocation3 + $0x20] sm:$0xff]
    %v466 = vld [vmem:[#allocation3 + $0x28] sm:$0xff]
    %v467 = vld [vmem:[#allocation3 + $0x30] sm:$0xff]
    %v468 = vld [vmem:[#allocation3 + $0x38] sm:$0xff]
    %v469 = vsub.f32 0.0, %v453
    %v470 = vsub.f32 0.0, %v454
    %v471 = vsub.f32 0.0, %v455
    %v472 = vsub.f32 0.0, %v456
    %v473 = vsub.f32 0.0, %v457
    %v474 = vsub.f32 0.0, %v458
    %v475 = vsub.f32 0.0, %v459
    %v476 = vsub.f32 0.0, %v460
    %v477 = vmul.f32 %v469, 1.442695
    %v478 = vpow.pop %v477
    %v479 = vmul.f32 %v470, 1.442695
    %v480 = vpow.pop %v479
    %v481 = vmul.f32 %v471, 1.442695
    %v482 = vpow.pop %v481
    %v483 = vmul.f32 %v472, 1.442695
    %v484 = vpow.pop %v483
    %v485 = vmul.f32 %v473, 1.442695
    %v486 = vpow.pop %v485
    %v487 = vmul.f32 %v474, 1.442695
    %v488 = vpow.pop %v487
    %v489 = vmul.f32 %v475, 1.442695
    %v490 = vpow.pop %v489
    %v491 = vmul.f32 %v476, 1.442695
    %v492 = vpow.pop %v491
    %v493 = vadd.f32 %v478, 1.0
    %v494 = vadd.f32 %v480, 1.0
    %v495 = vadd.f32 %v482, 1.0
    %v496 = vadd.f32 %v484, 1.0
    %v497 = vadd.f32 %v486, 1.0
    %v498 = vadd.f32 %v488, 1.0
    %v499 = vadd.f32 %v490, 1.0
    %v500 = vadd.f32 %v492, 1.0
    %v501 = vrcp.pop %v493
    %v502 = vrcp.pop %v494
    %v503 = vrcp.pop %v495
    %v504 = vrcp.pop %v496
    %v505 = vrcp.pop %v497
    %v506 = vrcp.pop %v498
    %v507 = vrcp.pop %v499
    %v508 = vrcp.pop %v500
    %v509 = vmul.f32 %v453, %v501
    %v510 = vmul.f32 %v454, %v502
    %v511 = vmul.f32 %v455, %v503
    %v512 = vmul.f32 %v456, %v504
    %v513 = vmul.f32 %v457, %v505
    %v514 = vmul.f32 %v458, %v506
    %v515 = vmul.f32 %v459, %v507
    %v516 = vmul.f32 %v460, %v508
    %v517 = vmul.f32 %v509, %v461
    %v518 = vmul.f32 %v510, %v462
    %v519 = vmul.f32 %v511, %v463
    %v520 = vmul.f32 %v512, %v464
    %v521 = vmul.f32 %v513, %v465
    %v522 = vmul.f32 %v514, %v466
    %v523 = vmul.f32 %v515, %v467
    %v524 = vmul.f32 %v516, %v468
    %525 = vst [vmem:[%s3] sm:$0xff] %v517
    %526 = vst [vmem:[%s3 + $0x8] sm:$0xff] %v518
    %527 = vst [vmem:[%s3 + $0x10] sm:$0xff] %v519
    %528 = vst [vmem:[%s3 + $0x18] sm:$0xff] %v520
    %529 = vst [vmem:[%s3 + $0x20] sm:$0xff] %v521
    %530 = vst [vmem:[%s3 + $0x28] sm:$0xff] %v522
    %531 = vst [vmem:[%s3 + $0x30] sm:$0xff] %v523
    %532 = vst [vmem:[%s3 + $0x38] sm:$0xff] %v524
  $region21: #{transformer_forward.26} parent=0 // pred_fallthru
    _
  // Predicated region
  $region22: #{transformer_forward.26} parent=0 // pred_check
    _
  $region23: #{transformer_forward.26} parent=0 // pred_check_branch
    %534 = sbr.rel (0) target = $region25
  $region24: #{transformer_forward.26} parent=0 // pred_region
    _
  $region25: #{transformer_forward.26} parent=0 // pred_fallthru
    _
  // Predicated region
  $region26: #{transformer_forward.26} parent=0 // pred_check
    _
  $region27: #{transformer_forward.26} parent=0 // pred_check_branch
    %536 = sbr.rel (0) target = $region29
  $region28: #{transformer_forward.26} parent=0 // pred_region
    _
  $region29: #{transformer_forward.26} parent=0 // pred_fallthru
    _

</llo_original>
